<compile_context>
chip_gen: v6e
topology: v6e:2x2x1
jax: 0.10.0
libtpu: 0.0.40
codegen_flags: <defaults>
</compile_context>

<pallas_src>
import functools

import jax
import jax.numpy as jnp
from jax import lax
from jax.experimental import pallas as pl
from jax.experimental.pallas import tpu as pltpu

LEAKY_SLOPE = 0.01          # F.leaky_relu default
CHAN_NUM = 6                # self.chanNum
CHAN_DIM = 1                # self.chanDim
D_IN = CHAN_NUM * CHAN_DIM  # node feature width (6)
H1, H2, FC1, OUT = 32, 20, 10, 2


def _leaky(x):
    return jnp.where(x > 0, x, LEAKY_SLOPE * x)


# ---------------------------------------------------------------------------
# Static layout of the packed parameter slab (row_offset, n_rows, n_cols)
# ---------------------------------------------------------------------------
def _slab_layout():
    d0, d1 = D_IN, H1
    entries = (
        ("hfc_w", d0, d0), ("hfc_b", 1, d0), ("attn_w", CHAN_NUM, CHAN_NUM), ("ew", 1, 3),
        ("c1_wih", d0, 4 * d0), ("c1_whh", d0, 4 * d0), ("c1_b", 1, 4 * d0),
        ("c1_wself", d0, H1), ("c1_wneigh", d0, H1), ("c1_bias", 1, H1),
        ("c2_wih", d1, 4 * d1), ("c2_whh", d1, 4 * d1), ("c2_b", 1, 4 * d1),
        ("c2_wself", d1, H2), ("c2_wneigh", d1, H2), ("c2_bias", 1, H2),
        ("bn_scale", 1, H2), ("bn_shift", 1, H2),
        ("gate_w", 1, H2),
        ("fc1_w", H2, FC1), ("fc1_b", 1, FC1),
        ("fc2_w", FC1, OUT), ("fc2_b", 1, OUT),
    )
    offs, r = {}, 0
    for name, nr, nc in entries:
        offs[name] = (r, nr, nc)
        r += nr
    rows = -(-r // 8) * 8
    cols = -(-max(nc for _, _, nc in entries) // 128) * 128
    return offs, rows, cols


# ---------------------------------------------------------------------------
# Fused MCANet kernel: one block = `nb` graphs, each padded to `kp` node rows
# ---------------------------------------------------------------------------
def mcanet_kernel(x_ref, dis_ref, spec_ref, w_ref, o_ref, *, nb, k, kp):
    f32 = jnp.float32
    offs, _, _ = _slab_layout()
    n = nb * kp

    def P(name):  # static slice of the resident weight slab (no extra DMA)
        r0, nr, nc = offs[name]
        return w_ref[r0:r0 + nr, :nc]

    # ---- chan_att2: a = leaky(z @ W_attn) ; softmax over channels ; alpha * z
    # (W_attn = w_first[:,None] + sum(w_second)*I, folded at prep time)
    x = x_ref[...]                                                        # [n, D_IN]
    z = jnp.dot(x, P("hfc_w"), preferred_element_type=f32) + P("hfc_b")
    a = _leaky(jnp.dot(z, P("attn_w"), preferred_element_type=f32))
    a = a - jnp.max(a, axis=1, keepdims=True)
    ea = jnp.exp(a)
    alpha = ea * pl.reciprocal(jnp.sum(ea, axis=1, keepdims=True), approx=True)
    x1 = alpha * z                                                        # [n, D_IN]

    # ---- edge weights: wfc -> wfc1 (no activation between) folded to affine
    ew = P("ew")                                                          # [1, 3]
    w2 = (dis_ref[...] * ew[0:1, 0:1] + spec_ref[...] * ew[0:1, 1:2]
          + ew[0:1, 2:3])                                                 # [n(dst), k(src)]

    # ---- DGL SAGEConv('lstm'): neigh = LSTM over per-dst messages (src 0..k-1);
    #      out = x_self@Wself + lstm_h@Wneigh + bias
    # TODO(synk): LSTM aggregation is order-sensitive; assumes DGL mailbox order
    #             equals src order 0..k-1 for the synthesized fully-connected graphs.
    def sage_conv(h_in, pre):
        din = h_in.shape[1]
        wih, whh = P(pre + "_wih"), P(pre + "_whh")
        b_full = jnp.broadcast_to(P(pre + "_b"), (n, 4 * din))            # hoisted bcast
        # hoisted input projection: (w * x_src) @ Wih == w * (x_src @ Wih)
        p = jnp.dot(h_in, wih, preferred_element_type=f32)                # [n, 4*din]
        p3 = p.reshape(nb, kp, 4 * din)                                   # tile-aligned split
        h = jnp.zeros((n, din), f32)
        c = jnp.zeros((n, din), f32)
        for s in range(k):                                                # serial LSTM steps
            src = jnp.broadcast_to(p3[:, s:s + 1, :],
                                   (nb, kp, 4 * din)).reshape(n, 4 * din)
            gates = (w2[:, s:s + 1] * src + b_full
                     + jnp.dot(h, whh, preferred_element_type=f32))
            sg = jax.nn.sigmoid(gates[:, :3 * din])                       # (i, f, o) at once
            g_g = jnp.tanh(gates[:, 3 * din:])
            c = sg[:, din:2 * din] * c + sg[:, :din] * g_g
            h = sg[:, 2 * din:3 * din] * jnp.tanh(c)
        return (jnp.dot(h_in, P(pre + "_wself"), preferred_element_type=f32)
                + jnp.dot(h, P(pre + "_wneigh"), preferred_element_type=f32)
                + P(pre + "_bias"))

    h1 = _leaky(sage_conv(x1, "c1"))                                      # [n, H1]
    h2 = _leaky(sage_conv(h1, "c2") * P("bn_scale") + P("bn_shift"))      # [n, H2] (eval BN)

    # ---- GlobalAttentionPooling (per-graph softmax over the k real nodes)
    h23 = h2.reshape(nb, kp, H2)                                          # tile-aligned split
    gate = jnp.sum(h23 * P("gate_w").reshape(1, 1, H2), axis=2,
                   keepdims=True)                                         # [nb, kp, 1]
    valid = lax.broadcasted_iota(jnp.int32, (nb, kp, 1), 1) < k           # mask pad rows
    gate = jnp.where(valid, gate, -jnp.inf)
    gate = gate - jnp.max(gate, axis=1, keepdims=True)                    # per-graph max
    eg = jnp.exp(gate)                                                    # pad rows -> 0
    denom = jnp.sum(eg, axis=1, keepdims=True)                            # >= 1, safe recip
    wnode = eg * pl.reciprocal(denom, approx=True)
    r = jnp.sum(h23 * wnode, axis=1)                                      # [nb, H2]

    # ---- fc head. TODO(synk): dropout(p=0.2) applies only in training; eval = identity.
    hf = _leaky(jnp.dot(r, P("fc1_w"), preferred_element_type=f32) + P("fc1_b"))
    o_ref[...] = jnp.dot(hf, P("fc2_w"), preferred_element_type=f32) + P("fc2_b")


# ---------------------------------------------------------------------------
# One-time parameter preprocessing -> single packed f32 slab
# ---------------------------------------------------------------------------
def prepare_params(params):
    eps = 1e-5
    cn = CHAN_NUM

    # chan_att2 fold: a = z @ (w_first[:,None] + sum(w_second) * I)
    aw = jnp.asarray(params["attn_fc2_w"], jnp.float32)                  # [1, 2*cn]
    attn_s2 = jnp.sum(aw[0, cn:])
    attn_w = aw[0, :cn][:, None] + attn_s2 * jnp.eye(cn, dtype=jnp.float32)

    # edge MLP fold: wfc -> wfc1 has no activation in between -> single affine
    ew_w = params["wfc1_w"] @ params["wfc_w"]                            # [1, 2]
    ew_b = params["wfc1_w"] @ params["wfc_b"] + params["wfc1_b"]         # [1]
    ew = jnp.concatenate([ew_w[0], ew_b]).reshape(1, 3)

    # eval-mode BatchNorm fold
    bn_scale = params["bn_gamma"] / jnp.sqrt(params["bn_var"] + eps)
    bn_shift = params["bn_beta"] - params["bn_mean"] * bn_scale

    def perm_gates(w, d):
        # torch LSTM gate order (i, f, g, o) -> (i, f, o, g): one sigmoid covers i,f,o
        return jnp.concatenate([w[:2 * d], w[3 * d:4 * d], w[2 * d:3 * d]], axis=0)

    def conv_entries(pre, cp, d):
        return {
            pre + "_wih": perm_gates(cp["lstm_w_ih"], d).T,
            pre + "_whh": perm_gates(cp["lstm_w_hh"], d).T,
            pre + "_b": perm_gates(cp["lstm_b_ih"] + cp["lstm_b_hh"], d).reshape(1, -1),
            pre + "_wself": cp["fc_self_w"].T,
            pre + "_wneigh": cp["fc_neigh_w"].T,
            pre + "_bias": cp["bias"].reshape(1, -1),
        }

    tensors = {
        "hfc_w": params["hfc_w"].T,
        "hfc_b": params["hfc_b"].reshape(1, -1),
        "attn_w": attn_w,
        "ew": ew,
        **conv_entries("c1", params["conv1"], D_IN),
        **conv_entries("c2", params["conv2"], H1),
        "bn_scale": bn_scale.reshape(1, -1),
        "bn_shift": bn_shift.reshape(1, -1),
        # gate_nn bias is dropped: an additive constant cancels in the per-graph softmax.
        "gate_w": params["gate_w"].reshape(1, -1),
        "fc1_w": params["fc1_w"].T, "fc1_b": params["fc1_b"].reshape(1, -1),
        "fc2_w": params["fc2_w"].T, "fc2_b": params["fc2_b"].reshape(1, -1),
    }

    offs, rows, cols = _slab_layout()
    slab = jnp.zeros((rows, cols), jnp.float32)
    for name, (r0, nr, nc) in offs.items():
        t = jnp.asarray(tensors[name], jnp.float32)
        assert t.shape == (nr, nc), (name, t.shape, (nr, nc))
        slab = slab.at[r0:r0 + nr, :nc].set(t)
    return slab


def _pick_gblock(num_graphs, kp, target_rows=512):
    """Graphs per grid block: full batch if small, else a multiple of 8 that divides it."""
    want = max(8, min(num_graphs, target_rows // kp))
    if want >= num_graphs:
        return num_graphs
    gb = (want // 8) * 8
    while gb >= 8:
        if num_graphs % gb == 0:
            return gb
        gb -= 8
    return num_graphs


# ---------------------------------------------------------------------------
# Full forward: one fused pallas_call, graph-block grid
# ---------------------------------------------------------------------------
@functools.partial(jax.jit, static_argnums=(4, 5))
def mcanet_forward(slab, x_node, dis, spec, num_graphs, k_nodes):
    b, k = num_graphs, k_nodes
    kp = -(-k // 8) * 8                       # nodes per graph padded to a sublane group

    # TODO(synk): edge order assumed to be [graph, dst, src] for the synthesized
    #             fully-connected (self-loops included) 6-node graphs.
    x3 = x_node.reshape(b, k, D_IN).astype(jnp.float32)
    dis3 = dis.reshape(b, k, k).astype(jnp.float32)
    spec3 = spec.reshape(b, k, k).astype(jnp.float32)
    padw = ((0, 0), (0, kp - k), (0, 0))
    x2d = jnp.pad(x3, padw).reshape(b * kp, D_IN)
    dis2 = jnp.pad(dis3, padw).reshape(b * kp, k)
    spec2 = jnp.pad(spec3, padw).reshape(b * kp, k)

    gb = _pick_gblock(b, kp)
    _, slab_rows, slab_cols = _slab_layout()
    kern = functools.partial(mcanet_kernel, nb=gb, k=k, kp=kp)

    return pl.pallas_call(
        kern,
        out_shape=jax.ShapeDtypeStruct((b, OUT), jnp.float32),
        grid=(b // gb,),
        in_specs=[
            pl.BlockSpec((gb * kp, D_IN), lambda i: (i, 0)),       # node features
            pl.BlockSpec((gb * kp, k), lambda i: (i, 0)),          # edge 'dis'
            pl.BlockSpec((gb * kp, k), lambda i: (i, 0)),          # edge 'spec'
            pl.BlockSpec((slab_rows, slab_cols), lambda i: (0, 0)),  # resident weight slab
        ],
        out_specs=pl.BlockSpec((gb, OUT), lambda i: (i, 0)),
        compiler_params=pltpu.CompilerParams(
            dimension_semantics=("parallel",)),
    )(x2d, dis2, spec2, slab)


# ---------------------------------------------------------------------------
# Deterministic synthetic parameters (shapes from MCANet.__init__)
# ---------------------------------------------------------------------------
def init_params(key):
    ks = jax.random.split(key, 27)

    def norm(k, shape, scale=0.1):
        return scale * jax.random.normal(k, shape, dtype=jnp.float32)

    return {
        "hfc_w": norm(ks[0], (6, 6)), "hfc_b": norm(ks[1], (6,)),
        "attn_fc2_w": norm(ks[2], (1, 12)),
        "wfc_w": norm(ks[3], (100, 2)), "wfc_b": norm(ks[4], (100,)),
        "wfc1_w": norm(ks[5], (1, 100)), "wfc1_b": norm(ks[6], (1,)),
        "conv1": {
            "lstm_w_ih": norm(ks[7], (24, 6)), "lstm_w_hh": norm(ks[8], (24, 6)),
            "lstm_b_ih": norm(ks[9], (24,)), "lstm_b_hh": norm(ks[10], (24,)),
            "fc_self_w": norm(ks[11], (32, 6)), "fc_neigh_w": norm(ks[12], (32, 6)),
            "bias": norm(ks[13], (32,)),
        },
        "conv2": {
            "lstm_w_ih": norm(ks[14], (128, 32)), "lstm_w_hh": norm(ks[15], (128, 32)),
            "lstm_b_ih": norm(ks[16], (128,)), "lstm_b_hh": norm(ks[17], (128,)),
            "fc_self_w": norm(ks[18], (20, 32)), "fc_neigh_w": norm(ks[19], (20, 32)),
            "bias": norm(ks[20], (20,)),
        },
        "bn_gamma": jnp.ones((20,), jnp.float32), "bn_beta": jnp.zeros((20,), jnp.float32),
        "bn_mean": jnp.zeros((20,), jnp.float32), "bn_var": jnp.ones((20,), jnp.float32),
        "fc1_w": norm(ks[21], (10, 20)), "fc1_b": norm(ks[22], (10,)),
        "fc2_w": norm(ks[23], (2, 10)), "fc2_b": norm(ks[24], (2,)),
        "gate_w": norm(ks[25], (1, 20)), "gate_b": norm(ks[26], (1,)),  # bias unused (cancels)
    }


if __name__ == "__main__":
    key = jax.random.PRNGKey(0)
    kp_, kx, kd, ksp = jax.random.split(key, 4)

    num_graphs, k_nodes = 2, CHAN_NUM           # 2 graphs, 6 nodes each, fully connected
    n_nodes = num_graphs * k_nodes              # 12
    n_edges = num_graphs * k_nodes * k_nodes    # 72  (edge order: [graph, dst, src])

    params = init_params(kp_)
    slab = prepare_params(params)               # one-time param packing / folds

    x = jax.random.normal(kx, (n_nodes, CHAN_NUM, CHAN_DIM), dtype=jnp.float32)
    dis = jax.random.normal(kd, (n_edges,), dtype=jnp.float32)
    spec = jax.random.normal(ksp, (n_edges,), dtype=jnp.float32)

    out = mcanet_forward(slab, x, dis, spec, num_graphs, k_nodes)
    out = jax.block_until_ready(out)
    assert out.shape == (num_graphs, 2) and out.dtype == jnp.float32
    assert bool(jnp.all(jnp.isfinite(out)))
    print("KERNEL_OK")
</pallas_src>

<mosaic_0001>
module attributes {stable_mosaic.version = 11 : i64} {
  func.func @mcanet_kernel(%arg0: i32, %arg1: memref<16x6xf32, #tpu.memory_space<vmem>>, %arg2: memref<16x6xf32, #tpu.memory_space<vmem>>, %arg3: memref<16x6xf32, #tpu.memory_space<vmem>>, %arg4: memref<208x128xf32, #tpu.memory_space<vmem>>, %arg5: memref<2x2xf32, #tpu.memory_space<vmem>>) attributes {dimension_semantics = [#tpu.dimension_semantics<parallel>], iteration_bounds = array<i64: 1>, scalar_prefetch = 0 : i64, scratch_operands = 0 : i64, tpu.core_type = #tpu.core_type<tc>, window_params = [{transform_indices = @transform_0, window_bounds = array<i64: 16, 6>}, {transform_indices = @transform_1, window_bounds = array<i64: 16, 6>}, {transform_indices = @transform_2, window_bounds = array<i64: 16, 6>}, {pipeline_mode = #tpu.pipeline_mode<synchronous>, transform_indices = @transform_3, window_bounds = array<i64: 208, 128>}, {transform_indices = @transform_4, window_bounds = array<i64: 2, 2>}]} {
    %c0 = arith.constant 0 : index
    %c0_0 = arith.constant 0 : index
    %0 = vector.load %arg1[%c0, %c0_0] : memref<16x6xf32, #tpu.memory_space<vmem>>, vector<16x6xf32>
    %c0_1 = arith.constant 0 : index
    %c0_2 = arith.constant 0 : index
    %1 = vector.load %arg4[%c0_1, %c0_2] : memref<208x128xf32, #tpu.memory_space<vmem>>, vector<6x6xf32>
    %cst = arith.constant dense<0.000000e+00> : vector<16x6xf32>
    %2 = tpu.matmul %0, %1, %cst {dimension_numbers = #tpu.dot_dimension_numbers<[1], [0], [0], [1], [0, 0, 1, 1], [], []>} : vector<16x6xf32>, vector<6x6xf32>, vector<16x6xf32> -> vector<16x6xf32>
    %c6 = arith.constant 6 : index
    %c0_3 = arith.constant 0 : index
    %3 = vector.load %arg4[%c6, %c0_3] : memref<208x128xf32, #tpu.memory_space<vmem>>, vector<1x6xf32>
    %4 = vector.broadcast %3 : vector<1x6xf32> to vector<16x6xf32>
    %5 = arith.addf %2, %4 : vector<16x6xf32>
    %c7 = arith.constant 7 : index
    %c0_4 = arith.constant 0 : index
    %6 = vector.load %arg4[%c7, %c0_4] : memref<208x128xf32, #tpu.memory_space<vmem>>, vector<6x6xf32>
    %cst_5 = arith.constant dense<0.000000e+00> : vector<16x6xf32>
    %7 = tpu.matmul %5, %6, %cst_5 {dimension_numbers = #tpu.dot_dimension_numbers<[1], [0], [0], [1], [0, 0, 1, 1], [], []>} : vector<16x6xf32>, vector<6x6xf32>, vector<16x6xf32> -> vector<16x6xf32>
    %cst_6 = arith.constant 0.000000e+00 : f32
    %8 = vector.broadcast %cst_6 : f32 to vector<16x6xf32>
    %9 = arith.cmpf ogt, %7, %8 : vector<16x6xf32>
    %cst_7 = arith.constant 0.00999999977 : f32
    %10 = vector.broadcast %cst_7 : f32 to vector<16x6xf32>
    %11 = arith.mulf %10, %7 : vector<16x6xf32>
    %12 = arith.select %9, %7, %11 : vector<16x6xi1>, vector<16x6xf32>
    %cst_8 = arith.constant dense<0xFF800000> : vector<16xf32>
    %13 = vector.multi_reduction <maximumf>, %12, %cst_8 [1] : vector<16x6xf32> to vector<16xf32>
    %14 = vector.shape_cast %13 : vector<16xf32> to vector<16x1xf32>
    %15 = vector.broadcast %14 : vector<16x1xf32> to vector<16x6xf32>
    %16 = arith.subf %12, %15 : vector<16x6xf32>
    %17 = math.exp %16 : vector<16x6xf32>
    %cst_9 = arith.constant dense<0.000000e+00> : vector<16xf32>
    %18 = vector.multi_reduction <add>, %17, %cst_9 [1] : vector<16x6xf32> to vector<16xf32>
    %19 = vector.shape_cast %18 : vector<16xf32> to vector<16x1xf32>
    %20 = tpu.reciprocal %19 {approx = true} : vector<16x1xf32> -> vector<16x1xf32>
    %21 = vector.broadcast %20 : vector<16x1xf32> to vector<16x6xf32>
    %22 = arith.mulf %17, %21 : vector<16x6xf32>
    %23 = arith.mulf %22, %5 : vector<16x6xf32>
    %c13 = arith.constant 13 : index
    %c0_10 = arith.constant 0 : index
    %24 = vector.load %arg4[%c13, %c0_10] : memref<208x128xf32, #tpu.memory_space<vmem>>, vector<1x3xf32>
    %c0_11 = arith.constant 0 : index
    %c0_12 = arith.constant 0 : index
    %25 = vector.load %arg2[%c0_11, %c0_12] : memref<16x6xf32, #tpu.memory_space<vmem>>, vector<16x6xf32>
    %26 = vector.extract_strided_slice %24 {offsets = [0, 0], sizes = [1, 1], strides = [1, 1]} : vector<1x3xf32> to vector<1x1xf32>
    %27 = vector.broadcast %26 : vector<1x1xf32> to vector<16x6xf32>
    %28 = arith.mulf %25, %27 : vector<16x6xf32>
    %c0_13 = arith.constant 0 : index
    %c0_14 = arith.constant 0 : index
    %29 = vector.load %arg3[%c0_13, %c0_14] : memref<16x6xf32, #tpu.memory_space<vmem>>, vector<16x6xf32>
    %30 = vector.extract_strided_slice %24 {offsets = [0, 1], sizes = [1, 1], strides = [1, 1]} : vector<1x3xf32> to vector<1x1xf32>
    %31 = vector.broadcast %30 : vector<1x1xf32> to vector<16x6xf32>
    %32 = arith.mulf %29, %31 : vector<16x6xf32>
    %33 = arith.addf %28, %32 : vector<16x6xf32>
    %34 = vector.extract_strided_slice %24 {offsets = [0, 2], sizes = [1, 1], strides = [1, 1]} : vector<1x3xf32> to vector<1x1xf32>
    %35 = vector.broadcast %34 : vector<1x1xf32> to vector<16x6xf32>
    %36 = arith.addf %33, %35 : vector<16x6xf32>
    %c14 = arith.constant 14 : index
    %c0_15 = arith.constant 0 : index
    %37 = vector.load %arg4[%c14, %c0_15] : memref<208x128xf32, #tpu.memory_space<vmem>>, vector<6x24xf32>
    %c20 = arith.constant 20 : index
    %c0_16 = arith.constant 0 : index
    %38 = vector.load %arg4[%c20, %c0_16] : memref<208x128xf32, #tpu.memory_space<vmem>>, vector<6x24xf32>
    %c26 = arith.constant 26 : index
    %c0_17 = arith.constant 0 : index
    %39 = vector.load %arg4[%c26, %c0_17] : memref<208x128xf32, #tpu.memory_space<vmem>>, vector<1x24xf32>
    %40 = vector.shape_cast %39 : vector<1x24xf32> to vector<1x24xf32>
    %41 = vector.broadcast %40 : vector<1x24xf32> to vector<16x24xf32>
    %cst_18 = arith.constant dense<0.000000e+00> : vector<16x24xf32>
    %42 = tpu.matmul %23, %37, %cst_18 {dimension_numbers = #tpu.dot_dimension_numbers<[1], [0], [0], [1], [0, 0, 1, 1], [], []>} : vector<16x6xf32>, vector<6x24xf32>, vector<16x24xf32> -> vector<16x24xf32>
    %43 = vector.shape_cast %42 : vector<16x24xf32> to vector<2x8x24xf32>
    %cst_19 = arith.constant 0.000000e+00 : f32
    %44 = vector.broadcast %cst_19 : f32 to vector<16x6xf32>
    %cst_20 = arith.constant 0.000000e+00 : f32
    %45 = vector.broadcast %cst_20 : f32 to vector<16x6xf32>
    %46 = vector.extract_strided_slice %43 {offsets = [0, 0, 0], sizes = [2, 1, 24], strides = [1, 1, 1]} : vector<2x8x24xf32> to vector<2x1x24xf32>
    %47 = vector.shape_cast %46 : vector<2x1x24xf32> to vector<2x1x24xf32>
    %48 = vector.broadcast %47 : vector<2x1x24xf32> to vector<2x8x24xf32>
    %49 = vector.shape_cast %48 : vector<2x8x24xf32> to vector<16x24xf32>
    %50 = vector.extract_strided_slice %36 {offsets = [0, 0], sizes = [16, 1], strides = [1, 1]} : vector<16x6xf32> to vector<16x1xf32>
    %51 = vector.broadcast %50 : vector<16x1xf32> to vector<16x24xf32>
    %52 = arith.mulf %51, %49 : vector<16x24xf32>
    %53 = arith.addf %52, %41 : vector<16x24xf32>
    %cst_21 = arith.constant dense<0.000000e+00> : vector<16x24xf32>
    %54 = tpu.matmul %44, %38, %cst_21 {dimension_numbers = #tpu.dot_dimension_numbers<[1], [0], [0], [1], [0, 0, 1, 1], [], []>} : vector<16x6xf32>, vector<6x24xf32>, vector<16x24xf32> -> vector<16x24xf32>
    %55 = arith.addf %53, %54 : vector<16x24xf32>
    %56 = vector.extract_strided_slice %55 {offsets = [0, 0], sizes = [16, 18], strides = [1, 1]} : vector<16x24xf32> to vector<16x18xf32>
    %57 = arith.negf %56 : vector<16x18xf32>
    %58 = math.exp %57 : vector<16x18xf32>
    %cst_22 = arith.constant 1.000000e+00 : f32
    %59 = vector.broadcast %cst_22 : f32 to vector<16x18xf32>
    %60 = arith.addf %59, %58 : vector<16x18xf32>
    %61 = arith.divf %59, %60 : vector<16x18xf32>
    %62 = vector.extract_strided_slice %55 {offsets = [0, 18], sizes = [16, 6], strides = [1, 1]} : vector<16x24xf32> to vector<16x6xf32>
    %63 = math.tanh %62 : vector<16x6xf32>
    %64 = vector.extract_strided_slice %61 {offsets = [0, 6], sizes = [16, 6], strides = [1, 1]} : vector<16x18xf32> to vector<16x6xf32>
    %65 = arith.mulf %64, %45 : vector<16x6xf32>
    %66 = vector.extract_strided_slice %61 {offsets = [0, 0], sizes = [16, 6], strides = [1, 1]} : vector<16x18xf32> to vector<16x6xf32>
    %67 = arith.mulf %66, %63 : vector<16x6xf32>
    %68 = arith.addf %65, %67 : vector<16x6xf32>
    %69 = vector.extract_strided_slice %61 {offsets = [0, 12], sizes = [16, 6], strides = [1, 1]} : vector<16x18xf32> to vector<16x6xf32>
    %70 = math.tanh %68 : vector<16x6xf32>
    %71 = arith.mulf %69, %70 : vector<16x6xf32>
    %72 = vector.extract_strided_slice %43 {offsets = [0, 1, 0], sizes = [2, 1, 24], strides = [1, 1, 1]} : vector<2x8x24xf32> to vector<2x1x24xf32>
    %73 = vector.shape_cast %72 : vector<2x1x24xf32> to vector<2x1x24xf32>
    %74 = vector.broadcast %73 : vector<2x1x24xf32> to vector<2x8x24xf32>
    %75 = vector.shape_cast %74 : vector<2x8x24xf32> to vector<16x24xf32>
    %76 = vector.extract_strided_slice %36 {offsets = [0, 1], sizes = [16, 1], strides = [1, 1]} : vector<16x6xf32> to vector<16x1xf32>
    %77 = vector.broadcast %76 : vector<16x1xf32> to vector<16x24xf32>
    %78 = arith.mulf %77, %75 : vector<16x24xf32>
    %79 = arith.addf %78, %41 : vector<16x24xf32>
    %cst_23 = arith.constant dense<0.000000e+00> : vector<16x24xf32>
    %80 = tpu.matmul %71, %38, %cst_23 {dimension_numbers = #tpu.dot_dimension_numbers<[1], [0], [0], [1], [0, 0, 1, 1], [], []>} : vector<16x6xf32>, vector<6x24xf32>, vector<16x24xf32> -> vector<16x24xf32>
    %81 = arith.addf %79, %80 : vector<16x24xf32>
    %82 = vector.extract_strided_slice %81 {offsets = [0, 0], sizes = [16, 18], strides = [1, 1]} : vector<16x24xf32> to vector<16x18xf32>
    %83 = arith.negf %82 : vector<16x18xf32>
    %84 = math.exp %83 : vector<16x18xf32>
    %cst_24 = arith.constant 1.000000e+00 : f32
    %85 = vector.broadcast %cst_24 : f32 to vector<16x18xf32>
    %86 = arith.addf %85, %84 : vector<16x18xf32>
    %87 = arith.divf %85, %86 : vector<16x18xf32>
    %88 = vector.extract_strided_slice %81 {offsets = [0, 18], sizes = [16, 6], strides = [1, 1]} : vector<16x24xf32> to vector<16x6xf32>
    %89 = math.tanh %88 : vector<16x6xf32>
    %90 = vector.extract_strided_slice %87 {offsets = [0, 6], sizes = [16, 6], strides = [1, 1]} : vector<16x18xf32> to vector<16x6xf32>
    %91 = arith.mulf %90, %68 : vector<16x6xf32>
    %92 = vector.extract_strided_slice %87 {offsets = [0, 0], sizes = [16, 6], strides = [1, 1]} : vector<16x18xf32> to vector<16x6xf32>
    %93 = arith.mulf %92, %89 : vector<16x6xf32>
    %94 = arith.addf %91, %93 : vector<16x6xf32>
    %95 = vector.extract_strided_slice %87 {offsets = [0, 12], sizes = [16, 6], strides = [1, 1]} : vector<16x18xf32> to vector<16x6xf32>
    %96 = math.tanh %94 : vector<16x6xf32>
    %97 = arith.mulf %95, %96 : vector<16x6xf32>
    %98 = vector.extract_strided_slice %43 {offsets = [0, 2, 0], sizes = [2, 1, 24], strides = [1, 1, 1]} : vector<2x8x24xf32> to vector<2x1x24xf32>
    %99 = vector.shape_cast %98 : vector<2x1x24xf32> to vector<2x1x24xf32>
    %100 = vector.broadcast %99 : vector<2x1x24xf32> to vector<2x8x24xf32>
    %101 = vector.shape_cast %100 : vector<2x8x24xf32> to vector<16x24xf32>
    %102 = vector.extract_strided_slice %36 {offsets = [0, 2], sizes = [16, 1], strides = [1, 1]} : vector<16x6xf32> to vector<16x1xf32>
    %103 = vector.broadcast %102 : vector<16x1xf32> to vector<16x24xf32>
    %104 = arith.mulf %103, %101 : vector<16x24xf32>
    %105 = arith.addf %104, %41 : vector<16x24xf32>
    %cst_25 = arith.constant dense<0.000000e+00> : vector<16x24xf32>
    %106 = tpu.matmul %97, %38, %cst_25 {dimension_numbers = #tpu.dot_dimension_numbers<[1], [0], [0], [1], [0, 0, 1, 1], [], []>} : vector<16x6xf32>, vector<6x24xf32>, vector<16x24xf32> -> vector<16x24xf32>
    %107 = arith.addf %105, %106 : vector<16x24xf32>
    %108 = vector.extract_strided_slice %107 {offsets = [0, 0], sizes = [16, 18], strides = [1, 1]} : vector<16x24xf32> to vector<16x18xf32>
    %109 = arith.negf %108 : vector<16x18xf32>
    %110 = math.exp %109 : vector<16x18xf32>
    %cst_26 = arith.constant 1.000000e+00 : f32
    %111 = vector.broadcast %cst_26 : f32 to vector<16x18xf32>
    %112 = arith.addf %111, %110 : vector<16x18xf32>
    %113 = arith.divf %111, %112 : vector<16x18xf32>
    %114 = vector.extract_strided_slice %107 {offsets = [0, 18], sizes = [16, 6], strides = [1, 1]} : vector<16x24xf32> to vector<16x6xf32>
    %115 = math.tanh %114 : vector<16x6xf32>
    %116 = vector.extract_strided_slice %113 {offsets = [0, 6], sizes = [16, 6], strides = [1, 1]} : vector<16x18xf32> to vector<16x6xf32>
    %117 = arith.mulf %116, %94 : vector<16x6xf32>
    %118 = vector.extract_strided_slice %113 {offsets = [0, 0], sizes = [16, 6], strides = [1, 1]} : vector<16x18xf32> to vector<16x6xf32>
    %119 = arith.mulf %118, %115 : vector<16x6xf32>
    %120 = arith.addf %117, %119 : vector<16x6xf32>
    %121 = vector.extract_strided_slice %113 {offsets = [0, 12], sizes = [16, 6], strides = [1, 1]} : vector<16x18xf32> to vector<16x6xf32>
    %122 = math.tanh %120 : vector<16x6xf32>
    %123 = arith.mulf %121, %122 : vector<16x6xf32>
    %124 = vector.extract_strided_slice %43 {offsets = [0, 3, 0], sizes = [2, 1, 24], strides = [1, 1, 1]} : vector<2x8x24xf32> to vector<2x1x24xf32>
    %125 = vector.shape_cast %124 : vector<2x1x24xf32> to vector<2x1x24xf32>
    %126 = vector.broadcast %125 : vector<2x1x24xf32> to vector<2x8x24xf32>
    %127 = vector.shape_cast %126 : vector<2x8x24xf32> to vector<16x24xf32>
    %128 = vector.extract_strided_slice %36 {offsets = [0, 3], sizes = [16, 1], strides = [1, 1]} : vector<16x6xf32> to vector<16x1xf32>
    %129 = vector.broadcast %128 : vector<16x1xf32> to vector<16x24xf32>
    %130 = arith.mulf %129, %127 : vector<16x24xf32>
    %131 = arith.addf %130, %41 : vector<16x24xf32>
    %cst_27 = arith.constant dense<0.000000e+00> : vector<16x24xf32>
    %132 = tpu.matmul %123, %38, %cst_27 {dimension_numbers = #tpu.dot_dimension_numbers<[1], [0], [0], [1], [0, 0, 1, 1], [], []>} : vector<16x6xf32>, vector<6x24xf32>, vector<16x24xf32> -> vector<16x24xf32>
    %133 = arith.addf %131, %132 : vector<16x24xf32>
    %134 = vector.extract_strided_slice %133 {offsets = [0, 0], sizes = [16, 18], strides = [1, 1]} : vector<16x24xf32> to vector<16x18xf32>
    %135 = arith.negf %134 : vector<16x18xf32>
    %136 = math.exp %135 : vector<16x18xf32>
    %cst_28 = arith.constant 1.000000e+00 : f32
    %137 = vector.broadcast %cst_28 : f32 to vector<16x18xf32>
    %138 = arith.addf %137, %136 : vector<16x18xf32>
    %139 = arith.divf %137, %138 : vector<16x18xf32>
    %140 = vector.extract_strided_slice %133 {offsets = [0, 18], sizes = [16, 6], strides = [1, 1]} : vector<16x24xf32> to vector<16x6xf32>
    %141 = math.tanh %140 : vector<16x6xf32>
    %142 = vector.extract_strided_slice %139 {offsets = [0, 6], sizes = [16, 6], strides = [1, 1]} : vector<16x18xf32> to vector<16x6xf32>
    %143 = arith.mulf %142, %120 : vector<16x6xf32>
    %144 = vector.extract_strided_slice %139 {offsets = [0, 0], sizes = [16, 6], strides = [1, 1]} : vector<16x18xf32> to vector<16x6xf32>
    %145 = arith.mulf %144, %141 : vector<16x6xf32>
    %146 = arith.addf %143, %145 : vector<16x6xf32>
    %147 = vector.extract_strided_slice %139 {offsets = [0, 12], sizes = [16, 6], strides = [1, 1]} : vector<16x18xf32> to vector<16x6xf32>
    %148 = math.tanh %146 : vector<16x6xf32>
    %149 = arith.mulf %147, %148 : vector<16x6xf32>
    %150 = vector.extract_strided_slice %43 {offsets = [0, 4, 0], sizes = [2, 1, 24], strides = [1, 1, 1]} : vector<2x8x24xf32> to vector<2x1x24xf32>
    %151 = vector.shape_cast %150 : vector<2x1x24xf32> to vector<2x1x24xf32>
    %152 = vector.broadcast %151 : vector<2x1x24xf32> to vector<2x8x24xf32>
    %153 = vector.shape_cast %152 : vector<2x8x24xf32> to vector<16x24xf32>
    %154 = vector.extract_strided_slice %36 {offsets = [0, 4], sizes = [16, 1], strides = [1, 1]} : vector<16x6xf32> to vector<16x1xf32>
    %155 = vector.broadcast %154 : vector<16x1xf32> to vector<16x24xf32>
    %156 = arith.mulf %155, %153 : vector<16x24xf32>
    %157 = arith.addf %156, %41 : vector<16x24xf32>
    %cst_29 = arith.constant dense<0.000000e+00> : vector<16x24xf32>
    %158 = tpu.matmul %149, %38, %cst_29 {dimension_numbers = #tpu.dot_dimension_numbers<[1], [0], [0], [1], [0, 0, 1, 1], [], []>} : vector<16x6xf32>, vector<6x24xf32>, vector<16x24xf32> -> vector<16x24xf32>
    %159 = arith.addf %157, %158 : vector<16x24xf32>
    %160 = vector.extract_strided_slice %159 {offsets = [0, 0], sizes = [16, 18], strides = [1, 1]} : vector<16x24xf32> to vector<16x18xf32>
    %161 = arith.negf %160 : vector<16x18xf32>
    %162 = math.exp %161 : vector<16x18xf32>
    %cst_30 = arith.constant 1.000000e+00 : f32
    %163 = vector.broadcast %cst_30 : f32 to vector<16x18xf32>
    %164 = arith.addf %163, %162 : vector<16x18xf32>
    %165 = arith.divf %163, %164 : vector<16x18xf32>
    %166 = vector.extract_strided_slice %159 {offsets = [0, 18], sizes = [16, 6], strides = [1, 1]} : vector<16x24xf32> to vector<16x6xf32>
    %167 = math.tanh %166 : vector<16x6xf32>
    %168 = vector.extract_strided_slice %165 {offsets = [0, 6], sizes = [16, 6], strides = [1, 1]} : vector<16x18xf32> to vector<16x6xf32>
    %169 = arith.mulf %168, %146 : vector<16x6xf32>
    %170 = vector.extract_strided_slice %165 {offsets = [0, 0], sizes = [16, 6], strides = [1, 1]} : vector<16x18xf32> to vector<16x6xf32>
    %171 = arith.mulf %170, %167 : vector<16x6xf32>
    %172 = arith.addf %169, %171 : vector<16x6xf32>
    %173 = vector.extract_strided_slice %165 {offsets = [0, 12], sizes = [16, 6], strides = [1, 1]} : vector<16x18xf32> to vector<16x6xf32>
    %174 = math.tanh %172 : vector<16x6xf32>
    %175 = arith.mulf %173, %174 : vector<16x6xf32>
    %176 = vector.extract_strided_slice %43 {offsets = [0, 5, 0], sizes = [2, 1, 24], strides = [1, 1, 1]} : vector<2x8x24xf32> to vector<2x1x24xf32>
    %177 = vector.shape_cast %176 : vector<2x1x24xf32> to vector<2x1x24xf32>
    %178 = vector.broadcast %177 : vector<2x1x24xf32> to vector<2x8x24xf32>
    %179 = vector.shape_cast %178 : vector<2x8x24xf32> to vector<16x24xf32>
    %180 = vector.extract_strided_slice %36 {offsets = [0, 5], sizes = [16, 1], strides = [1, 1]} : vector<16x6xf32> to vector<16x1xf32>
    %181 = vector.broadcast %180 : vector<16x1xf32> to vector<16x24xf32>
    %182 = arith.mulf %181, %179 : vector<16x24xf32>
    %183 = arith.addf %182, %41 : vector<16x24xf32>
    %cst_31 = arith.constant dense<0.000000e+00> : vector<16x24xf32>
    %184 = tpu.matmul %175, %38, %cst_31 {dimension_numbers = #tpu.dot_dimension_numbers<[1], [0], [0], [1], [0, 0, 1, 1], [], []>} : vector<16x6xf32>, vector<6x24xf32>, vector<16x24xf32> -> vector<16x24xf32>
    %185 = arith.addf %183, %184 : vector<16x24xf32>
    %186 = vector.extract_strided_slice %185 {offsets = [0, 0], sizes = [16, 18], strides = [1, 1]} : vector<16x24xf32> to vector<16x18xf32>
    %187 = arith.negf %186 : vector<16x18xf32>
    %188 = math.exp %187 : vector<16x18xf32>
    %cst_32 = arith.constant 1.000000e+00 : f32
    %189 = vector.broadcast %cst_32 : f32 to vector<16x18xf32>
    %190 = arith.addf %189, %188 : vector<16x18xf32>
    %191 = arith.divf %189, %190 : vector<16x18xf32>
    %192 = vector.extract_strided_slice %185 {offsets = [0, 18], sizes = [16, 6], strides = [1, 1]} : vector<16x24xf32> to vector<16x6xf32>
    %193 = math.tanh %192 : vector<16x6xf32>
    %194 = vector.extract_strided_slice %191 {offsets = [0, 6], sizes = [16, 6], strides = [1, 1]} : vector<16x18xf32> to vector<16x6xf32>
    %195 = arith.mulf %194, %172 : vector<16x6xf32>
    %196 = vector.extract_strided_slice %191 {offsets = [0, 0], sizes = [16, 6], strides = [1, 1]} : vector<16x18xf32> to vector<16x6xf32>
    %197 = arith.mulf %196, %193 : vector<16x6xf32>
    %198 = arith.addf %195, %197 : vector<16x6xf32>
    %199 = vector.extract_strided_slice %191 {offsets = [0, 12], sizes = [16, 6], strides = [1, 1]} : vector<16x18xf32> to vector<16x6xf32>
    %200 = math.tanh %198 : vector<16x6xf32>
    %201 = arith.mulf %199, %200 : vector<16x6xf32>
    %c27 = arith.constant 27 : index
    %c0_33 = arith.constant 0 : index
    %202 = vector.load %arg4[%c27, %c0_33] : memref<208x128xf32, #tpu.memory_space<vmem>>, vector<6x32xf32>
    %cst_34 = arith.constant dense<0.000000e+00> : vector<16x32xf32>
    %203 = tpu.matmul %23, %202, %cst_34 {dimension_numbers = #tpu.dot_dimension_numbers<[1], [0], [0], [1], [0, 0, 1, 1], [], []>} : vector<16x6xf32>, vector<6x32xf32>, vector<16x32xf32> -> vector<16x32xf32>
    %c33 = arith.constant 33 : index
    %c0_35 = arith.constant 0 : index
    %204 = vector.load %arg4[%c33, %c0_35] : memref<208x128xf32, #tpu.memory_space<vmem>>, vector<6x32xf32>
    %cst_36 = arith.constant dense<0.000000e+00> : vector<16x32xf32>
    %205 = tpu.matmul %201, %204, %cst_36 {dimension_numbers = #tpu.dot_dimension_numbers<[1], [0], [0], [1], [0, 0, 1, 1], [], []>} : vector<16x6xf32>, vector<6x32xf32>, vector<16x32xf32> -> vector<16x32xf32>
    %206 = arith.addf %203, %205 : vector<16x32xf32>
    %c39 = arith.constant 39 : index
    %c0_37 = arith.constant 0 : index
    %207 = vector.load %arg4[%c39, %c0_37] : memref<208x128xf32, #tpu.memory_space<vmem>>, vector<1x32xf32>
    %208 = vector.broadcast %207 : vector<1x32xf32> to vector<16x32xf32>
    %209 = arith.addf %206, %208 : vector<16x32xf32>
    %cst_38 = arith.constant 0.000000e+00 : f32
    %210 = vector.broadcast %cst_38 : f32 to vector<16x32xf32>
    %211 = arith.cmpf ogt, %209, %210 : vector<16x32xf32>
    %cst_39 = arith.constant 0.00999999977 : f32
    %212 = vector.broadcast %cst_39 : f32 to vector<16x32xf32>
    %213 = arith.mulf %212, %209 : vector<16x32xf32>
    %214 = arith.select %211, %209, %213 : vector<16x32xi1>, vector<16x32xf32>
    %c40 = arith.constant 40 : index
    %c0_40 = arith.constant 0 : index
    %215 = vector.load %arg4[%c40, %c0_40] : memref<208x128xf32, #tpu.memory_space<vmem>>, vector<32x128xf32>
    %c72 = arith.constant 72 : index
    %c0_41 = arith.constant 0 : index
    %216 = vector.load %arg4[%c72, %c0_41] : memref<208x128xf32, #tpu.memory_space<vmem>>, vector<32x128xf32>
    %c104 = arith.constant 104 : index
    %c0_42 = arith.constant 0 : index
    %217 = vector.load %arg4[%c104, %c0_42] : memref<208x128xf32, #tpu.memory_space<vmem>>, vector<1x128xf32>
    %218 = vector.shape_cast %217 : vector<1x128xf32> to vector<1x128xf32>
    %219 = vector.broadcast %218 : vector<1x128xf32> to vector<16x128xf32>
    %cst_43 = arith.constant dense<0.000000e+00> : vector<16x128xf32>
    %220 = tpu.matmul %214, %215, %cst_43 {dimension_numbers = #tpu.dot_dimension_numbers<[1], [0], [0], [1], [0, 0, 1, 1], [], []>} : vector<16x32xf32>, vector<32x128xf32>, vector<16x128xf32> -> vector<16x128xf32>
    %221 = vector.shape_cast %220 : vector<16x128xf32> to vector<2x8x128xf32>
    %cst_44 = arith.constant 0.000000e+00 : f32
    %222 = vector.broadcast %cst_44 : f32 to vector<16x32xf32>
    %cst_45 = arith.constant 0.000000e+00 : f32
    %223 = vector.broadcast %cst_45 : f32 to vector<16x32xf32>
    %224 = vector.extract_strided_slice %221 {offsets = [0, 0, 0], sizes = [2, 1, 128], strides = [1, 1, 1]} : vector<2x8x128xf32> to vector<2x1x128xf32>
    %225 = vector.shape_cast %224 : vector<2x1x128xf32> to vector<2x1x128xf32>
    %226 = vector.broadcast %225 : vector<2x1x128xf32> to vector<2x8x128xf32>
    %227 = vector.shape_cast %226 : vector<2x8x128xf32> to vector<16x128xf32>
    %228 = vector.extract_strided_slice %36 {offsets = [0, 0], sizes = [16, 1], strides = [1, 1]} : vector<16x6xf32> to vector<16x1xf32>
    %229 = vector.broadcast %228 : vector<16x1xf32> to vector<16x128xf32>
    %230 = arith.mulf %229, %227 : vector<16x128xf32>
    %231 = arith.addf %230, %219 : vector<16x128xf32>
    %cst_46 = arith.constant dense<0.000000e+00> : vector<16x128xf32>
    %232 = tpu.matmul %222, %216, %cst_46 {dimension_numbers = #tpu.dot_dimension_numbers<[1], [0], [0], [1], [0, 0, 1, 1], [], []>} : vector<16x32xf32>, vector<32x128xf32>, vector<16x128xf32> -> vector<16x128xf32>
    %233 = arith.addf %231, %232 : vector<16x128xf32>
    %234 = vector.extract_strided_slice %233 {offsets = [0, 0], sizes = [16, 96], strides = [1, 1]} : vector<16x128xf32> to vector<16x96xf32>
    %235 = arith.negf %234 : vector<16x96xf32>
    %236 = math.exp %235 : vector<16x96xf32>
    %cst_47 = arith.constant 1.000000e+00 : f32
    %237 = vector.broadcast %cst_47 : f32 to vector<16x96xf32>
    %238 = arith.addf %237, %236 : vector<16x96xf32>
    %239 = arith.divf %237, %238 : vector<16x96xf32>
    %240 = vector.extract_strided_slice %233 {offsets = [0, 96], sizes = [16, 32], strides = [1, 1]} : vector<16x128xf32> to vector<16x32xf32>
    %241 = math.tanh %240 : vector<16x32xf32>
    %242 = vector.extract_strided_slice %239 {offsets = [0, 32], sizes = [16, 32], strides = [1, 1]} : vector<16x96xf32> to vector<16x32xf32>
    %243 = arith.mulf %242, %223 : vector<16x32xf32>
    %244 = vector.extract_strided_slice %239 {offsets = [0, 0], sizes = [16, 32], strides = [1, 1]} : vector<16x96xf32> to vector<16x32xf32>
    %245 = arith.mulf %244, %241 : vector<16x32xf32>
    %246 = arith.addf %243, %245 : vector<16x32xf32>
    %247 = vector.extract_strided_slice %239 {offsets = [0, 64], sizes = [16, 32], strides = [1, 1]} : vector<16x96xf32> to vector<16x32xf32>
    %248 = math.tanh %246 : vector<16x32xf32>
    %249 = arith.mulf %247, %248 : vector<16x32xf32>
    %250 = vector.extract_strided_slice %221 {offsets = [0, 1, 0], sizes = [2, 1, 128], strides = [1, 1, 1]} : vector<2x8x128xf32> to vector<2x1x128xf32>
    %251 = vector.shape_cast %250 : vector<2x1x128xf32> to vector<2x1x128xf32>
    %252 = vector.broadcast %251 : vector<2x1x128xf32> to vector<2x8x128xf32>
    %253 = vector.shape_cast %252 : vector<2x8x128xf32> to vector<16x128xf32>
    %254 = vector.extract_strided_slice %36 {offsets = [0, 1], sizes = [16, 1], strides = [1, 1]} : vector<16x6xf32> to vector<16x1xf32>
    %255 = vector.broadcast %254 : vector<16x1xf32> to vector<16x128xf32>
    %256 = arith.mulf %255, %253 : vector<16x128xf32>
    %257 = arith.addf %256, %219 : vector<16x128xf32>
    %cst_48 = arith.constant dense<0.000000e+00> : vector<16x128xf32>
    %258 = tpu.matmul %249, %216, %cst_48 {dimension_numbers = #tpu.dot_dimension_numbers<[1], [0], [0], [1], [0, 0, 1, 1], [], []>} : vector<16x32xf32>, vector<32x128xf32>, vector<16x128xf32> -> vector<16x128xf32>
    %259 = arith.addf %257, %258 : vector<16x128xf32>
    %260 = vector.extract_strided_slice %259 {offsets = [0, 0], sizes = [16, 96], strides = [1, 1]} : vector<16x128xf32> to vector<16x96xf32>
    %261 = arith.negf %260 : vector<16x96xf32>
    %262 = math.exp %261 : vector<16x96xf32>
    %cst_49 = arith.constant 1.000000e+00 : f32
    %263 = vector.broadcast %cst_49 : f32 to vector<16x96xf32>
    %264 = arith.addf %263, %262 : vector<16x96xf32>
    %265 = arith.divf %263, %264 : vector<16x96xf32>
    %266 = vector.extract_strided_slice %259 {offsets = [0, 96], sizes = [16, 32], strides = [1, 1]} : vector<16x128xf32> to vector<16x32xf32>
    %267 = math.tanh %266 : vector<16x32xf32>
    %268 = vector.extract_strided_slice %265 {offsets = [0, 32], sizes = [16, 32], strides = [1, 1]} : vector<16x96xf32> to vector<16x32xf32>
    %269 = arith.mulf %268, %246 : vector<16x32xf32>
    %270 = vector.extract_strided_slice %265 {offsets = [0, 0], sizes = [16, 32], strides = [1, 1]} : vector<16x96xf32> to vector<16x32xf32>
    %271 = arith.mulf %270, %267 : vector<16x32xf32>
    %272 = arith.addf %269, %271 : vector<16x32xf32>
    %273 = vector.extract_strided_slice %265 {offsets = [0, 64], sizes = [16, 32], strides = [1, 1]} : vector<16x96xf32> to vector<16x32xf32>
    %274 = math.tanh %272 : vector<16x32xf32>
    %275 = arith.mulf %273, %274 : vector<16x32xf32>
    %276 = vector.extract_strided_slice %221 {offsets = [0, 2, 0], sizes = [2, 1, 128], strides = [1, 1, 1]} : vector<2x8x128xf32> to vector<2x1x128xf32>
    %277 = vector.shape_cast %276 : vector<2x1x128xf32> to vector<2x1x128xf32>
    %278 = vector.broadcast %277 : vector<2x1x128xf32> to vector<2x8x128xf32>
    %279 = vector.shape_cast %278 : vector<2x8x128xf32> to vector<16x128xf32>
    %280 = vector.extract_strided_slice %36 {offsets = [0, 2], sizes = [16, 1], strides = [1, 1]} : vector<16x6xf32> to vector<16x1xf32>
    %281 = vector.broadcast %280 : vector<16x1xf32> to vector<16x128xf32>
    %282 = arith.mulf %281, %279 : vector<16x128xf32>
    %283 = arith.addf %282, %219 : vector<16x128xf32>
    %cst_50 = arith.constant dense<0.000000e+00> : vector<16x128xf32>
    %284 = tpu.matmul %275, %216, %cst_50 {dimension_numbers = #tpu.dot_dimension_numbers<[1], [0], [0], [1], [0, 0, 1, 1], [], []>} : vector<16x32xf32>, vector<32x128xf32>, vector<16x128xf32> -> vector<16x128xf32>
    %285 = arith.addf %283, %284 : vector<16x128xf32>
    %286 = vector.extract_strided_slice %285 {offsets = [0, 0], sizes = [16, 96], strides = [1, 1]} : vector<16x128xf32> to vector<16x96xf32>
    %287 = arith.negf %286 : vector<16x96xf32>
    %288 = math.exp %287 : vector<16x96xf32>
    %cst_51 = arith.constant 1.000000e+00 : f32
    %289 = vector.broadcast %cst_51 : f32 to vector<16x96xf32>
    %290 = arith.addf %289, %288 : vector<16x96xf32>
    %291 = arith.divf %289, %290 : vector<16x96xf32>
    %292 = vector.extract_strided_slice %285 {offsets = [0, 96], sizes = [16, 32], strides = [1, 1]} : vector<16x128xf32> to vector<16x32xf32>
    %293 = math.tanh %292 : vector<16x32xf32>
    %294 = vector.extract_strided_slice %291 {offsets = [0, 32], sizes = [16, 32], strides = [1, 1]} : vector<16x96xf32> to vector<16x32xf32>
    %295 = arith.mulf %294, %272 : vector<16x32xf32>
    %296 = vector.extract_strided_slice %291 {offsets = [0, 0], sizes = [16, 32], strides = [1, 1]} : vector<16x96xf32> to vector<16x32xf32>
    %297 = arith.mulf %296, %293 : vector<16x32xf32>
    %298 = arith.addf %295, %297 : vector<16x32xf32>
    %299 = vector.extract_strided_slice %291 {offsets = [0, 64], sizes = [16, 32], strides = [1, 1]} : vector<16x96xf32> to vector<16x32xf32>
    %300 = math.tanh %298 : vector<16x32xf32>
    %301 = arith.mulf %299, %300 : vector<16x32xf32>
    %302 = vector.extract_strided_slice %221 {offsets = [0, 3, 0], sizes = [2, 1, 128], strides = [1, 1, 1]} : vector<2x8x128xf32> to vector<2x1x128xf32>
    %303 = vector.shape_cast %302 : vector<2x1x128xf32> to vector<2x1x128xf32>
    %304 = vector.broadcast %303 : vector<2x1x128xf32> to vector<2x8x128xf32>
    %305 = vector.shape_cast %304 : vector<2x8x128xf32> to vector<16x128xf32>
    %306 = vector.extract_strided_slice %36 {offsets = [0, 3], sizes = [16, 1], strides = [1, 1]} : vector<16x6xf32> to vector<16x1xf32>
    %307 = vector.broadcast %306 : vector<16x1xf32> to vector<16x128xf32>
    %308 = arith.mulf %307, %305 : vector<16x128xf32>
    %309 = arith.addf %308, %219 : vector<16x128xf32>
    %cst_52 = arith.constant dense<0.000000e+00> : vector<16x128xf32>
    %310 = tpu.matmul %301, %216, %cst_52 {dimension_numbers = #tpu.dot_dimension_numbers<[1], [0], [0], [1], [0, 0, 1, 1], [], []>} : vector<16x32xf32>, vector<32x128xf32>, vector<16x128xf32> -> vector<16x128xf32>
    %311 = arith.addf %309, %310 : vector<16x128xf32>
    %312 = vector.extract_strided_slice %311 {offsets = [0, 0], sizes = [16, 96], strides = [1, 1]} : vector<16x128xf32> to vector<16x96xf32>
    %313 = arith.negf %312 : vector<16x96xf32>
    %314 = math.exp %313 : vector<16x96xf32>
    %cst_53 = arith.constant 1.000000e+00 : f32
    %315 = vector.broadcast %cst_53 : f32 to vector<16x96xf32>
    %316 = arith.addf %315, %314 : vector<16x96xf32>
    %317 = arith.divf %315, %316 : vector<16x96xf32>
    %318 = vector.extract_strided_slice %311 {offsets = [0, 96], sizes = [16, 32], strides = [1, 1]} : vector<16x128xf32> to vector<16x32xf32>
    %319 = math.tanh %318 : vector<16x32xf32>
    %320 = vector.extract_strided_slice %317 {offsets = [0, 32], sizes = [16, 32], strides = [1, 1]} : vector<16x96xf32> to vector<16x32xf32>
    %321 = arith.mulf %320, %298 : vector<16x32xf32>
    %322 = vector.extract_strided_slice %317 {offsets = [0, 0], sizes = [16, 32], strides = [1, 1]} : vector<16x96xf32> to vector<16x32xf32>
    %323 = arith.mulf %322, %319 : vector<16x32xf32>
    %324 = arith.addf %321, %323 : vector<16x32xf32>
    %325 = vector.extract_strided_slice %317 {offsets = [0, 64], sizes = [16, 32], strides = [1, 1]} : vector<16x96xf32> to vector<16x32xf32>
    %326 = math.tanh %324 : vector<16x32xf32>
    %327 = arith.mulf %325, %326 : vector<16x32xf32>
    %328 = vector.extract_strided_slice %221 {offsets = [0, 4, 0], sizes = [2, 1, 128], strides = [1, 1, 1]} : vector<2x8x128xf32> to vector<2x1x128xf32>
    %329 = vector.shape_cast %328 : vector<2x1x128xf32> to vector<2x1x128xf32>
    %330 = vector.broadcast %329 : vector<2x1x128xf32> to vector<2x8x128xf32>
    %331 = vector.shape_cast %330 : vector<2x8x128xf32> to vector<16x128xf32>
    %332 = vector.extract_strided_slice %36 {offsets = [0, 4], sizes = [16, 1], strides = [1, 1]} : vector<16x6xf32> to vector<16x1xf32>
    %333 = vector.broadcast %332 : vector<16x1xf32> to vector<16x128xf32>
    %334 = arith.mulf %333, %331 : vector<16x128xf32>
    %335 = arith.addf %334, %219 : vector<16x128xf32>
    %cst_54 = arith.constant dense<0.000000e+00> : vector<16x128xf32>
    %336 = tpu.matmul %327, %216, %cst_54 {dimension_numbers = #tpu.dot_dimension_numbers<[1], [0], [0], [1], [0, 0, 1, 1], [], []>} : vector<16x32xf32>, vector<32x128xf32>, vector<16x128xf32> -> vector<16x128xf32>
    %337 = arith.addf %335, %336 : vector<16x128xf32>
    %338 = vector.extract_strided_slice %337 {offsets = [0, 0], sizes = [16, 96], strides = [1, 1]} : vector<16x128xf32> to vector<16x96xf32>
    %339 = arith.negf %338 : vector<16x96xf32>
    %340 = math.exp %339 : vector<16x96xf32>
    %cst_55 = arith.constant 1.000000e+00 : f32
    %341 = vector.broadcast %cst_55 : f32 to vector<16x96xf32>
    %342 = arith.addf %341, %340 : vector<16x96xf32>
    %343 = arith.divf %341, %342 : vector<16x96xf32>
    %344 = vector.extract_strided_slice %337 {offsets = [0, 96], sizes = [16, 32], strides = [1, 1]} : vector<16x128xf32> to vector<16x32xf32>
    %345 = math.tanh %344 : vector<16x32xf32>
    %346 = vector.extract_strided_slice %343 {offsets = [0, 32], sizes = [16, 32], strides = [1, 1]} : vector<16x96xf32> to vector<16x32xf32>
    %347 = arith.mulf %346, %324 : vector<16x32xf32>
    %348 = vector.extract_strided_slice %343 {offsets = [0, 0], sizes = [16, 32], strides = [1, 1]} : vector<16x96xf32> to vector<16x32xf32>
    %349 = arith.mulf %348, %345 : vector<16x32xf32>
    %350 = arith.addf %347, %349 : vector<16x32xf32>
    %351 = vector.extract_strided_slice %343 {offsets = [0, 64], sizes = [16, 32], strides = [1, 1]} : vector<16x96xf32> to vector<16x32xf32>
    %352 = math.tanh %350 : vector<16x32xf32>
    %353 = arith.mulf %351, %352 : vector<16x32xf32>
    %354 = vector.extract_strided_slice %221 {offsets = [0, 5, 0], sizes = [2, 1, 128], strides = [1, 1, 1]} : vector<2x8x128xf32> to vector<2x1x128xf32>
    %355 = vector.shape_cast %354 : vector<2x1x128xf32> to vector<2x1x128xf32>
    %356 = vector.broadcast %355 : vector<2x1x128xf32> to vector<2x8x128xf32>
    %357 = vector.shape_cast %356 : vector<2x8x128xf32> to vector<16x128xf32>
    %358 = vector.extract_strided_slice %36 {offsets = [0, 5], sizes = [16, 1], strides = [1, 1]} : vector<16x6xf32> to vector<16x1xf32>
    %359 = vector.broadcast %358 : vector<16x1xf32> to vector<16x128xf32>
    %360 = arith.mulf %359, %357 : vector<16x128xf32>
    %361 = arith.addf %360, %219 : vector<16x128xf32>
    %cst_56 = arith.constant dense<0.000000e+00> : vector<16x128xf32>
    %362 = tpu.matmul %353, %216, %cst_56 {dimension_numbers = #tpu.dot_dimension_numbers<[1], [0], [0], [1], [0, 0, 1, 1], [], []>} : vector<16x32xf32>, vector<32x128xf32>, vector<16x128xf32> -> vector<16x128xf32>
    %363 = arith.addf %361, %362 : vector<16x128xf32>
    %364 = vector.extract_strided_slice %363 {offsets = [0, 0], sizes = [16, 96], strides = [1, 1]} : vector<16x128xf32> to vector<16x96xf32>
    %365 = arith.negf %364 : vector<16x96xf32>
    %366 = math.exp %365 : vector<16x96xf32>
    %cst_57 = arith.constant 1.000000e+00 : f32
    %367 = vector.broadcast %cst_57 : f32 to vector<16x96xf32>
    %368 = arith.addf %367, %366 : vector<16x96xf32>
    %369 = arith.divf %367, %368 : vector<16x96xf32>
    %370 = vector.extract_strided_slice %363 {offsets = [0, 96], sizes = [16, 32], strides = [1, 1]} : vector<16x128xf32> to vector<16x32xf32>
    %371 = math.tanh %370 : vector<16x32xf32>
    %372 = vector.extract_strided_slice %369 {offsets = [0, 32], sizes = [16, 32], strides = [1, 1]} : vector<16x96xf32> to vector<16x32xf32>
    %373 = arith.mulf %372, %350 : vector<16x32xf32>
    %374 = vector.extract_strided_slice %369 {offsets = [0, 0], sizes = [16, 32], strides = [1, 1]} : vector<16x96xf32> to vector<16x32xf32>
    %375 = arith.mulf %374, %371 : vector<16x32xf32>
    %376 = arith.addf %373, %375 : vector<16x32xf32>
    %377 = vector.extract_strided_slice %369 {offsets = [0, 64], sizes = [16, 32], strides = [1, 1]} : vector<16x96xf32> to vector<16x32xf32>
    %378 = math.tanh %376 : vector<16x32xf32>
    %379 = arith.mulf %377, %378 : vector<16x32xf32>
    %c105 = arith.constant 105 : index
    %c0_58 = arith.constant 0 : index
    %380 = vector.load %arg4[%c105, %c0_58] : memref<208x128xf32, #tpu.memory_space<vmem>>, vector<32x20xf32>
    %cst_59 = arith.constant dense<0.000000e+00> : vector<16x20xf32>
    %381 = tpu.matmul %214, %380, %cst_59 {dimension_numbers = #tpu.dot_dimension_numbers<[1], [0], [0], [1], [0, 0, 1, 1], [], []>} : vector<16x32xf32>, vector<32x20xf32>, vector<16x20xf32> -> vector<16x20xf32>
    %c137 = arith.constant 137 : index
    %c0_60 = arith.constant 0 : index
    %382 = vector.load %arg4[%c137, %c0_60] : memref<208x128xf32, #tpu.memory_space<vmem>>, vector<32x20xf32>
    %cst_61 = arith.constant dense<0.000000e+00> : vector<16x20xf32>
    %383 = tpu.matmul %379, %382, %cst_61 {dimension_numbers = #tpu.dot_dimension_numbers<[1], [0], [0], [1], [0, 0, 1, 1], [], []>} : vector<16x32xf32>, vector<32x20xf32>, vector<16x20xf32> -> vector<16x20xf32>
    %384 = arith.addf %381, %383 : vector<16x20xf32>
    %c169 = arith.constant 169 : index
    %c0_62 = arith.constant 0 : index
    %385 = vector.load %arg4[%c169, %c0_62] : memref<208x128xf32, #tpu.memory_space<vmem>>, vector<1x20xf32>
    %386 = vector.broadcast %385 : vector<1x20xf32> to vector<16x20xf32>
    %387 = arith.addf %384, %386 : vector<16x20xf32>
    %c170 = arith.constant 170 : index
    %c0_63 = arith.constant 0 : index
    %388 = vector.load %arg4[%c170, %c0_63] : memref<208x128xf32, #tpu.memory_space<vmem>>, vector<1x20xf32>
    %389 = vector.broadcast %388 : vector<1x20xf32> to vector<16x20xf32>
    %390 = arith.mulf %387, %389 : vector<16x20xf32>
    %c171 = arith.constant 171 : index
    %c0_64 = arith.constant 0 : index
    %391 = vector.load %arg4[%c171, %c0_64] : memref<208x128xf32, #tpu.memory_space<vmem>>, vector<1x20xf32>
    %392 = vector.broadcast %391 : vector<1x20xf32> to vector<16x20xf32>
    %393 = arith.addf %390, %392 : vector<16x20xf32>
    %cst_65 = arith.constant 0.000000e+00 : f32
    %394 = vector.broadcast %cst_65 : f32 to vector<16x20xf32>
    %395 = arith.cmpf ogt, %393, %394 : vector<16x20xf32>
    %cst_66 = arith.constant 0.00999999977 : f32
    %396 = vector.broadcast %cst_66 : f32 to vector<16x20xf32>
    %397 = arith.mulf %396, %393 : vector<16x20xf32>
    %398 = arith.select %395, %393, %397 : vector<16x20xi1>, vector<16x20xf32>
    %399 = vector.shape_cast %398 : vector<16x20xf32> to vector<2x8x20xf32>
    %c172 = arith.constant 172 : index
    %c0_67 = arith.constant 0 : index
    %400 = vector.load %arg4[%c172, %c0_67] : memref<208x128xf32, #tpu.memory_space<vmem>>, vector<1x20xf32>
    %401 = vector.shape_cast %400 : vector<1x20xf32> to vector<1x1x20xf32>
    %402 = vector.broadcast %401 : vector<1x1x20xf32> to vector<2x8x20xf32>
    %403 = arith.mulf %399, %402 : vector<2x8x20xf32>
    %cst_68 = arith.constant dense<0.000000e+00> : vector<2x8xf32>
    %404 = vector.multi_reduction <add>, %403, %cst_68 [2] : vector<2x8x20xf32> to vector<2x8xf32>
    %405 = vector.shape_cast %404 : vector<2x8xf32> to vector<2x8x1xf32>
    %406 = tpu.iota {dimensions = array<i32: 1>} : vector<2x8x1xi32>
    %c6_i32 = arith.constant 6 : i32
    %407 = vector.broadcast %c6_i32 : i32 to vector<2x8x1xi32>
    %408 = arith.cmpi slt, %406, %407 : vector<2x8x1xi32>
    %cst_69 = arith.constant 0xFF800000 : f32
    %409 = vector.broadcast %cst_69 : f32 to vector<2x8x1xf32>
    %410 = arith.select %408, %405, %409 : vector<2x8x1xi1>, vector<2x8x1xf32>
    %cst_70 = arith.constant dense<0xFF800000> : vector<2x1xf32>
    %411 = vector.multi_reduction <maximumf>, %410, %cst_70 [1] : vector<2x8x1xf32> to vector<2x1xf32>
    %412 = vector.shape_cast %411 : vector<2x1xf32> to vector<2x1x1xf32>
    %413 = vector.broadcast %412 : vector<2x1x1xf32> to vector<2x8x1xf32>
    %414 = arith.subf %410, %413 : vector<2x8x1xf32>
    %415 = math.exp %414 : vector<2x8x1xf32>
    %cst_71 = arith.constant dense<0.000000e+00> : vector<2x1xf32>
    %416 = vector.multi_reduction <add>, %415, %cst_71 [1] : vector<2x8x1xf32> to vector<2x1xf32>
    %417 = vector.shape_cast %416 : vector<2x1xf32> to vector<2x1x1xf32>
    %418 = tpu.reciprocal %417 {approx = true} : vector<2x1x1xf32> -> vector<2x1x1xf32>
    %419 = vector.broadcast %418 : vector<2x1x1xf32> to vector<2x8x1xf32>
    %420 = arith.mulf %415, %419 : vector<2x8x1xf32>
    %421 = vector.broadcast %420 : vector<2x8x1xf32> to vector<2x8x20xf32>
    %422 = arith.mulf %399, %421 : vector<2x8x20xf32>
    %cst_72 = arith.constant dense<0.000000e+00> : vector<2x20xf32>
    %423 = vector.multi_reduction <add>, %422, %cst_72 [1] : vector<2x8x20xf32> to vector<2x20xf32>
    %c173 = arith.constant 173 : index
    %c0_73 = arith.constant 0 : index
    %424 = vector.load %arg4[%c173, %c0_73] : memref<208x128xf32, #tpu.memory_space<vmem>>, vector<20x10xf32>
    %cst_74 = arith.constant dense<0.000000e+00> : vector<2x10xf32>
    %425 = tpu.matmul %423, %424, %cst_74 {dimension_numbers = #tpu.dot_dimension_numbers<[1], [0], [0], [1], [0, 0, 1, 1], [], []>} : vector<2x20xf32>, vector<20x10xf32>, vector<2x10xf32> -> vector<2x10xf32>
    %c193 = arith.constant 193 : index
    %c0_75 = arith.constant 0 : index
    %426 = vector.load %arg4[%c193, %c0_75] : memref<208x128xf32, #tpu.memory_space<vmem>>, vector<1x10xf32>
    %427 = vector.broadcast %426 : vector<1x10xf32> to vector<2x10xf32>
    %428 = arith.addf %425, %427 : vector<2x10xf32>
    %cst_76 = arith.constant 0.000000e+00 : f32
    %429 = vector.broadcast %cst_76 : f32 to vector<2x10xf32>
    %430 = arith.cmpf ogt, %428, %429 : vector<2x10xf32>
    %cst_77 = arith.constant 0.00999999977 : f32
    %431 = vector.broadcast %cst_77 : f32 to vector<2x10xf32>
    %432 = arith.mulf %431, %428 : vector<2x10xf32>
    %433 = arith.select %430, %428, %432 : vector<2x10xi1>, vector<2x10xf32>
    %c194 = arith.constant 194 : index
    %c0_78 = arith.constant 0 : index
    %434 = vector.load %arg4[%c194, %c0_78] : memref<208x128xf32, #tpu.memory_space<vmem>>, vector<10x2xf32>
    %cst_79 = arith.constant dense<0.000000e+00> : vector<2x2xf32>
    %435 = tpu.matmul %433, %434, %cst_79 {dimension_numbers = #tpu.dot_dimension_numbers<[1], [0], [0], [1], [0, 0, 1, 1], [], []>} : vector<2x10xf32>, vector<10x2xf32>, vector<2x2xf32> -> vector<2x2xf32>
    %c204 = arith.constant 204 : index
    %c0_80 = arith.constant 0 : index
    %436 = vector.load %arg4[%c204, %c0_80] : memref<208x128xf32, #tpu.memory_space<vmem>>, vector<1x2xf32>
    %437 = vector.broadcast %436 : vector<1x2xf32> to vector<2x2xf32>
    %438 = arith.addf %435, %437 : vector<2x2xf32>
    %c0_81 = arith.constant 0 : index
    %c0_82 = arith.constant 0 : index
    %439 = vector.load %arg5[%c0_81, %c0_82] : memref<2x2xf32, #tpu.memory_space<vmem>>, vector<2x2xf32>
    tpu.vector_store %arg5[%c0_81, %c0_82], %438 {strides = array<i32>} : memref<2x2xf32, #tpu.memory_space<vmem>>, vector<2x2xf32>,
    return
  }
  func.func @transform_0(%arg0: i32) -> (i32, i32) {
    %c0_i32 = arith.constant 0 : i32
    %c0_i32_0 = arith.constant 0 : i32
    return %arg0, %c0_i32 : i32, i32
  }
  func.func @transform_1(%arg0: i32) -> (i32, i32) {
    %c0_i32 = arith.constant 0 : i32
    %c0_i32_0 = arith.constant 0 : i32
    return %arg0, %c0_i32 : i32, i32
  }
  func.func @transform_2(%arg0: i32) -> (i32, i32) {
    %c0_i32 = arith.constant 0 : i32
    %c0_i32_0 = arith.constant 0 : i32
    return %arg0, %c0_i32 : i32, i32
  }
  func.func @transform_3(%arg0: i32) -> (i32, i32) {
    %c0_i32 = arith.constant 0 : i32
    %c0_i32_0 = arith.constant 0 : i32
    %c0_i32_1 = arith.constant 0 : i32
    return %c0_i32, %c0_i32_0 : i32, i32
  }
  func.func @transform_4(%arg0: i32) -> (i32, i32) {
    %c0_i32 = arith.constant 0 : i32
    %c0_i32_0 = arith.constant 0 : i32
    return %arg0, %c0_i32 : i32, i32
  }
}

</mosaic_0001>

<llo_original>
// kernel: mcanet_forward.1
$region0: #{mcanet_forward.1}
  #allocation0 [shape = 'u32[]', space=smem, size = 0x4, offset = 0x4, fixed_abs, tag = 'smem constant byte address 0x4 - core index']
  #allocation1 [shape = 'u32[144,128]{1,0:T(1,128)}', space=vmem, size = 0x12000, scoped, tag = 'internal scratch']
  %s0 = inlined_call_operand.vmem [shape: f32[16,6], index: 0, kind: input, shape index: {}]
  %s1 = inlined_call_operand.vmem [shape: f32[16,6], index: 1, kind: input, shape index: {}]
  %s2 = inlined_call_operand.vmem [shape: f32[16,6], index: 2, kind: input, shape index: {}]
  %s3 = inlined_call_operand.hbm [shape: f32[208,128], index: 3, kind: input, shape index: {}]
  %s4 = inlined_call_operand.hbm [shape: f32[2,2], index: 4, kind: output, shape index: {}]
  %s5 = sld [smem:[#allocation0]]
  $region30: #{mcanet_forward.1} parent=0
    _
  %s7 = ssub.s32 1, %s5
  %s8 = scalar_select 0, %s7, %s5
  $region1: #{mcanet_forward.1} parent=0
    #allocation2 [shape = 'u8[106496]{0}', space=vmem, size = 0x1a000, scoped, tag = 'input window, operand 3, single buffered']
    #allocation3 [shape = 's32[1]{0}', space=sflag, size = 0x4, scoped, tag = 'scoped memory for mcanet_forward.1']
    #allocation4 [shape = 's32[1]{0}', space=sflag, size = 0x4, scoped, tag = 'scoped memory for mcanet_forward.1']
    #allocation5 [shape = 'u8[1024]{0}', space=vmem, size = 0x400, scoped, tag = 'output window, operand 0, single buffered']
    %9 = vsyncpa [#allocation3], 0
    %10 = vsyncpa [#allocation4], 0
    // Predicated region
    $region2: #{mcanet_forward.1} parent=1 // pred_check
      _
    $region3: #{mcanet_forward.1} parent=1 // pred_check_branch
      %12 = sbr.rel (0) target = $region5
    $region4: #{mcanet_forward.1} parent=1 // pred_region
      _
    $region5: #{mcanet_forward.1} parent=1 // pred_fallthru
      _
    // Predicated region
    $region6: #{mcanet_forward.1} parent=1 // pred_check
      _
    $region7: #{mcanet_forward.1} parent=1 // pred_check_branch
      %14 = sbr.rel (0) target = $region9
    $region8: #{mcanet_forward.1} parent=1 // pred_region
      _
    $region9: #{mcanet_forward.1} parent=1 // pred_fallthru
      _
    // Predicated region
    $region10: #{mcanet_forward.1} parent=1 // pred_check
      _
    $region11: #{mcanet_forward.1} parent=1 // pred_check_branch
      %16 = sbr.rel (0) target = $region13
    $region12: #{mcanet_forward.1} parent=1 // pred_region
      _
    $region13: #{mcanet_forward.1} parent=1 // pred_fallthru
      _
    // Predicated region
    $region14: #{mcanet_forward.1} parent=1 // pred_check
      _
    $region15: #{mcanet_forward.1} parent=1 // pred_check_branch
      %18 = sbr.rel (0) target = $region17
    $region16: #{mcanet_forward.1} parent=1 // pred_region
      %s20 = ssub.s32 3328, 3328
      %21 = vsyncadd [#allocation3], %s20
      %s22 = sshll.u32 [#allocation2], 4
      %s23 = int_to_ptr.vmem [resolvable:$true] %s22
      %28 = dma.hbm_to_vmem [thread:$0]  %s3, 3328, %s23, [#allocation3], 128, 128, 8
    $region17: #{mcanet_forward.1} parent=1 // pred_fallthru
      _
    // Predicated region
    $region18: #{mcanet_forward.1} parent=1 // pred_check
      _
    $region19: #{mcanet_forward.1} parent=1 // pred_check_branch
      %30 = sbr.rel (0) target = $region21
    $region20: #{mcanet_forward.1} parent=1 // pred_region
      %31 = dma.done [#allocation3], 3328
    $region21: #{mcanet_forward.1} parent=1 // pred_fallthru
      _
    %v32 = vld [vmem:[%s0] sm:$0xff]
    %v33 = vld [vmem:[%s0 + $0x8] sm:$0xff]
    %v34 = vld [vmem:[#allocation2] sm:$0x3f]
    %v35 = vld [vmem:[#allocation2 + $0x6] sm:$0x1]
    %v36 = vlaneseq
    %v37 = vshrl.u32 %v36, 7
    %v38 = vsub.s32 0, %v37
    %v39 = vrot.slane %v35, %v38
    %vm40 = vcmask 48128
    %v42 = vsel %vm40, %v32, 0
    %v45 = vsel %vm40, %v33, 0
    %vm47 = vcmask 1045504
    %v49 = vsel %vm47, %v34, 0
    %51 = vmatprep.subr.mxu0 0.0
    %52 = vmatpush1.msra.mxu0 0.0
    %53 = vmatprep.subr.mxu0 0.0
    %54 = vmatpush1.msra.mxu0 0.0
    %55 = vmatprep.subr.mxu0 0.0
    %56 = vmatpush1.msra.mxu0 0.0
    %57 = vmatprep.subr.mxu0 0.0
    %58 = vmatpush1.msra.mxu0 0.0
    %59 = vmatprep.subr.mxu0 0.0
    %60 = vmatpush1.msra.mxu0 0.0
    %61 = vmatprep.subr.mxu0 0.0
    %62 = vmatpush1.msra.mxu0 0.0
    %63 = vmatprep.subr.mxu0 0.0
    %64 = vmatpush1.msra.mxu0 0.0
    %65 = vmatprep.subr.mxu0 0.0
    %66 = vmatpush1.msra.mxu0 0.0
    %67 = vmatprep.subr.mxu0 0.0
    %68 = vmatpush1.msra.mxu0 0.0
    %69 = vmatprep.subr.mxu0 0.0
    %70 = vmatpush1.msra.mxu0 0.0
    %71 = vmatprep.subr.mxu0 0.0
    %72 = vmatpush1.msra.mxu0 0.0
    %73 = vmatprep.subr.mxu0 0.0
    %74 = vmatpush1.msra.mxu0 0.0
    %75 = vmatprep.subr.mxu0 0.0
    %76 = vmatpush1.msra.mxu0 0.0
    %77 = vmatprep.subr.mxu0 0.0
    %78 = vmatpush1.msra.mxu0 0.0
    %79 = vmatprep.subr.mxu0 0.0
    %80 = vmatpush1.msra.mxu0 0.0
    %81 = vmatprep.subr.mxu0 0.0
    %82 = vmatpush1.msra.mxu0 %v49
    %83 = vmatprep.subr.mxu0 0.0
    %84 = vmatpush2.msra.mxu0 0.0
    %85 = vmatprep.subr.mxu0 0.0
    %86 = vmatpush2.msra.mxu0 0.0
    %87 = vmatprep.subr.mxu0 0.0
    %88 = vmatpush2.msra.mxu0 0.0
    %89 = vmatprep.subr.mxu0 0.0
    %90 = vmatpush2.msra.mxu0 0.0
    %91 = vmatprep.subr.mxu0 0.0
    %92 = vmatpush2.msra.mxu0 0.0
    %93 = vmatprep.subr.mxu0 0.0
    %94 = vmatpush2.msra.mxu0 0.0
    %95 = vmatprep.subr.mxu0 0.0
    %96 = vmatpush2.msra.mxu0 0.0
    %97 = vmatprep.subr.mxu0 0.0
    %98 = vmatpush2.msra.mxu0 0.0
    %99 = vmatprep.subr.mxu0 0.0
    %100 = vmatpush2.msra.mxu0 0.0
    %101 = vmatprep.subr.mxu0 0.0
    %102 = vmatpush2.msra.mxu0 0.0
    %103 = vmatprep.subr.mxu0 0.0
    %104 = vmatpush2.msra.mxu0 0.0
    %105 = vmatprep.subr.mxu0 0.0
    %106 = vmatpush2.msra.mxu0 0.0
    %107 = vmatprep.subr.mxu0 0.0
    %108 = vmatpush2.msra.mxu0 0.0
    %109 = vmatprep.subr.mxu0 0.0
    %110 = vmatpush2.msra.mxu0 0.0
    %111 = vmatprep.subr.mxu0 0.0
    %112 = vmatpush2.msra.mxu0 0.0
    %113 = vmatprep.subr.mxu0 0.0
    %114 = vmatpush2.msra.mxu0 0.0
    %115 = vmatprep.mubr.f32.mxu0 0.0
    %116 = vmatmul.mubr.f32.gmra.mxu0 %v42
    %v117 = vpop.f32.mrf.mxu0
    %v118 = vadd.f32 %v39, %v117
    %v119 = vpop.f32.mrf.mxu0
    %120 = vmatprep.mubr.f32.mxu0 0.0
    %121 = vmatmul.mubr.f32.gmra.mxu0 %v45
    %v122 = vpop.f32.mrf.mxu0
    %v123 = vadd.f32 %v39, %v122
    %v124 = vpop.f32.mrf.mxu0
    %125 = vdwg.mxu0
    %v126 = vld [vmem:[#allocation2 + $0x7] sm:$0x3f]
    %v128 = vsel %vm40, %v118, 0
    %v131 = vsel %vm40, %v123, 0
    %v134 = vsel %vm47, %v126, 0
    %136 = vmatprep.subr.mxu0 0.0
    %137 = vmatpush1.msra.mxu0 0.0
    %138 = vmatprep.subr.mxu0 0.0
    %139 = vmatpush1.msra.mxu0 0.0
    %140 = vmatprep.subr.mxu0 0.0
    %141 = vmatpush1.msra.mxu0 0.0
    %142 = vmatprep.subr.mxu0 0.0
    %143 = vmatpush1.msra.mxu0 0.0
    %144 = vmatprep.subr.mxu0 0.0
    %145 = vmatpush1.msra.mxu0 0.0
    %146 = vmatprep.subr.mxu0 0.0
    %147 = vmatpush1.msra.mxu0 0.0
    %148 = vmatprep.subr.mxu0 0.0
    %149 = vmatpush1.msra.mxu0 0.0
    %150 = vmatprep.subr.mxu0 0.0
    %151 = vmatpush1.msra.mxu0 0.0
    %152 = vmatprep.subr.mxu0 0.0
    %153 = vmatpush1.msra.mxu0 0.0
    %154 = vmatprep.subr.mxu0 0.0
    %155 = vmatpush1.msra.mxu0 0.0
    %156 = vmatprep.subr.mxu0 0.0
    %157 = vmatpush1.msra.mxu0 0.0
    %158 = vmatprep.subr.mxu0 0.0
    %159 = vmatpush1.msra.mxu0 0.0
    %160 = vmatprep.subr.mxu0 0.0
    %161 = vmatpush1.msra.mxu0 0.0
    %162 = vmatprep.subr.mxu0 0.0
    %163 = vmatpush1.msra.mxu0 0.0
    %164 = vmatprep.subr.mxu0 0.0
    %165 = vmatpush1.msra.mxu0 0.0
    %166 = vmatprep.subr.mxu0 0.0
    %167 = vmatpush1.msra.mxu0 %v134
    %168 = vmatprep.subr.mxu0 0.0
    %169 = vmatpush2.msra.mxu0 0.0
    %170 = vmatprep.subr.mxu0 0.0
    %171 = vmatpush2.msra.mxu0 0.0
    %172 = vmatprep.subr.mxu0 0.0
    %173 = vmatpush2.msra.mxu0 0.0
    %174 = vmatprep.subr.mxu0 0.0
    %175 = vmatpush2.msra.mxu0 0.0
    %176 = vmatprep.subr.mxu0 0.0
    %177 = vmatpush2.msra.mxu0 0.0
    %178 = vmatprep.subr.mxu0 0.0
    %179 = vmatpush2.msra.mxu0 0.0
    %180 = vmatprep.subr.mxu0 0.0
    %181 = vmatpush2.msra.mxu0 0.0
    %182 = vmatprep.subr.mxu0 0.0
    %183 = vmatpush2.msra.mxu0 0.0
    %184 = vmatprep.subr.mxu0 0.0
    %185 = vmatpush2.msra.mxu0 0.0
    %186 = vmatprep.subr.mxu0 0.0
    %187 = vmatpush2.msra.mxu0 0.0
    %188 = vmatprep.subr.mxu0 0.0
    %189 = vmatpush2.msra.mxu0 0.0
    %190 = vmatprep.subr.mxu0 0.0
    %191 = vmatpush2.msra.mxu0 0.0
    %192 = vmatprep.subr.mxu0 0.0
    %193 = vmatpush2.msra.mxu0 0.0
    %194 = vmatprep.subr.mxu0 0.0
    %195 = vmatpush2.msra.mxu0 0.0
    %196 = vmatprep.subr.mxu0 0.0
    %197 = vmatpush2.msra.mxu0 0.0
    %198 = vmatprep.subr.mxu0 0.0
    %199 = vmatpush2.msra.mxu0 0.0
    %200 = vmatprep.mubr.f32.mxu0 0.0
    %201 = vmatmul.mubr.f32.gmra.mxu0 %v128
    %v202 = vpop.f32.mrf.mxu0
    %v203 = vadd.f32 0.0, %v202
    %v204 = vpop.f32.mrf.mxu0
    %205 = vmatprep.mubr.f32.mxu0 0.0
    %206 = vmatmul.mubr.f32.gmra.mxu0 %v131
    %v207 = vpop.f32.mrf.mxu0
    %v208 = vadd.f32 0.0, %v207
    %v209 = vpop.f32.mrf.mxu0
    %210 = vdwg.mxu0
    %vm211 = vcmp.gt.f32.partialorder %v203, 0.0
    %vm212 = vcmp.gt.f32.partialorder %v208, 0.0
    %v213 = vmul.f32 %v203, 0.01
    %v214 = vmul.f32 %v208, 0.01
    %v215 = vsel %vm211, %v203, %v213
    %v216 = vsel %vm212, %v208, %v214
    %v217 = vsel %vm40, %v215, -inf
    %218 = vmax.xlane.f32.xlu0 %v217
    %v219 = vpop.xlane.xlu0 %218
    %v220 = vsel %vm40, %v216, -inf
    %221 = vmax.xlane.f32.xlu0 %v220
    %v222 = vpop.xlane.xlu0 %221
    %v223 = vsub.f32 %v215, %v219
    %v224 = vsub.f32 %v216, %v222
    %v225 = vmul.f32 %v223, 1.442695
    %v226 = vpow.pop %v225
    %v227 = vmul.f32 %v224, 1.442695
    %v228 = vpow.pop %v227
    %v229 = vsel %vm40, %v226, 0.0
    %230 = vadd.xlane.f32.xlu0 %v229
    %v231 = vpop.xlane.xlu0 %230
    %v232 = vsel %vm40, %v228, 0.0
    %233 = vadd.xlane.f32.xlu0 %v232
    %v234 = vpop.xlane.xlu0 %233
    %v235 = vrcp.pop %v231
    %v236 = vrcp.pop %v234
    %v237 = vmul.f32 %v226, %v235
    %v238 = vmul.f32 %v228, %v236
    %v239 = vmul.f32 %v237, %v118
    %v240 = vmul.f32 %v238, %v123
    %v241 = vld [vmem:[#allocation2 + $0xd] sm:$0x1]
    %v242 = vld [vmem:[%s1] sm:$0xff]
    %v243 = vld [vmem:[%s1 + $0x8] sm:$0xff]
    %s245 = vtos %v241
    %v246 = vstv %s245
    %v248 = vmul.f32 %v242, %v246
    %v249 = vmul.f32 %v243, %v246
    %v250 = vld [vmem:[%s2] sm:$0xff]
    %v251 = vld [vmem:[%s2 + $0x8] sm:$0xff]
    %252 = vrot.lane.b32.xlu0 %v241, 127
    %v253 = vpop.permute.xlu0 %252
    %s254 = vtos %v253
    %v255 = vstv %s254
    %v257 = vmul.f32 %v250, %v255
    %v258 = vmul.f32 %v251, %v255
    %v259 = vadd.f32 %v248, %v257
    %v260 = vadd.f32 %v249, %v258
    %261 = vrot.lane.b32.xlu0 %v241, 126
    %v262 = vpop.permute.xlu0 %261
    %s263 = vtos %v262
    %v264 = vstv %s263
    %v266 = vadd.f32 %v259, %v264
    %v267 = vadd.f32 %v260, %v264
    %v268 = vld [vmem:[#allocation2 + $0xe] sm:$0x3f]
    %v269 = vld [vmem:[#allocation2 + $0x14] sm:$0x3f]
    %v270 = vld [vmem:[#allocation2 + $0x1a] sm:$0x1]
    %v271 = vlaneseq
    %v272 = vshrl.u32 %v271, 7
    %v273 = vsub.s32 0, %v272
    %v274 = vrot.slane %v270, %v273
    %v276 = vsel %vm40, %v239, 0
    %v279 = vsel %vm40, %v240, 0
    %v282 = vsel %vm47, %v268, 0
    %284 = vmatprep.subr.mxu0 0.0
    %285 = vmatpush1.msra.mxu0 0.0
    %286 = vmatprep.subr.mxu0 0.0
    %287 = vmatpush1.msra.mxu0 0.0
    %288 = vmatprep.subr.mxu0 0.0
    %289 = vmatpush1.msra.mxu0 0.0
    %290 = vmatprep.subr.mxu0 0.0
    %291 = vmatpush1.msra.mxu0 0.0
    %292 = vmatprep.subr.mxu0 0.0
    %293 = vmatpush1.msra.mxu0 0.0
    %294 = vmatprep.subr.mxu0 0.0
    %295 = vmatpush1.msra.mxu0 0.0
    %296 = vmatprep.subr.mxu0 0.0
    %297 = vmatpush1.msra.mxu0 0.0
    %298 = vmatprep.subr.mxu0 0.0
    %299 = vmatpush1.msra.mxu0 0.0
    %300 = vmatprep.subr.mxu0 0.0
    %301 = vmatpush1.msra.mxu0 0.0
    %302 = vmatprep.subr.mxu0 0.0
    %303 = vmatpush1.msra.mxu0 0.0
    %304 = vmatprep.subr.mxu0 0.0
    %305 = vmatpush1.msra.mxu0 0.0
    %306 = vmatprep.subr.mxu0 0.0
    %307 = vmatpush1.msra.mxu0 0.0
    %308 = vmatprep.subr.mxu0 0.0
    %309 = vmatpush1.msra.mxu0 0.0
    %310 = vmatprep.subr.mxu0 0.0
    %311 = vmatpush1.msra.mxu0 0.0
    %312 = vmatprep.subr.mxu0 0.0
    %313 = vmatpush1.msra.mxu0 0.0
    %314 = vmatprep.subr.mxu0 0.0
    %315 = vmatpush1.msra.mxu0 %v282
    %316 = vmatprep.subr.mxu0 0.0
    %317 = vmatpush2.msra.mxu0 0.0
    %318 = vmatprep.subr.mxu0 0.0
    %319 = vmatpush2.msra.mxu0 0.0
    %320 = vmatprep.subr.mxu0 0.0
    %321 = vmatpush2.msra.mxu0 0.0
    %322 = vmatprep.subr.mxu0 0.0
    %323 = vmatpush2.msra.mxu0 0.0
    %324 = vmatprep.subr.mxu0 0.0
    %325 = vmatpush2.msra.mxu0 0.0
    %326 = vmatprep.subr.mxu0 0.0
    %327 = vmatpush2.msra.mxu0 0.0
    %328 = vmatprep.subr.mxu0 0.0
    %329 = vmatpush2.msra.mxu0 0.0
    %330 = vmatprep.subr.mxu0 0.0
    %331 = vmatpush2.msra.mxu0 0.0
    %332 = vmatprep.subr.mxu0 0.0
    %333 = vmatpush2.msra.mxu0 0.0
    %334 = vmatprep.subr.mxu0 0.0
    %335 = vmatpush2.msra.mxu0 0.0
    %336 = vmatprep.subr.mxu0 0.0
    %337 = vmatpush2.msra.mxu0 0.0
    %338 = vmatprep.subr.mxu0 0.0
    %339 = vmatpush2.msra.mxu0 0.0
    %340 = vmatprep.subr.mxu0 0.0
    %341 = vmatpush2.msra.mxu0 0.0
    %342 = vmatprep.subr.mxu0 0.0
    %343 = vmatpush2.msra.mxu0 0.0
    %344 = vmatprep.subr.mxu0 0.0
    %345 = vmatpush2.msra.mxu0 0.0
    %346 = vmatprep.subr.mxu0 0.0
    %347 = vmatpush2.msra.mxu0 0.0
    %348 = vmatprep.mubr.f32.mxu0 0.0
    %349 = vmatmul.mubr.f32.gmra.mxu0 %v276
    %v350 = vpop.f32.mrf.mxu0
    %v351 = vadd.f32 0.0, %v350
    %v352 = vpop.f32.mrf.mxu0
    %353 = vmatprep.mubr.f32.mxu0 0.0
    %354 = vmatmul.mubr.f32.gmra.mxu0 %v279
    %v355 = vpop.f32.mrf.mxu0
    %v356 = vadd.f32 0.0, %v355
    %v357 = vpop.f32.mrf.mxu0
    %358 = vdwg.mxu0
    %v359 = vlaneseq
    %v360 = vshrl.u32 %v359, 7
    %v361 = vsub.s32 0, %v360
    %v362 = vrot.slane %v351, %v361
    %v363 = vlaneseq
    %v364 = vshrl.u32 %v363, 7
    %v365 = vsub.s32 0, %v364
    %v366 = vrot.slane %v356, %v365
    %368 = vset.pattern.permute.xlu0 0
    %369 = vperm.xlu0 %368, %v266
    %v370 = vpop.permute.xlu0 %369
    %373 = vset.pattern.permute.xlu0 0
    %374 = vperm.xlu0 %373, %v267
    %v375 = vpop.permute.xlu0 %374
    %v377 = vmul.f32 %v370, %v362
    %v378 = vmul.f32 %v375, %v366
    %v379 = vadd.f32 %v377, %v274
    %v380 = vadd.f32 %v378, %v274
    %v382 = vsel %vm40, 0.0, 0
    %v385 = vsel %vm47, %v269, 0
    %387 = vmatprep.subr.mxu0 0.0
    %388 = vmatpush1.msra.mxu0 0.0
    %389 = vmatprep.subr.mxu0 0.0
    %390 = vmatpush1.msra.mxu0 0.0
    %391 = vmatprep.subr.mxu0 0.0
    %392 = vmatpush1.msra.mxu0 0.0
    %393 = vmatprep.subr.mxu0 0.0
    %394 = vmatpush1.msra.mxu0 0.0
    %395 = vmatprep.subr.mxu0 0.0
    %396 = vmatpush1.msra.mxu0 0.0
    %397 = vmatprep.subr.mxu0 0.0
    %398 = vmatpush1.msra.mxu0 0.0
    %399 = vmatprep.subr.mxu0 0.0
    %400 = vmatpush1.msra.mxu0 0.0
    %401 = vmatprep.subr.mxu0 0.0
    %402 = vmatpush1.msra.mxu0 0.0
    %403 = vmatprep.subr.mxu0 0.0
    %404 = vmatpush1.msra.mxu0 0.0
    %405 = vmatprep.subr.mxu0 0.0
    %406 = vmatpush1.msra.mxu0 0.0
    %407 = vmatprep.subr.mxu0 0.0
    %408 = vmatpush1.msra.mxu0 0.0
    %409 = vmatprep.subr.mxu0 0.0
    %410 = vmatpush1.msra.mxu0 0.0
    %411 = vmatprep.subr.mxu0 0.0
    %412 = vmatpush1.msra.mxu0 0.0
    %413 = vmatprep.subr.mxu0 0.0
    %414 = vmatpush1.msra.mxu0 0.0
    %415 = vmatprep.subr.mxu0 0.0
    %416 = vmatpush1.msra.mxu0 0.0
    %417 = vmatprep.subr.mxu0 0.0
    %418 = vmatpush1.msra.mxu0 %v385
    %419 = vmatprep.subr.mxu0 0.0
    %420 = vmatpush2.msra.mxu0 0.0
    %421 = vmatprep.subr.mxu0 0.0
    %422 = vmatpush2.msra.mxu0 0.0
    %423 = vmatprep.subr.mxu0 0.0
    %424 = vmatpush2.msra.mxu0 0.0
    %425 = vmatprep.subr.mxu0 0.0
    %426 = vmatpush2.msra.mxu0 0.0
    %427 = vmatprep.subr.mxu0 0.0
    %428 = vmatpush2.msra.mxu0 0.0
    %429 = vmatprep.subr.mxu0 0.0
    %430 = vmatpush2.msra.mxu0 0.0
    %431 = vmatprep.subr.mxu0 0.0
    %432 = vmatpush2.msra.mxu0 0.0
    %433 = vmatprep.subr.mxu0 0.0
    %434 = vmatpush2.msra.mxu0 0.0
    %435 = vmatprep.subr.mxu0 0.0
    %436 = vmatpush2.msra.mxu0 0.0
    %437 = vmatprep.subr.mxu0 0.0
    %438 = vmatpush2.msra.mxu0 0.0
    %439 = vmatprep.subr.mxu0 0.0
    %440 = vmatpush2.msra.mxu0 0.0
    %441 = vmatprep.subr.mxu0 0.0
    %442 = vmatpush2.msra.mxu0 0.0
    %443 = vmatprep.subr.mxu0 0.0
    %444 = vmatpush2.msra.mxu0 0.0
    %445 = vmatprep.subr.mxu0 0.0
    %446 = vmatpush2.msra.mxu0 0.0
    %447 = vmatprep.subr.mxu0 0.0
    %448 = vmatpush2.msra.mxu0 0.0
    %449 = vmatprep.subr.mxu0 0.0
    %450 = vmatpush2.msra.mxu0 0.0
    %451 = vmatprep.mubr.f32.mxu0 0.0
    %452 = vmatmul.mubr.f32.gmra.mxu0 %v382
    %v453 = vpop.f32.mrf.mxu0
    %v454 = vadd.f32 0.0, %v453
    %v455 = vpop.f32.mrf.mxu0
    %456 = vmatprep.mubr.f32.mxu0 0.0
    %457 = vmatmul.mubr.f32.gmra.mxu0 %v382
    %v458 = vpop.f32.mrf.mxu0
    %v459 = vadd.f32 0.0, %v458
    %v460 = vpop.f32.mrf.mxu0
    %461 = vdwg.mxu0
    %v462 = vadd.f32 %v379, %v454
    %v463 = vadd.f32 %v380, %v459
    %v464 = vxor.u32 %v462, 2147483648
    %v465 = vxor.u32 %v463, 2147483648
    %v466 = vmul.f32 %v464, 1.442695
    %v467 = vpow.pop %v466
    %v468 = vmul.f32 %v465, 1.442695
    %v469 = vpow.pop %v468
    %v470 = vadd.f32 %v467, 1.0
    %v471 = vadd.f32 %v469, 1.0
    %v472 = vrcp.pop %v470
    %v473 = vmul.f32 1.0, %v472
    %v474 = vrcp.pop %v471
    %v475 = vmul.f32 1.0, %v474
    %v476 = vtanh.pop %v462
    %v477 = vtanh.pop %v463
    %v478 = vmul.f32 %v473, 0.0
    %v479 = vmul.f32 %v475, 0.0
    %482 = vrot.lane.b32.xlu0 %v476, 110
    %v483 = vpop.permute.xlu0 %482
    %484 = vrot.lane.b32.xlu0 %v477, 110
    %v485 = vpop.permute.xlu0 %484
    %v488 = vmul.f32 %v473, %v483
    %v489 = vmul.f32 %v475, %v485
    %492 = vrot.lane.b32.xlu0 %v488, 6
    %v493 = vpop.permute.xlu0 %492
    %494 = vrot.lane.b32.xlu0 %v489, 6
    %v495 = vpop.permute.xlu0 %494
    %v498 = vadd.f32 %v478, %v493
    %v499 = vadd.f32 %v479, %v495
    %v500 = vtanh.pop %v498
    %v501 = vtanh.pop %v499
    %504 = vrot.lane.b32.xlu0 %v500, 6
    %v505 = vpop.permute.xlu0 %504
    %506 = vrot.lane.b32.xlu0 %v501, 6
    %v507 = vpop.permute.xlu0 %506
    %v510 = vmul.f32 %v473, %v505
    %v511 = vmul.f32 %v475, %v507
    %v512 = vlaneseq
    %v513 = vshrl.u32 %v512, 7
    %v514 = vsub.s32 1, %v513
    %v515 = vrot.slane %v351, %v514
    %v516 = vlaneseq
    %v517 = vshrl.u32 %v516, 7
    %v518 = vsub.s32 1, %v517
    %v519 = vrot.slane %v356, %v518
    %520 = vset.pattern.permute.xlu0 1
    %521 = vperm.xlu0 %520, %v266
    %v522 = vpop.permute.xlu0 %521
    %524 = vset.pattern.permute.xlu0 1
    %525 = vperm.xlu0 %524, %v267
    %v526 = vpop.permute.xlu0 %525
    %v528 = vmul.f32 %v522, %v515
    %v529 = vmul.f32 %v526, %v519
    %v530 = vadd.f32 %v528, %v274
    %v531 = vadd.f32 %v529, %v274
    %534 = vrot.lane.b32.xlu0 %v510, 116
    %v535 = vpop.permute.xlu0 %534
    %536 = vrot.lane.b32.xlu0 %v511, 116
    %v537 = vpop.permute.xlu0 %536
    %v538 = vsel %vm40, %v535, 0
    %v540 = vsel %vm40, %v537, 0
    %542 = vmatprep.subr.mxu0 0.0
    %543 = vmatpush1.msra.mxu0 0.0
    %544 = vmatprep.subr.mxu0 0.0
    %545 = vmatpush1.msra.mxu0 0.0
    %546 = vmatprep.subr.mxu0 0.0
    %547 = vmatpush1.msra.mxu0 0.0
    %548 = vmatprep.subr.mxu0 0.0
    %549 = vmatpush1.msra.mxu0 0.0
    %550 = vmatprep.subr.mxu0 0.0
    %551 = vmatpush1.msra.mxu0 0.0
    %552 = vmatprep.subr.mxu0 0.0
    %553 = vmatpush1.msra.mxu0 0.0
    %554 = vmatprep.subr.mxu0 0.0
    %555 = vmatpush1.msra.mxu0 0.0
    %556 = vmatprep.subr.mxu0 0.0
    %557 = vmatpush1.msra.mxu0 0.0
    %558 = vmatprep.subr.mxu0 0.0
    %559 = vmatpush1.msra.mxu0 0.0
    %560 = vmatprep.subr.mxu0 0.0
    %561 = vmatpush1.msra.mxu0 0.0
    %562 = vmatprep.subr.mxu0 0.0
    %563 = vmatpush1.msra.mxu0 0.0
    %564 = vmatprep.subr.mxu0 0.0
    %565 = vmatpush1.msra.mxu0 0.0
    %566 = vmatprep.subr.mxu0 0.0
    %567 = vmatpush1.msra.mxu0 0.0
    %568 = vmatprep.subr.mxu0 0.0
    %569 = vmatpush1.msra.mxu0 0.0
    %570 = vmatprep.subr.mxu0 0.0
    %571 = vmatpush1.msra.mxu0 0.0
    %572 = vmatprep.subr.mxu0 0.0
    %573 = vmatpush1.msra.mxu0 %v385
    %574 = vmatprep.subr.mxu0 0.0
    %575 = vmatpush2.msra.mxu0 0.0
    %576 = vmatprep.subr.mxu0 0.0
    %577 = vmatpush2.msra.mxu0 0.0
    %578 = vmatprep.subr.mxu0 0.0
    %579 = vmatpush2.msra.mxu0 0.0
    %580 = vmatprep.subr.mxu0 0.0
    %581 = vmatpush2.msra.mxu0 0.0
    %582 = vmatprep.subr.mxu0 0.0
    %583 = vmatpush2.msra.mxu0 0.0
    %584 = vmatprep.subr.mxu0 0.0
    %585 = vmatpush2.msra.mxu0 0.0
    %586 = vmatprep.subr.mxu0 0.0
    %587 = vmatpush2.msra.mxu0 0.0
    %588 = vmatprep.subr.mxu0 0.0
    %589 = vmatpush2.msra.mxu0 0.0
    %590 = vmatprep.subr.mxu0 0.0
    %591 = vmatpush2.msra.mxu0 0.0
    %592 = vmatprep.subr.mxu0 0.0
    %593 = vmatpush2.msra.mxu0 0.0
    %594 = vmatprep.subr.mxu0 0.0
    %595 = vmatpush2.msra.mxu0 0.0
    %596 = vmatprep.subr.mxu0 0.0
    %597 = vmatpush2.msra.mxu0 0.0
    %598 = vmatprep.subr.mxu0 0.0
    %599 = vmatpush2.msra.mxu0 0.0
    %600 = vmatprep.subr.mxu0 0.0
    %601 = vmatpush2.msra.mxu0 0.0
    %602 = vmatprep.subr.mxu0 0.0
    %603 = vmatpush2.msra.mxu0 0.0
    %604 = vmatprep.subr.mxu0 0.0
    %605 = vmatpush2.msra.mxu0 0.0
    %606 = vmatprep.mubr.f32.mxu0 0.0
    %607 = vmatmul.mubr.f32.gmra.mxu0 %v538
    %v608 = vpop.f32.mrf.mxu0
    %v609 = vadd.f32 0.0, %v608
    %v610 = vpop.f32.mrf.mxu0
    %611 = vmatprep.mubr.f32.mxu0 0.0
    %612 = vmatmul.mubr.f32.gmra.mxu0 %v540
    %v613 = vpop.f32.mrf.mxu0
    %v614 = vadd.f32 0.0, %v613
    %v615 = vpop.f32.mrf.mxu0
    %616 = vdwg.mxu0
    %v617 = vadd.f32 %v530, %v609
    %v618 = vadd.f32 %v531, %v614
    %v619 = vxor.u32 %v617, 2147483648
    %v620 = vxor.u32 %v618, 2147483648
    %v621 = vmul.f32 %v619, 1.442695
    %v622 = vpow.pop %v621
    %v623 = vmul.f32 %v620, 1.442695
    %v624 = vpow.pop %v623
    %v625 = vadd.f32 %v622, 1.0
    %v626 = vadd.f32 %v624, 1.0
    %v627 = vrcp.pop %v625
    %v628 = vmul.f32 1.0, %v627
    %v629 = vrcp.pop %v626
    %v630 = vmul.f32 1.0, %v629
    %v631 = vtanh.pop %v617
    %v632 = vtanh.pop %v618
    %v633 = vmul.f32 %v628, %v498
    %v634 = vmul.f32 %v630, %v499
    %637 = vrot.lane.b32.xlu0 %v631, 110
    %v638 = vpop.permute.xlu0 %637
    %639 = vrot.lane.b32.xlu0 %v632, 110
    %v640 = vpop.permute.xlu0 %639
    %v643 = vmul.f32 %v628, %v638
    %v644 = vmul.f32 %v630, %v640
    %647 = vrot.lane.b32.xlu0 %v643, 6
    %v648 = vpop.permute.xlu0 %647
    %649 = vrot.lane.b32.xlu0 %v644, 6
    %v650 = vpop.permute.xlu0 %649
    %v653 = vadd.f32 %v633, %v648
    %v654 = vadd.f32 %v634, %v650
    %v655 = vtanh.pop %v653
    %v656 = vtanh.pop %v654
    %659 = vrot.lane.b32.xlu0 %v655, 6
    %v660 = vpop.permute.xlu0 %659
    %661 = vrot.lane.b32.xlu0 %v656, 6
    %v662 = vpop.permute.xlu0 %661
    %v665 = vmul.f32 %v628, %v660
    %v666 = vmul.f32 %v630, %v662
    %v667 = vlaneseq
    %v668 = vshrl.u32 %v667, 7
    %v669 = vsub.s32 2, %v668
    %v670 = vrot.slane %v351, %v669
    %v671 = vlaneseq
    %v672 = vshrl.u32 %v671, 7
    %v673 = vsub.s32 2, %v672
    %v674 = vrot.slane %v356, %v673
    %675 = vset.pattern.permute.xlu0 2
    %676 = vperm.xlu0 %675, %v266
    %v677 = vpop.permute.xlu0 %676
    %679 = vset.pattern.permute.xlu0 2
    %680 = vperm.xlu0 %679, %v267
    %v681 = vpop.permute.xlu0 %680
    %v683 = vmul.f32 %v677, %v670
    %v684 = vmul.f32 %v681, %v674
    %v685 = vadd.f32 %v683, %v274
    %v686 = vadd.f32 %v684, %v274
    %689 = vrot.lane.b32.xlu0 %v665, 116
    %v690 = vpop.permute.xlu0 %689
    %691 = vrot.lane.b32.xlu0 %v666, 116
    %v692 = vpop.permute.xlu0 %691
    %v693 = vsel %vm40, %v690, 0
    %v695 = vsel %vm40, %v692, 0
    %697 = vmatprep.subr.mxu0 0.0
    %698 = vmatpush1.msra.mxu0 0.0
    %699 = vmatprep.subr.mxu0 0.0
    %700 = vmatpush1.msra.mxu0 0.0
    %701 = vmatprep.subr.mxu0 0.0
    %702 = vmatpush1.msra.mxu0 0.0
    %703 = vmatprep.subr.mxu0 0.0
    %704 = vmatpush1.msra.mxu0 0.0
    %705 = vmatprep.subr.mxu0 0.0
    %706 = vmatpush1.msra.mxu0 0.0
    %707 = vmatprep.subr.mxu0 0.0
    %708 = vmatpush1.msra.mxu0 0.0
    %709 = vmatprep.subr.mxu0 0.0
    %710 = vmatpush1.msra.mxu0 0.0
    %711 = vmatprep.subr.mxu0 0.0
    %712 = vmatpush1.msra.mxu0 0.0
    %713 = vmatprep.subr.mxu0 0.0
    %714 = vmatpush1.msra.mxu0 0.0
    %715 = vmatprep.subr.mxu0 0.0
    %716 = vmatpush1.msra.mxu0 0.0
    %717 = vmatprep.subr.mxu0 0.0
    %718 = vmatpush1.msra.mxu0 0.0
    %719 = vmatprep.subr.mxu0 0.0
    %720 = vmatpush1.msra.mxu0 0.0
    %721 = vmatprep.subr.mxu0 0.0
    %722 = vmatpush1.msra.mxu0 0.0
    %723 = vmatprep.subr.mxu0 0.0
    %724 = vmatpush1.msra.mxu0 0.0
    %725 = vmatprep.subr.mxu0 0.0
    %726 = vmatpush1.msra.mxu0 0.0
    %727 = vmatprep.subr.mxu0 0.0
    %728 = vmatpush1.msra.mxu0 %v385
    %729 = vmatprep.subr.mxu0 0.0
    %730 = vmatpush2.msra.mxu0 0.0
    %731 = vmatprep.subr.mxu0 0.0
    %732 = vmatpush2.msra.mxu0 0.0
    %733 = vmatprep.subr.mxu0 0.0
    %734 = vmatpush2.msra.mxu0 0.0
    %735 = vmatprep.subr.mxu0 0.0
    %736 = vmatpush2.msra.mxu0 0.0
    %737 = vmatprep.subr.mxu0 0.0
    %738 = vmatpush2.msra.mxu0 0.0
    %739 = vmatprep.subr.mxu0 0.0
    %740 = vmatpush2.msra.mxu0 0.0
    %741 = vmatprep.subr.mxu0 0.0
    %742 = vmatpush2.msra.mxu0 0.0
    %743 = vmatprep.subr.mxu0 0.0
    %744 = vmatpush2.msra.mxu0 0.0
    %745 = vmatprep.subr.mxu0 0.0
    %746 = vmatpush2.msra.mxu0 0.0
    %747 = vmatprep.subr.mxu0 0.0
    %748 = vmatpush2.msra.mxu0 0.0
    %749 = vmatprep.subr.mxu0 0.0
    %750 = vmatpush2.msra.mxu0 0.0
    %751 = vmatprep.subr.mxu0 0.0
    %752 = vmatpush2.msra.mxu0 0.0
    %753 = vmatprep.subr.mxu0 0.0
    %754 = vmatpush2.msra.mxu0 0.0
    %755 = vmatprep.subr.mxu0 0.0
    %756 = vmatpush2.msra.mxu0 0.0
    %757 = vmatprep.subr.mxu0 0.0
    %758 = vmatpush2.msra.mxu0 0.0
    %759 = vmatprep.subr.mxu0 0.0
    %760 = vmatpush2.msra.mxu0 0.0
    %761 = vmatprep.mubr.f32.mxu0 0.0
    %762 = vmatmul.mubr.f32.gmra.mxu0 %v693
    %v763 = vpop.f32.mrf.mxu0
    %v764 = vadd.f32 0.0, %v763
    %v765 = vpop.f32.mrf.mxu0
    %766 = vmatprep.mubr.f32.mxu0 0.0
    %767 = vmatmul.mubr.f32.gmra.mxu0 %v695
    %v768 = vpop.f32.mrf.mxu0
    %v769 = vadd.f32 0.0, %v768
    %v770 = vpop.f32.mrf.mxu0
    %771 = vdwg.mxu0
    %v772 = vadd.f32 %v685, %v764
    %v773 = vadd.f32 %v686, %v769
    %v774 = vxor.u32 %v772, 2147483648
    %v775 = vxor.u32 %v773, 2147483648
    %v776 = vmul.f32 %v774, 1.442695
    %v777 = vpow.pop %v776
    %v778 = vmul.f32 %v775, 1.442695
    %v779 = vpow.pop %v778
    %v780 = vadd.f32 %v777, 1.0
    %v781 = vadd.f32 %v779, 1.0
    %v782 = vrcp.pop %v780
    %v783 = vmul.f32 1.0, %v782
    %v784 = vrcp.pop %v781
    %v785 = vmul.f32 1.0, %v784
    %v786 = vtanh.pop %v772
    %v787 = vtanh.pop %v773
    %v788 = vmul.f32 %v783, %v653
    %v789 = vmul.f32 %v785, %v654
    %792 = vrot.lane.b32.xlu0 %v786, 110
    %v793 = vpop.permute.xlu0 %792
    %794 = vrot.lane.b32.xlu0 %v787, 110
    %v795 = vpop.permute.xlu0 %794
    %v798 = vmul.f32 %v783, %v793
    %v799 = vmul.f32 %v785, %v795
    %802 = vrot.lane.b32.xlu0 %v798, 6
    %v803 = vpop.permute.xlu0 %802
    %804 = vrot.lane.b32.xlu0 %v799, 6
    %v805 = vpop.permute.xlu0 %804
    %v808 = vadd.f32 %v788, %v803
    %v809 = vadd.f32 %v789, %v805
    %v810 = vtanh.pop %v808
    %v811 = vtanh.pop %v809
    %814 = vrot.lane.b32.xlu0 %v810, 6
    %v815 = vpop.permute.xlu0 %814
    %816 = vrot.lane.b32.xlu0 %v811, 6
    %v817 = vpop.permute.xlu0 %816
    %v820 = vmul.f32 %v783, %v815
    %v821 = vmul.f32 %v785, %v817
    %v822 = vlaneseq
    %v823 = vshrl.u32 %v822, 7
    %v824 = vsub.s32 3, %v823
    %v825 = vrot.slane %v351, %v824
    %v826 = vlaneseq
    %v827 = vshrl.u32 %v826, 7
    %v828 = vsub.s32 3, %v827
    %v829 = vrot.slane %v356, %v828
    %830 = vset.pattern.permute.xlu0 3
    %831 = vperm.xlu0 %830, %v266
    %v832 = vpop.permute.xlu0 %831
    %834 = vset.pattern.permute.xlu0 3
    %835 = vperm.xlu0 %834, %v267
    %v836 = vpop.permute.xlu0 %835
    %v838 = vmul.f32 %v832, %v825
    %v839 = vmul.f32 %v836, %v829
    %v840 = vadd.f32 %v838, %v274
    %v841 = vadd.f32 %v839, %v274
    %844 = vrot.lane.b32.xlu0 %v820, 116
    %v845 = vpop.permute.xlu0 %844
    %846 = vrot.lane.b32.xlu0 %v821, 116
    %v847 = vpop.permute.xlu0 %846
    %v848 = vsel %vm40, %v845, 0
    %v850 = vsel %vm40, %v847, 0
    %852 = vmatprep.subr.mxu0 0.0
    %853 = vmatpush1.msra.mxu0 0.0
    %854 = vmatprep.subr.mxu0 0.0
    %855 = vmatpush1.msra.mxu0 0.0
    %856 = vmatprep.subr.mxu0 0.0
    %857 = vmatpush1.msra.mxu0 0.0
    %858 = vmatprep.subr.mxu0 0.0
    %859 = vmatpush1.msra.mxu0 0.0
    %860 = vmatprep.subr.mxu0 0.0
    %861 = vmatpush1.msra.mxu0 0.0
    %862 = vmatprep.subr.mxu0 0.0
    %863 = vmatpush1.msra.mxu0 0.0
    %864 = vmatprep.subr.mxu0 0.0
    %865 = vmatpush1.msra.mxu0 0.0
    %866 = vmatprep.subr.mxu0 0.0
    %867 = vmatpush1.msra.mxu0 0.0
    %868 = vmatprep.subr.mxu0 0.0
    %869 = vmatpush1.msra.mxu0 0.0
    %870 = vmatprep.subr.mxu0 0.0
    %871 = vmatpush1.msra.mxu0 0.0
    %872 = vmatprep.subr.mxu0 0.0
    %873 = vmatpush1.msra.mxu0 0.0
    %874 = vmatprep.subr.mxu0 0.0
    %875 = vmatpush1.msra.mxu0 0.0
    %876 = vmatprep.subr.mxu0 0.0
    %877 = vmatpush1.msra.mxu0 0.0
    %878 = vmatprep.subr.mxu0 0.0
    %879 = vmatpush1.msra.mxu0 0.0
    %880 = vmatprep.subr.mxu0 0.0
    %881 = vmatpush1.msra.mxu0 0.0
    %882 = vmatprep.subr.mxu0 0.0
    %883 = vmatpush1.msra.mxu0 %v385
    %884 = vmatprep.subr.mxu0 0.0
    %885 = vmatpush2.msra.mxu0 0.0
    %886 = vmatprep.subr.mxu0 0.0
    %887 = vmatpush2.msra.mxu0 0.0
    %888 = vmatprep.subr.mxu0 0.0
    %889 = vmatpush2.msra.mxu0 0.0
    %890 = vmatprep.subr.mxu0 0.0
    %891 = vmatpush2.msra.mxu0 0.0
    %892 = vmatprep.subr.mxu0 0.0
    %893 = vmatpush2.msra.mxu0 0.0
    %894 = vmatprep.subr.mxu0 0.0
    %895 = vmatpush2.msra.mxu0 0.0
    %896 = vmatprep.subr.mxu0 0.0
    %897 = vmatpush2.msra.mxu0 0.0
    %898 = vmatprep.subr.mxu0 0.0
    %899 = vmatpush2.msra.mxu0 0.0
    %900 = vmatprep.subr.mxu0 0.0
    %901 = vmatpush2.msra.mxu0 0.0
    %902 = vmatprep.subr.mxu0 0.0
    %903 = vmatpush2.msra.mxu0 0.0
    %904 = vmatprep.subr.mxu0 0.0
    %905 = vmatpush2.msra.mxu0 0.0
    %906 = vmatprep.subr.mxu0 0.0
    %907 = vmatpush2.msra.mxu0 0.0
    %908 = vmatprep.subr.mxu0 0.0
    %909 = vmatpush2.msra.mxu0 0.0
    %910 = vmatprep.subr.mxu0 0.0
    %911 = vmatpush2.msra.mxu0 0.0
    %912 = vmatprep.subr.mxu0 0.0
    %913 = vmatpush2.msra.mxu0 0.0
    %914 = vmatprep.subr.mxu0 0.0
    %915 = vmatpush2.msra.mxu0 0.0
    %916 = vmatprep.mubr.f32.mxu0 0.0
    %917 = vmatmul.mubr.f32.gmra.mxu0 %v848
    %v918 = vpop.f32.mrf.mxu0
    %v919 = vadd.f32 0.0, %v918
    %v920 = vpop.f32.mrf.mxu0
    %921 = vmatprep.mubr.f32.mxu0 0.0
    %922 = vmatmul.mubr.f32.gmra.mxu0 %v850
    %v923 = vpop.f32.mrf.mxu0
    %v924 = vadd.f32 0.0, %v923
    %v925 = vpop.f32.mrf.mxu0
    %926 = vdwg.mxu0
    %v927 = vadd.f32 %v840, %v919
    %v928 = vadd.f32 %v841, %v924
    %v929 = vxor.u32 %v927, 2147483648
    %v930 = vxor.u32 %v928, 2147483648
    %v931 = vmul.f32 %v929, 1.442695
    %v932 = vpow.pop %v931
    %v933 = vmul.f32 %v930, 1.442695
    %v934 = vpow.pop %v933
    %v935 = vadd.f32 %v932, 1.0
    %v936 = vadd.f32 %v934, 1.0
    %v937 = vrcp.pop %v935
    %v938 = vmul.f32 1.0, %v937
    %v939 = vrcp.pop %v936
    %v940 = vmul.f32 1.0, %v939
    %v941 = vtanh.pop %v927
    %v942 = vtanh.pop %v928
    %v943 = vmul.f32 %v938, %v808
    %v944 = vmul.f32 %v940, %v809
    %947 = vrot.lane.b32.xlu0 %v941, 110
    %v948 = vpop.permute.xlu0 %947
    %949 = vrot.lane.b32.xlu0 %v942, 110
    %v950 = vpop.permute.xlu0 %949
    %v953 = vmul.f32 %v938, %v948
    %v954 = vmul.f32 %v940, %v950
    %957 = vrot.lane.b32.xlu0 %v953, 6
    %v958 = vpop.permute.xlu0 %957
    %959 = vrot.lane.b32.xlu0 %v954, 6
    %v960 = vpop.permute.xlu0 %959
    %v963 = vadd.f32 %v943, %v958
    %v964 = vadd.f32 %v944, %v960
    %v965 = vtanh.pop %v963
    %v966 = vtanh.pop %v964
    %969 = vrot.lane.b32.xlu0 %v965, 6
    %v970 = vpop.permute.xlu0 %969
    %971 = vrot.lane.b32.xlu0 %v966, 6
    %v972 = vpop.permute.xlu0 %971
    %v975 = vmul.f32 %v938, %v970
    %v976 = vmul.f32 %v940, %v972
    %v977 = vlaneseq
    %v978 = vshrl.u32 %v977, 7
    %v979 = vsub.s32 4, %v978
    %v980 = vrot.slane %v351, %v979
    %v981 = vlaneseq
    %v982 = vshrl.u32 %v981, 7
    %v983 = vsub.s32 4, %v982
    %v984 = vrot.slane %v356, %v983
    %985 = vset.pattern.permute.xlu0 4
    %986 = vperm.xlu0 %985, %v266
    %v987 = vpop.permute.xlu0 %986
    %989 = vset.pattern.permute.xlu0 4
    %990 = vperm.xlu0 %989, %v267
    %v991 = vpop.permute.xlu0 %990
    %v993 = vmul.f32 %v987, %v980
    %v994 = vmul.f32 %v991, %v984
    %v995 = vadd.f32 %v993, %v274
    %v996 = vadd.f32 %v994, %v274
    %999 = vrot.lane.b32.xlu0 %v975, 116
    %v1000 = vpop.permute.xlu0 %999
    %1001 = vrot.lane.b32.xlu0 %v976, 116
    %v1002 = vpop.permute.xlu0 %1001
    %v1003 = vsel %vm40, %v1000, 0
    %v1005 = vsel %vm40, %v1002, 0
    %1007 = vmatprep.subr.mxu0 0.0
    %1008 = vmatpush1.msra.mxu0 0.0
    %1009 = vmatprep.subr.mxu0 0.0
    %1010 = vmatpush1.msra.mxu0 0.0
    %1011 = vmatprep.subr.mxu0 0.0
    %1012 = vmatpush1.msra.mxu0 0.0
    %1013 = vmatprep.subr.mxu0 0.0
    %1014 = vmatpush1.msra.mxu0 0.0
    %1015 = vmatprep.subr.mxu0 0.0
    %1016 = vmatpush1.msra.mxu0 0.0
    %1017 = vmatprep.subr.mxu0 0.0
    %1018 = vmatpush1.msra.mxu0 0.0
    %1019 = vmatprep.subr.mxu0 0.0
    %1020 = vmatpush1.msra.mxu0 0.0
    %1021 = vmatprep.subr.mxu0 0.0
    %1022 = vmatpush1.msra.mxu0 0.0
    %1023 = vmatprep.subr.mxu0 0.0
    %1024 = vmatpush1.msra.mxu0 0.0
    %1025 = vmatprep.subr.mxu0 0.0
    %1026 = vmatpush1.msra.mxu0 0.0
    %1027 = vmatprep.subr.mxu0 0.0
    %1028 = vmatpush1.msra.mxu0 0.0
    %1029 = vmatprep.subr.mxu0 0.0
    %1030 = vmatpush1.msra.mxu0 0.0
    %1031 = vmatprep.subr.mxu0 0.0
    %1032 = vmatpush1.msra.mxu0 0.0
    %1033 = vmatprep.subr.mxu0 0.0
    %1034 = vmatpush1.msra.mxu0 0.0
    %1035 = vmatprep.subr.mxu0 0.0
    %1036 = vmatpush1.msra.mxu0 0.0
    %1037 = vmatprep.subr.mxu0 0.0
    %1038 = vmatpush1.msra.mxu0 %v385
    %1039 = vmatprep.subr.mxu0 0.0
    %1040 = vmatpush2.msra.mxu0 0.0
    %1041 = vmatprep.subr.mxu0 0.0
    %1042 = vmatpush2.msra.mxu0 0.0
    %1043 = vmatprep.subr.mxu0 0.0
    %1044 = vmatpush2.msra.mxu0 0.0
    %1045 = vmatprep.subr.mxu0 0.0
    %1046 = vmatpush2.msra.mxu0 0.0
    %1047 = vmatprep.subr.mxu0 0.0
    %1048 = vmatpush2.msra.mxu0 0.0
    %1049 = vmatprep.subr.mxu0 0.0
    %1050 = vmatpush2.msra.mxu0 0.0
    %1051 = vmatprep.subr.mxu0 0.0
    %1052 = vmatpush2.msra.mxu0 0.0
    %1053 = vmatprep.subr.mxu0 0.0
    %1054 = vmatpush2.msra.mxu0 0.0
    %1055 = vmatprep.subr.mxu0 0.0
    %1056 = vmatpush2.msra.mxu0 0.0
    %1057 = vmatprep.subr.mxu0 0.0
    %1058 = vmatpush2.msra.mxu0 0.0
    %1059 = vmatprep.subr.mxu0 0.0
    %1060 = vmatpush2.msra.mxu0 0.0
    %1061 = vmatprep.subr.mxu0 0.0
    %1062 = vmatpush2.msra.mxu0 0.0
    %1063 = vmatprep.subr.mxu0 0.0
    %1064 = vmatpush2.msra.mxu0 0.0
    %1065 = vmatprep.subr.mxu0 0.0
    %1066 = vmatpush2.msra.mxu0 0.0
    %1067 = vmatprep.subr.mxu0 0.0
    %1068 = vmatpush2.msra.mxu0 0.0
    %1069 = vmatprep.subr.mxu0 0.0
    %1070 = vmatpush2.msra.mxu0 0.0
    %1071 = vmatprep.mubr.f32.mxu0 0.0
    %1072 = vmatmul.mubr.f32.gmra.mxu0 %v1003
    %v1073 = vpop.f32.mrf.mxu0
    %v1074 = vadd.f32 0.0, %v1073
    %v1075 = vpop.f32.mrf.mxu0
    %1076 = vmatprep.mubr.f32.mxu0 0.0
    %1077 = vmatmul.mubr.f32.gmra.mxu0 %v1005
    %v1078 = vpop.f32.mrf.mxu0
    %v1079 = vadd.f32 0.0, %v1078
    %v1080 = vpop.f32.mrf.mxu0
    %1081 = vdwg.mxu0
    %v1082 = vadd.f32 %v995, %v1074
    %v1083 = vadd.f32 %v996, %v1079
    %v1084 = vxor.u32 %v1082, 2147483648
    %v1085 = vxor.u32 %v1083, 2147483648
    %v1086 = vmul.f32 %v1084, 1.442695
    %v1087 = vpow.pop %v1086
    %v1088 = vmul.f32 %v1085, 1.442695
    %v1089 = vpow.pop %v1088
    %v1090 = vadd.f32 %v1087, 1.0
    %v1091 = vadd.f32 %v1089, 1.0
    %v1092 = vrcp.pop %v1090
    %v1093 = vmul.f32 1.0, %v1092
    %v1094 = vrcp.pop %v1091
    %v1095 = vmul.f32 1.0, %v1094
    %v1096 = vtanh.pop %v1082
    %v1097 = vtanh.pop %v1083
    %v1098 = vmul.f32 %v1093, %v963
    %v1099 = vmul.f32 %v1095, %v964
    %1102 = vrot.lane.b32.xlu0 %v1096, 110
    %v1103 = vpop.permute.xlu0 %1102
    %1104 = vrot.lane.b32.xlu0 %v1097, 110
    %v1105 = vpop.permute.xlu0 %1104
    %v1108 = vmul.f32 %v1093, %v1103
    %v1109 = vmul.f32 %v1095, %v1105
    %1112 = vrot.lane.b32.xlu0 %v1108, 6
    %v1113 = vpop.permute.xlu0 %1112
    %1114 = vrot.lane.b32.xlu0 %v1109, 6
    %v1115 = vpop.permute.xlu0 %1114
    %v1118 = vadd.f32 %v1098, %v1113
    %v1119 = vadd.f32 %v1099, %v1115
    %v1120 = vtanh.pop %v1118
    %v1121 = vtanh.pop %v1119
    %1124 = vrot.lane.b32.xlu0 %v1120, 6
    %v1125 = vpop.permute.xlu0 %1124
    %1126 = vrot.lane.b32.xlu0 %v1121, 6
    %v1127 = vpop.permute.xlu0 %1126
    %v1130 = vmul.f32 %v1093, %v1125
    %v1131 = vmul.f32 %v1095, %v1127
    %v1132 = vlaneseq
    %v1133 = vshrl.u32 %v1132, 7
    %v1134 = vsub.s32 5, %v1133
    %v1135 = vrot.slane %v351, %v1134
    %v1136 = vlaneseq
    %v1137 = vshrl.u32 %v1136, 7
    %v1138 = vsub.s32 5, %v1137
    %v1139 = vrot.slane %v356, %v1138
    %1140 = vset.pattern.permute.xlu0 5
    %1141 = vperm.xlu0 %1140, %v266
    %v1142 = vpop.permute.xlu0 %1141
    %1144 = vset.pattern.permute.xlu0 5
    %1145 = vperm.xlu0 %1144, %v267
    %v1146 = vpop.permute.xlu0 %1145
    %v1148 = vmul.f32 %v1142, %v1135
    %v1149 = vmul.f32 %v1146, %v1139
    %v1150 = vadd.f32 %v1148, %v274
    %v1151 = vadd.f32 %v1149, %v274
    %1154 = vrot.lane.b32.xlu0 %v1130, 116
    %v1155 = vpop.permute.xlu0 %1154
    %1156 = vrot.lane.b32.xlu0 %v1131, 116
    %v1157 = vpop.permute.xlu0 %1156
    %v1158 = vsel %vm40, %v1155, 0
    %v1160 = vsel %vm40, %v1157, 0
    %1162 = vmatprep.subr.mxu0 0.0
    %1163 = vmatpush1.msra.mxu0 0.0
    %1164 = vmatprep.subr.mxu0 0.0
    %1165 = vmatpush1.msra.mxu0 0.0
    %1166 = vmatprep.subr.mxu0 0.0
    %1167 = vmatpush1.msra.mxu0 0.0
    %1168 = vmatprep.subr.mxu0 0.0
    %1169 = vmatpush1.msra.mxu0 0.0
    %1170 = vmatprep.subr.mxu0 0.0
    %1171 = vmatpush1.msra.mxu0 0.0
    %1172 = vmatprep.subr.mxu0 0.0
    %1173 = vmatpush1.msra.mxu0 0.0
    %1174 = vmatprep.subr.mxu0 0.0
    %1175 = vmatpush1.msra.mxu0 0.0
    %1176 = vmatprep.subr.mxu0 0.0
    %1177 = vmatpush1.msra.mxu0 0.0
    %1178 = vmatprep.subr.mxu0 0.0
    %1179 = vmatpush1.msra.mxu0 0.0
    %1180 = vmatprep.subr.mxu0 0.0
    %1181 = vmatpush1.msra.mxu0 0.0
    %1182 = vmatprep.subr.mxu0 0.0
    %1183 = vmatpush1.msra.mxu0 0.0
    %1184 = vmatprep.subr.mxu0 0.0
    %1185 = vmatpush1.msra.mxu0 0.0
    %1186 = vmatprep.subr.mxu0 0.0
    %1187 = vmatpush1.msra.mxu0 0.0
    %1188 = vmatprep.subr.mxu0 0.0
    %1189 = vmatpush1.msra.mxu0 0.0
    %1190 = vmatprep.subr.mxu0 0.0
    %1191 = vmatpush1.msra.mxu0 0.0
    %1192 = vmatprep.subr.mxu0 0.0
    %1193 = vmatpush1.msra.mxu0 %v385
    %1194 = vmatprep.subr.mxu0 0.0
    %1195 = vmatpush2.msra.mxu0 0.0
    %1196 = vmatprep.subr.mxu0 0.0
    %1197 = vmatpush2.msra.mxu0 0.0
    %1198 = vmatprep.subr.mxu0 0.0
    %1199 = vmatpush2.msra.mxu0 0.0
    %1200 = vmatprep.subr.mxu0 0.0
    %1201 = vmatpush2.msra.mxu0 0.0
    %1202 = vmatprep.subr.mxu0 0.0
    %1203 = vmatpush2.msra.mxu0 0.0
    %1204 = vmatprep.subr.mxu0 0.0
    %1205 = vmatpush2.msra.mxu0 0.0
    %1206 = vmatprep.subr.mxu0 0.0
    %1207 = vmatpush2.msra.mxu0 0.0
    %1208 = vmatprep.subr.mxu0 0.0
    %1209 = vmatpush2.msra.mxu0 0.0
    %1210 = vmatprep.subr.mxu0 0.0
    %1211 = vmatpush2.msra.mxu0 0.0
    %1212 = vmatprep.subr.mxu0 0.0
    %1213 = vmatpush2.msra.mxu0 0.0
    %1214 = vmatprep.subr.mxu0 0.0
    %1215 = vmatpush2.msra.mxu0 0.0
    %1216 = vmatprep.subr.mxu0 0.0
    %1217 = vmatpush2.msra.mxu0 0.0
    %1218 = vmatprep.subr.mxu0 0.0
    %1219 = vmatpush2.msra.mxu0 0.0
    %1220 = vmatprep.subr.mxu0 0.0
    %1221 = vmatpush2.msra.mxu0 0.0
    %1222 = vmatprep.subr.mxu0 0.0
    %1223 = vmatpush2.msra.mxu0 0.0
    %1224 = vmatprep.subr.mxu0 0.0
    %1225 = vmatpush2.msra.mxu0 0.0
    %1226 = vmatprep.mubr.f32.mxu0 0.0
    %1227 = vmatmul.mubr.f32.gmra.mxu0 %v1158
    %v1228 = vpop.f32.mrf.mxu0
    %v1229 = vadd.f32 0.0, %v1228
    %v1230 = vpop.f32.mrf.mxu0
    %1231 = vmatprep.mubr.f32.mxu0 0.0
    %1232 = vmatmul.mubr.f32.gmra.mxu0 %v1160
    %v1233 = vpop.f32.mrf.mxu0
    %v1234 = vadd.f32 0.0, %v1233
    %v1235 = vpop.f32.mrf.mxu0
    %1236 = vdwg.mxu0
    %v1237 = vadd.f32 %v1150, %v1229
    %v1238 = vadd.f32 %v1151, %v1234
    %v1239 = vxor.u32 %v1237, 2147483648
    %v1240 = vxor.u32 %v1238, 2147483648
    %v1241 = vmul.f32 %v1239, 1.442695
    %v1242 = vpow.pop %v1241
    %v1243 = vmul.f32 %v1240, 1.442695
    %v1244 = vpow.pop %v1243
    %v1245 = vadd.f32 %v1242, 1.0
    %v1246 = vadd.f32 %v1244, 1.0
    %v1247 = vrcp.pop %v1245
    %v1248 = vmul.f32 1.0, %v1247
    %v1249 = vrcp.pop %v1246
    %v1250 = vmul.f32 1.0, %v1249
    %v1251 = vtanh.pop %v1237
    %v1252 = vtanh.pop %v1238
    %v1253 = vmul.f32 %v1248, %v1118
    %v1254 = vmul.f32 %v1250, %v1119
    %1257 = vrot.lane.b32.xlu0 %v1251, 110
    %v1258 = vpop.permute.xlu0 %1257
    %1259 = vrot.lane.b32.xlu0 %v1252, 110
    %v1260 = vpop.permute.xlu0 %1259
    %v1263 = vmul.f32 %v1248, %v1258
    %v1264 = vmul.f32 %v1250, %v1260
    %1267 = vrot.lane.b32.xlu0 %v1263, 6
    %v1268 = vpop.permute.xlu0 %1267
    %1269 = vrot.lane.b32.xlu0 %v1264, 6
    %v1270 = vpop.permute.xlu0 %1269
    %v1273 = vadd.f32 %v1253, %v1268
    %v1274 = vadd.f32 %v1254, %v1270
    %v1275 = vtanh.pop %v1273
    %v1276 = vtanh.pop %v1274
    %1279 = vrot.lane.b32.xlu0 %v1275, 6
    %v1280 = vpop.permute.xlu0 %1279
    %1281 = vrot.lane.b32.xlu0 %v1276, 6
    %v1282 = vpop.permute.xlu0 %1281
    %v1285 = vmul.f32 %v1248, %v1280
    %v1286 = vmul.f32 %v1250, %v1282
    %v1287 = vld [vmem:[#allocation2 + $0x1b] sm:$0x3f]
    %v1288 = vld [vmem:[#allocation2 + $0x21] sm:$0x3f]
    %1291 = vrot.lane.b32.xlu0 %v1285, 116
    %v1292 = vpop.permute.xlu0 %1291
    %1293 = vrot.lane.b32.xlu0 %v1286, 116
    %v1294 = vpop.permute.xlu0 %1293
    %v1295 = vsel %vm40, %v1292, 0
    %v1297 = vsel %vm40, %v1294, 0
    %v1300 = vsel %vm47, %v1288, 0
    %1302 = vmatprep.subr.mxu0 0.0
    %1303 = vmatpush1.msra.mxu0 0.0
    %1304 = vmatprep.subr.mxu0 0.0
    %1305 = vmatpush1.msra.mxu0 0.0
    %1306 = vmatprep.subr.mxu0 0.0
    %1307 = vmatpush1.msra.mxu0 0.0
    %1308 = vmatprep.subr.mxu0 0.0
    %1309 = vmatpush1.msra.mxu0 0.0
    %1310 = vmatprep.subr.mxu0 0.0
    %1311 = vmatpush1.msra.mxu0 0.0
    %1312 = vmatprep.subr.mxu0 0.0
    %1313 = vmatpush1.msra.mxu0 0.0
    %1314 = vmatprep.subr.mxu0 0.0
    %1315 = vmatpush1.msra.mxu0 0.0
    %1316 = vmatprep.subr.mxu0 0.0
    %1317 = vmatpush1.msra.mxu0 0.0
    %1318 = vmatprep.subr.mxu0 0.0
    %1319 = vmatpush1.msra.mxu0 0.0
    %1320 = vmatprep.subr.mxu0 0.0
    %1321 = vmatpush1.msra.mxu0 0.0
    %1322 = vmatprep.subr.mxu0 0.0
    %1323 = vmatpush1.msra.mxu0 0.0
    %1324 = vmatprep.subr.mxu0 0.0
    %1325 = vmatpush1.msra.mxu0 0.0
    %1326 = vmatprep.subr.mxu0 0.0
    %1327 = vmatpush1.msra.mxu0 0.0
    %1328 = vmatprep.subr.mxu0 0.0
    %1329 = vmatpush1.msra.mxu0 0.0
    %1330 = vmatprep.subr.mxu0 0.0
    %1331 = vmatpush1.msra.mxu0 0.0
    %1332 = vmatprep.subr.mxu0 0.0
    %1333 = vmatpush1.msra.mxu0 %v1300
    %1334 = vmatprep.subr.mxu0 0.0
    %1335 = vmatpush2.msra.mxu0 0.0
    %1336 = vmatprep.subr.mxu0 0.0
    %1337 = vmatpush2.msra.mxu0 0.0
    %1338 = vmatprep.subr.mxu0 0.0
    %1339 = vmatpush2.msra.mxu0 0.0
    %1340 = vmatprep.subr.mxu0 0.0
    %1341 = vmatpush2.msra.mxu0 0.0
    %1342 = vmatprep.subr.mxu0 0.0
    %1343 = vmatpush2.msra.mxu0 0.0
    %1344 = vmatprep.subr.mxu0 0.0
    %1345 = vmatpush2.msra.mxu0 0.0
    %1346 = vmatprep.subr.mxu0 0.0
    %1347 = vmatpush2.msra.mxu0 0.0
    %1348 = vmatprep.subr.mxu0 0.0
    %1349 = vmatpush2.msra.mxu0 0.0
    %1350 = vmatprep.subr.mxu0 0.0
    %1351 = vmatpush2.msra.mxu0 0.0
    %1352 = vmatprep.subr.mxu0 0.0
    %1353 = vmatpush2.msra.mxu0 0.0
    %1354 = vmatprep.subr.mxu0 0.0
    %1355 = vmatpush2.msra.mxu0 0.0
    %1356 = vmatprep.subr.mxu0 0.0
    %1357 = vmatpush2.msra.mxu0 0.0
    %1358 = vmatprep.subr.mxu0 0.0
    %1359 = vmatpush2.msra.mxu0 0.0
    %1360 = vmatprep.subr.mxu0 0.0
    %1361 = vmatpush2.msra.mxu0 0.0
    %1362 = vmatprep.subr.mxu0 0.0
    %1363 = vmatpush2.msra.mxu0 0.0
    %1364 = vmatprep.subr.mxu0 0.0
    %1365 = vmatpush2.msra.mxu0 0.0
    %1366 = vmatprep.mubr.f32.mxu0 0.0
    %1367 = vmatmul.mubr.f32.gmra.mxu0 %v1295
    %v1368 = vpop.f32.mrf.mxu0
    %v1369 = vadd.f32 0.0, %v1368
    %v1370 = vpop.f32.mrf.mxu0
    %1371 = vmatprep.mubr.f32.mxu0 0.0
    %1372 = vmatmul.mubr.f32.gmra.mxu0 %v1297
    %v1373 = vpop.f32.mrf.mxu0
    %v1374 = vadd.f32 0.0, %v1373
    %v1375 = vpop.f32.mrf.mxu0
    %1376 = vdwg.mxu0
    %v1378 = vsel %vm47, %v1287, 0
    %1380 = vmatprep.subr.mxu0 0.0
    %1381 = vmatpush1.msra.mxu0 0.0
    %1382 = vmatprep.subr.mxu0 0.0
    %1383 = vmatpush1.msra.mxu0 0.0
    %1384 = vmatprep.subr.mxu0 0.0
    %1385 = vmatpush1.msra.mxu0 0.0
    %1386 = vmatprep.subr.mxu0 0.0
    %1387 = vmatpush1.msra.mxu0 0.0
    %1388 = vmatprep.subr.mxu0 0.0
    %1389 = vmatpush1.msra.mxu0 0.0
    %1390 = vmatprep.subr.mxu0 0.0
    %1391 = vmatpush1.msra.mxu0 0.0
    %1392 = vmatprep.subr.mxu0 0.0
    %1393 = vmatpush1.msra.mxu0 0.0
    %1394 = vmatprep.subr.mxu0 0.0
    %1395 = vmatpush1.msra.mxu0 0.0
    %1396 = vmatprep.subr.mxu0 0.0
    %1397 = vmatpush1.msra.mxu0 0.0
    %1398 = vmatprep.subr.mxu0 0.0
    %1399 = vmatpush1.msra.mxu0 0.0
    %1400 = vmatprep.subr.mxu0 0.0
    %1401 = vmatpush1.msra.mxu0 0.0
    %1402 = vmatprep.subr.mxu0 0.0
    %1403 = vmatpush1.msra.mxu0 0.0
    %1404 = vmatprep.subr.mxu0 0.0
    %1405 = vmatpush1.msra.mxu0 0.0
    %1406 = vmatprep.subr.mxu0 0.0
    %1407 = vmatpush1.msra.mxu0 0.0
    %1408 = vmatprep.subr.mxu0 0.0
    %1409 = vmatpush1.msra.mxu0 0.0
    %1410 = vmatprep.subr.mxu0 0.0
    %1411 = vmatpush1.msra.mxu0 %v1378
    %1412 = vmatprep.subr.mxu0 0.0
    %1413 = vmatpush2.msra.mxu0 0.0
    %1414 = vmatprep.subr.mxu0 0.0
    %1415 = vmatpush2.msra.mxu0 0.0
    %1416 = vmatprep.subr.mxu0 0.0
    %1417 = vmatpush2.msra.mxu0 0.0
    %1418 = vmatprep.subr.mxu0 0.0
    %1419 = vmatpush2.msra.mxu0 0.0
    %1420 = vmatprep.subr.mxu0 0.0
    %1421 = vmatpush2.msra.mxu0 0.0
    %1422 = vmatprep.subr.mxu0 0.0
    %1423 = vmatpush2.msra.mxu0 0.0
    %1424 = vmatprep.subr.mxu0 0.0
    %1425 = vmatpush2.msra.mxu0 0.0
    %1426 = vmatprep.subr.mxu0 0.0
    %1427 = vmatpush2.msra.mxu0 0.0
    %1428 = vmatprep.subr.mxu0 0.0
    %1429 = vmatpush2.msra.mxu0 0.0
    %1430 = vmatprep.subr.mxu0 0.0
    %1431 = vmatpush2.msra.mxu0 0.0
    %1432 = vmatprep.subr.mxu0 0.0
    %1433 = vmatpush2.msra.mxu0 0.0
    %1434 = vmatprep.subr.mxu0 0.0
    %1435 = vmatpush2.msra.mxu0 0.0
    %1436 = vmatprep.subr.mxu0 0.0
    %1437 = vmatpush2.msra.mxu0 0.0
    %1438 = vmatprep.subr.mxu0 0.0
    %1439 = vmatpush2.msra.mxu0 0.0
    %1440 = vmatprep.subr.mxu0 0.0
    %1441 = vmatpush2.msra.mxu0 0.0
    %1442 = vmatprep.subr.mxu0 0.0
    %1443 = vmatpush2.msra.mxu0 0.0
    %1444 = vmatprep.mubr.f32.mxu0 0.0
    %1445 = vmatmul.mubr.f32.gmra.mxu0 %v276
    %v1446 = vpop.f32.mrf.mxu0
    %v1447 = vadd.f32 %v1369, %v1446
    %v1448 = vpop.f32.mrf.mxu0
    %1449 = vmatprep.mubr.f32.mxu0 0.0
    %1450 = vmatmul.mubr.f32.gmra.mxu0 %v279
    %v1451 = vpop.f32.mrf.mxu0
    %v1452 = vadd.f32 %v1374, %v1451
    %v1453 = vpop.f32.mrf.mxu0
    %1454 = vdwg.mxu0
    %v1455 = vld [vmem:[#allocation2 + $0x27] sm:$0x1]
    %v1456 = vlaneseq
    %v1457 = vshrl.u32 %v1456, 7
    %v1458 = vsub.s32 0, %v1457
    %v1459 = vrot.slane %v1455, %v1458
    %v1460 = vadd.f32 %v1447, %v1459
    %v1461 = vadd.f32 %v1452, %v1459
    %vm1462 = vcmp.gt.f32.partialorder %v1460, 0.0
    %vm1463 = vcmp.gt.f32.partialorder %v1461, 0.0
    %v1464 = vmul.f32 %v1460, 0.01
    %v1465 = vmul.f32 %v1461, 0.01
    %v1466 = vsel %vm1462, %v1460, %v1464
    %v1467 = vsel %vm1463, %v1461, %v1465
    %v1468 = vld [vmem:[#allocation2 + $0x28] sm:$0xff]
    %v1469 = vld [vmem:[#allocation2 + $0x30] sm:$0xff]
    %v1470 = vld [vmem:[#allocation2 + $0x38] sm:$0xff]
    %v1471 = vld [vmem:[#allocation2 + $0x40] sm:$0xff]
    %v1472 = vld [vmem:[#allocation2 + $0x48] sm:$0xff]
    %v1473 = vld [vmem:[#allocation2 + $0x50] sm:$0xff]
    %v1474 = vld [vmem:[#allocation2 + $0x58] sm:$0xff]
    %v1475 = vld [vmem:[#allocation2 + $0x60] sm:$0xff]
    %v1476 = vld [vmem:[#allocation2 + $0x68] sm:$0x1]
    %v1477 = vlaneseq
    %v1478 = vshrl.u32 %v1477, 7
    %v1479 = vsub.s32 0, %v1478
    %v1480 = vrot.slane %v1476, %v1479
    %vm1481 = vcmask 261120
    %v1483 = vsel %vm1481, %v1466, 0
    %v1486 = vsel %vm1481, %v1467, 0
    %1488 = vmatprep.subr.mxu0 0.0
    %1489 = vmatpush1.msra.mxu0 0.0
    %1490 = vmatprep.subr.mxu0 0.0
    %1491 = vmatpush1.msra.mxu0 0.0
    %1492 = vmatprep.subr.mxu0 0.0
    %1493 = vmatpush1.msra.mxu0 0.0
    %1494 = vmatprep.subr.mxu0 0.0
    %1495 = vmatpush1.msra.mxu0 0.0
    %1496 = vmatprep.subr.mxu0 0.0
    %1497 = vmatpush1.msra.mxu0 0.0
    %1498 = vmatprep.subr.mxu0 0.0
    %1499 = vmatpush1.msra.mxu0 0.0
    %1500 = vmatprep.subr.mxu0 0.0
    %1501 = vmatpush1.msra.mxu0 0.0
    %1502 = vmatprep.subr.mxu0 0.0
    %1503 = vmatpush1.msra.mxu0 0.0
    %1504 = vmatprep.subr.mxu0 0.0
    %1505 = vmatpush1.msra.mxu0 0.0
    %1506 = vmatprep.subr.mxu0 0.0
    %1507 = vmatpush1.msra.mxu0 0.0
    %1508 = vmatprep.subr.mxu0 0.0
    %1509 = vmatpush1.msra.mxu0 0.0
    %1510 = vmatprep.subr.mxu0 0.0
    %1511 = vmatpush1.msra.mxu0 0.0
    %1512 = vmatprep.subr.mxu0 0.0
    %1513 = vmatpush1.msra.mxu0 %v1471
    %1514 = vmatprep.subr.mxu0 0.0
    %1515 = vmatpush1.msra.mxu0 %v1470
    %1516 = vmatprep.subr.mxu0 0.0
    %1517 = vmatpush1.msra.mxu0 %v1469
    %1518 = vmatprep.subr.mxu0 0.0
    %1519 = vmatpush1.msra.mxu0 %v1468
    %1520 = vmatprep.subr.mxu0 0.0
    %1521 = vmatpush2.msra.mxu0 0.0
    %1522 = vmatprep.subr.mxu0 0.0
    %1523 = vmatpush2.msra.mxu0 0.0
    %1524 = vmatprep.subr.mxu0 0.0
    %1525 = vmatpush2.msra.mxu0 0.0
    %1526 = vmatprep.subr.mxu0 0.0
    %1527 = vmatpush2.msra.mxu0 0.0
    %1528 = vmatprep.subr.mxu0 0.0
    %1529 = vmatpush2.msra.mxu0 0.0
    %1530 = vmatprep.subr.mxu0 0.0
    %1531 = vmatpush2.msra.mxu0 0.0
    %1532 = vmatprep.subr.mxu0 0.0
    %1533 = vmatpush2.msra.mxu0 0.0
    %1534 = vmatprep.subr.mxu0 0.0
    %1535 = vmatpush2.msra.mxu0 0.0
    %1536 = vmatprep.subr.mxu0 0.0
    %1537 = vmatpush2.msra.mxu0 0.0
    %1538 = vmatprep.subr.mxu0 0.0
    %1539 = vmatpush2.msra.mxu0 0.0
    %1540 = vmatprep.subr.mxu0 0.0
    %1541 = vmatpush2.msra.mxu0 0.0
    %1542 = vmatprep.subr.mxu0 0.0
    %1543 = vmatpush2.msra.mxu0 0.0
    %1544 = vmatprep.subr.mxu0 0.0
    %1545 = vmatpush2.msra.mxu0 0.0
    %1546 = vmatprep.subr.mxu0 0.0
    %1547 = vmatpush2.msra.mxu0 0.0
    %1548 = vmatprep.subr.mxu0 0.0
    %1549 = vmatpush2.msra.mxu0 0.0
    %1550 = vmatprep.subr.mxu0 0.0
    %1551 = vmatpush2.msra.mxu0 0.0
    %1552 = vmatprep.mubr.f32.mxu0 0.0
    %1553 = vmatmul.mubr.f32.gmra.mxu0 %v1483
    %v1554 = vpop.f32.mrf.mxu0
    %v1555 = vadd.f32 0.0, %v1554
    %v1556 = vpop.f32.mrf.mxu0
    %1557 = vmatprep.mubr.f32.mxu0 0.0
    %1558 = vmatmul.mubr.f32.gmra.mxu0 %v1486
    %v1559 = vpop.f32.mrf.mxu0
    %v1560 = vadd.f32 0.0, %v1559
    %v1561 = vpop.f32.mrf.mxu0
    %1562 = vdwg.mxu0
    %v1563 = vlaneseq
    %v1564 = vshrl.u32 %v1563, 7
    %v1565 = vsub.s32 0, %v1564
    %v1566 = vrot.slane %v1555, %v1565
    %v1567 = vlaneseq
    %v1568 = vshrl.u32 %v1567, 7
    %v1569 = vsub.s32 0, %v1568
    %v1570 = vrot.slane %v1560, %v1569
    %v1571 = vmul.f32 %v370, %v1566
    %v1572 = vmul.f32 %v375, %v1570
    %v1573 = vadd.f32 %v1571, %v1480
    %v1574 = vadd.f32 %v1572, %v1480
    %v1575 = vsel %vm1481, 0.0, 0
    %1577 = vmatprep.subr.mxu0 0.0
    %1578 = vmatpush1.msra.mxu0 0.0
    %1579 = vmatprep.subr.mxu0 0.0
    %1580 = vmatpush1.msra.mxu0 0.0
    %1581 = vmatprep.subr.mxu0 0.0
    %1582 = vmatpush1.msra.mxu0 0.0
    %1583 = vmatprep.subr.mxu0 0.0
    %1584 = vmatpush1.msra.mxu0 0.0
    %1585 = vmatprep.subr.mxu0 0.0
    %1586 = vmatpush1.msra.mxu0 0.0
    %1587 = vmatprep.subr.mxu0 0.0
    %1588 = vmatpush1.msra.mxu0 0.0
    %1589 = vmatprep.subr.mxu0 0.0
    %1590 = vmatpush1.msra.mxu0 0.0
    %1591 = vmatprep.subr.mxu0 0.0
    %1592 = vmatpush1.msra.mxu0 0.0
    %1593 = vmatprep.subr.mxu0 0.0
    %1594 = vmatpush1.msra.mxu0 0.0
    %1595 = vmatprep.subr.mxu0 0.0
    %1596 = vmatpush1.msra.mxu0 0.0
    %1597 = vmatprep.subr.mxu0 0.0
    %1598 = vmatpush1.msra.mxu0 0.0
    %1599 = vmatprep.subr.mxu0 0.0
    %1600 = vmatpush1.msra.mxu0 0.0
    %1601 = vmatprep.subr.mxu0 0.0
    %1602 = vmatpush1.msra.mxu0 %v1475
    %1603 = vmatprep.subr.mxu0 0.0
    %1604 = vmatpush1.msra.mxu0 %v1474
    %1605 = vmatprep.subr.mxu0 0.0
    %1606 = vmatpush1.msra.mxu0 %v1473
    %1607 = vmatprep.subr.mxu0 0.0
    %1608 = vmatpush1.msra.mxu0 %v1472
    %1609 = vmatprep.subr.mxu0 0.0
    %1610 = vmatpush2.msra.mxu0 0.0
    %1611 = vmatprep.subr.mxu0 0.0
    %1612 = vmatpush2.msra.mxu0 0.0
    %1613 = vmatprep.subr.mxu0 0.0
    %1614 = vmatpush2.msra.mxu0 0.0
    %1615 = vmatprep.subr.mxu0 0.0
    %1616 = vmatpush2.msra.mxu0 0.0
    %1617 = vmatprep.subr.mxu0 0.0
    %1618 = vmatpush2.msra.mxu0 0.0
    %1619 = vmatprep.subr.mxu0 0.0
    %1620 = vmatpush2.msra.mxu0 0.0
    %1621 = vmatprep.subr.mxu0 0.0
    %1622 = vmatpush2.msra.mxu0 0.0
    %1623 = vmatprep.subr.mxu0 0.0
    %1624 = vmatpush2.msra.mxu0 0.0
    %1625 = vmatprep.subr.mxu0 0.0
    %1626 = vmatpush2.msra.mxu0 0.0
    %1627 = vmatprep.subr.mxu0 0.0
    %1628 = vmatpush2.msra.mxu0 0.0
    %1629 = vmatprep.subr.mxu0 0.0
    %1630 = vmatpush2.msra.mxu0 0.0
    %1631 = vmatprep.subr.mxu0 0.0
    %1632 = vmatpush2.msra.mxu0 0.0
    %1633 = vmatprep.subr.mxu0 0.0
    %1634 = vmatpush2.msra.mxu0 0.0
    %1635 = vmatprep.subr.mxu0 0.0
    %1636 = vmatpush2.msra.mxu0 0.0
    %1637 = vmatprep.subr.mxu0 0.0
    %1638 = vmatpush2.msra.mxu0 0.0
    %1639 = vmatprep.subr.mxu0 0.0
    %1640 = vmatpush2.msra.mxu0 0.0
    %1641 = vmatprep.mubr.f32.mxu0 0.0
    %1642 = vmatmul.mubr.f32.gmra.mxu0 %v1575
    %v1643 = vpop.f32.mrf.mxu0
    %v1644 = vadd.f32 0.0, %v1643
    %v1645 = vpop.f32.mrf.mxu0
    %1646 = vmatprep.mubr.f32.mxu0 0.0
    %1647 = vmatmul.mubr.f32.gmra.mxu0 %v1575
    %v1648 = vpop.f32.mrf.mxu0
    %v1649 = vadd.f32 0.0, %v1648
    %v1650 = vpop.f32.mrf.mxu0
    %1651 = vdwg.mxu0
    %v1652 = vadd.f32 %v1573, %v1644
    %v1653 = vadd.f32 %v1574, %v1649
    %v1654 = vxor.u32 %v1652, 2147483648
    %v1655 = vxor.u32 %v1653, 2147483648
    %v1656 = vmul.f32 %v1654, 1.442695
    %v1657 = vpow.pop %v1656
    %v1658 = vmul.f32 %v1655, 1.442695
    %v1659 = vpow.pop %v1658
    %v1660 = vadd.f32 %v1657, 1.0
    %v1661 = vadd.f32 %v1659, 1.0
    %v1662 = vrcp.pop %v1660
    %v1663 = vmul.f32 1.0, %v1662
    %v1664 = vrcp.pop %v1661
    %v1665 = vmul.f32 1.0, %v1664
    %v1666 = vtanh.pop %v1652
    %v1667 = vtanh.pop %v1653
    %v1668 = vmul.f32 %v1663, 0.0
    %v1669 = vmul.f32 %v1665, 0.0
    %1672 = vrot.lane.b32.xlu0 %v1666, 32
    %v1673 = vpop.permute.xlu0 %1672
    %1674 = vrot.lane.b32.xlu0 %v1667, 32
    %v1675 = vpop.permute.xlu0 %1674
    %v1678 = vmul.f32 %v1663, %v1673
    %v1679 = vmul.f32 %v1665, %v1675
    %1682 = vrot.lane.b32.xlu0 %v1678, 32
    %v1683 = vpop.permute.xlu0 %1682
    %1684 = vrot.lane.b32.xlu0 %v1679, 32
    %v1685 = vpop.permute.xlu0 %1684
    %v1688 = vadd.f32 %v1668, %v1683
    %v1689 = vadd.f32 %v1669, %v1685
    %v1690 = vtanh.pop %v1688
    %v1691 = vtanh.pop %v1689
    %1694 = vrot.lane.b32.xlu0 %v1690, 32
    %v1695 = vpop.permute.xlu0 %1694
    %1696 = vrot.lane.b32.xlu0 %v1691, 32
    %v1697 = vpop.permute.xlu0 %1696
    %v1700 = vmul.f32 %v1663, %v1695
    %v1701 = vmul.f32 %v1665, %v1697
    %v1702 = vlaneseq
    %v1703 = vshrl.u32 %v1702, 7
    %v1704 = vsub.s32 1, %v1703
    %v1705 = vrot.slane %v1555, %v1704
    %v1706 = vlaneseq
    %v1707 = vshrl.u32 %v1706, 7
    %v1708 = vsub.s32 1, %v1707
    %v1709 = vrot.slane %v1560, %v1708
    %v1710 = vmul.f32 %v522, %v1705
    %v1711 = vmul.f32 %v526, %v1709
    %v1712 = vadd.f32 %v1710, %v1480
    %v1713 = vadd.f32 %v1711, %v1480
    %1716 = vrot.lane.b32.xlu0 %v1700, 64
    %v1717 = vpop.permute.xlu0 %1716
    %1718 = vrot.lane.b32.xlu0 %v1701, 64
    %v1719 = vpop.permute.xlu0 %1718
    %v1720 = vsel %vm1481, %v1717, 0
    %v1722 = vsel %vm1481, %v1719, 0
    %1724 = vmatprep.subr.mxu0 0.0
    %1725 = vmatpush1.msra.mxu0 0.0
    %1726 = vmatprep.subr.mxu0 0.0
    %1727 = vmatpush1.msra.mxu0 0.0
    %1728 = vmatprep.subr.mxu0 0.0
    %1729 = vmatpush1.msra.mxu0 0.0
    %1730 = vmatprep.subr.mxu0 0.0
    %1731 = vmatpush1.msra.mxu0 0.0
    %1732 = vmatprep.subr.mxu0 0.0
    %1733 = vmatpush1.msra.mxu0 0.0
    %1734 = vmatprep.subr.mxu0 0.0
    %1735 = vmatpush1.msra.mxu0 0.0
    %1736 = vmatprep.subr.mxu0 0.0
    %1737 = vmatpush1.msra.mxu0 0.0
    %1738 = vmatprep.subr.mxu0 0.0
    %1739 = vmatpush1.msra.mxu0 0.0
    %1740 = vmatprep.subr.mxu0 0.0
    %1741 = vmatpush1.msra.mxu0 0.0
    %1742 = vmatprep.subr.mxu0 0.0
    %1743 = vmatpush1.msra.mxu0 0.0
    %1744 = vmatprep.subr.mxu0 0.0
    %1745 = vmatpush1.msra.mxu0 0.0
    %1746 = vmatprep.subr.mxu0 0.0
    %1747 = vmatpush1.msra.mxu0 0.0
    %1748 = vmatprep.subr.mxu0 0.0
    %1749 = vmatpush1.msra.mxu0 %v1475
    %1750 = vmatprep.subr.mxu0 0.0
    %1751 = vmatpush1.msra.mxu0 %v1474
    %1752 = vmatprep.subr.mxu0 0.0
    %1753 = vmatpush1.msra.mxu0 %v1473
    %1754 = vmatprep.subr.mxu0 0.0
    %1755 = vmatpush1.msra.mxu0 %v1472
    %1756 = vmatprep.subr.mxu0 0.0
    %1757 = vmatpush2.msra.mxu0 0.0
    %1758 = vmatprep.subr.mxu0 0.0
    %1759 = vmatpush2.msra.mxu0 0.0
    %1760 = vmatprep.subr.mxu0 0.0
    %1761 = vmatpush2.msra.mxu0 0.0
    %1762 = vmatprep.subr.mxu0 0.0
    %1763 = vmatpush2.msra.mxu0 0.0
    %1764 = vmatprep.subr.mxu0 0.0
    %1765 = vmatpush2.msra.mxu0 0.0
    %1766 = vmatprep.subr.mxu0 0.0
    %1767 = vmatpush2.msra.mxu0 0.0
    %1768 = vmatprep.subr.mxu0 0.0
    %1769 = vmatpush2.msra.mxu0 0.0
    %1770 = vmatprep.subr.mxu0 0.0
    %1771 = vmatpush2.msra.mxu0 0.0
    %1772 = vmatprep.subr.mxu0 0.0
    %1773 = vmatpush2.msra.mxu0 0.0
    %1774 = vmatprep.subr.mxu0 0.0
    %1775 = vmatpush2.msra.mxu0 0.0
    %1776 = vmatprep.subr.mxu0 0.0
    %1777 = vmatpush2.msra.mxu0 0.0
    %1778 = vmatprep.subr.mxu0 0.0
    %1779 = vmatpush2.msra.mxu0 0.0
    %1780 = vmatprep.subr.mxu0 0.0
    %1781 = vmatpush2.msra.mxu0 0.0
    %1782 = vmatprep.subr.mxu0 0.0
    %1783 = vmatpush2.msra.mxu0 0.0
    %1784 = vmatprep.subr.mxu0 0.0
    %1785 = vmatpush2.msra.mxu0 0.0
    %1786 = vmatprep.subr.mxu0 0.0
    %1787 = vmatpush2.msra.mxu0 0.0
    %1788 = vmatprep.mubr.f32.mxu0 0.0
    %1789 = vmatmul.mubr.f32.gmra.mxu0 %v1720
    %v1790 = vpop.f32.mrf.mxu0
    %v1791 = vadd.f32 0.0, %v1790
    %v1792 = vpop.f32.mrf.mxu0
    %1793 = vmatprep.mubr.f32.mxu0 0.0
    %1794 = vmatmul.mubr.f32.gmra.mxu0 %v1722
    %v1795 = vpop.f32.mrf.mxu0
    %v1796 = vadd.f32 0.0, %v1795
    %v1797 = vpop.f32.mrf.mxu0
    %1798 = vdwg.mxu0
    %v1799 = vadd.f32 %v1712, %v1791
    %v1800 = vadd.f32 %v1713, %v1796
    %v1801 = vxor.u32 %v1799, 2147483648
    %v1802 = vxor.u32 %v1800, 2147483648
    %v1803 = vmul.f32 %v1801, 1.442695
    %v1804 = vpow.pop %v1803
    %v1805 = vmul.f32 %v1802, 1.442695
    %v1806 = vpow.pop %v1805
    %v1807 = vadd.f32 %v1804, 1.0
    %v1808 = vadd.f32 %v1806, 1.0
    %v1809 = vrcp.pop %v1807
    %v1810 = vmul.f32 1.0, %v1809
    %v1811 = vrcp.pop %v1808
    %v1812 = vmul.f32 1.0, %v1811
    %v1813 = vtanh.pop %v1799
    %v1814 = vtanh.pop %v1800
    %v1815 = vmul.f32 %v1810, %v1688
    %v1816 = vmul.f32 %v1812, %v1689
    %1819 = vrot.lane.b32.xlu0 %v1813, 32
    %v1820 = vpop.permute.xlu0 %1819
    %1821 = vrot.lane.b32.xlu0 %v1814, 32
    %v1822 = vpop.permute.xlu0 %1821
    %v1825 = vmul.f32 %v1810, %v1820
    %v1826 = vmul.f32 %v1812, %v1822
    %1829 = vrot.lane.b32.xlu0 %v1825, 32
    %v1830 = vpop.permute.xlu0 %1829
    %1831 = vrot.lane.b32.xlu0 %v1826, 32
    %v1832 = vpop.permute.xlu0 %1831
    %v1835 = vadd.f32 %v1815, %v1830
    %v1836 = vadd.f32 %v1816, %v1832
    %v1837 = vtanh.pop %v1835
    %v1838 = vtanh.pop %v1836
    %1841 = vrot.lane.b32.xlu0 %v1837, 32
    %v1842 = vpop.permute.xlu0 %1841
    %1843 = vrot.lane.b32.xlu0 %v1838, 32
    %v1844 = vpop.permute.xlu0 %1843
    %v1847 = vmul.f32 %v1810, %v1842
    %v1848 = vmul.f32 %v1812, %v1844
    %v1849 = vlaneseq
    %v1850 = vshrl.u32 %v1849, 7
    %v1851 = vsub.s32 2, %v1850
    %v1852 = vrot.slane %v1555, %v1851
    %v1853 = vlaneseq
    %v1854 = vshrl.u32 %v1853, 7
    %v1855 = vsub.s32 2, %v1854
    %v1856 = vrot.slane %v1560, %v1855
    %v1857 = vmul.f32 %v677, %v1852
    %v1858 = vmul.f32 %v681, %v1856
    %v1859 = vadd.f32 %v1857, %v1480
    %v1860 = vadd.f32 %v1858, %v1480
    %1863 = vrot.lane.b32.xlu0 %v1847, 64
    %v1864 = vpop.permute.xlu0 %1863
    %1865 = vrot.lane.b32.xlu0 %v1848, 64
    %v1866 = vpop.permute.xlu0 %1865
    %v1867 = vsel %vm1481, %v1864, 0
    %v1869 = vsel %vm1481, %v1866, 0
    %1871 = vmatprep.subr.mxu0 0.0
    %1872 = vmatpush1.msra.mxu0 0.0
    %1873 = vmatprep.subr.mxu0 0.0
    %1874 = vmatpush1.msra.mxu0 0.0
    %1875 = vmatprep.subr.mxu0 0.0
    %1876 = vmatpush1.msra.mxu0 0.0
    %1877 = vmatprep.subr.mxu0 0.0
    %1878 = vmatpush1.msra.mxu0 0.0
    %1879 = vmatprep.subr.mxu0 0.0
    %1880 = vmatpush1.msra.mxu0 0.0
    %1881 = vmatprep.subr.mxu0 0.0
    %1882 = vmatpush1.msra.mxu0 0.0
    %1883 = vmatprep.subr.mxu0 0.0
    %1884 = vmatpush1.msra.mxu0 0.0
    %1885 = vmatprep.subr.mxu0 0.0
    %1886 = vmatpush1.msra.mxu0 0.0
    %1887 = vmatprep.subr.mxu0 0.0
    %1888 = vmatpush1.msra.mxu0 0.0
    %1889 = vmatprep.subr.mxu0 0.0
    %1890 = vmatpush1.msra.mxu0 0.0
    %1891 = vmatprep.subr.mxu0 0.0
    %1892 = vmatpush1.msra.mxu0 0.0
    %1893 = vmatprep.subr.mxu0 0.0
    %1894 = vmatpush1.msra.mxu0 0.0
    %1895 = vmatprep.subr.mxu0 0.0
    %1896 = vmatpush1.msra.mxu0 %v1475
    %1897 = vmatprep.subr.mxu0 0.0
    %1898 = vmatpush1.msra.mxu0 %v1474
    %1899 = vmatprep.subr.mxu0 0.0
    %1900 = vmatpush1.msra.mxu0 %v1473
    %1901 = vmatprep.subr.mxu0 0.0
    %1902 = vmatpush1.msra.mxu0 %v1472
    %1903 = vmatprep.subr.mxu0 0.0
    %1904 = vmatpush2.msra.mxu0 0.0
    %1905 = vmatprep.subr.mxu0 0.0
    %1906 = vmatpush2.msra.mxu0 0.0
    %1907 = vmatprep.subr.mxu0 0.0
    %1908 = vmatpush2.msra.mxu0 0.0
    %1909 = vmatprep.subr.mxu0 0.0
    %1910 = vmatpush2.msra.mxu0 0.0
    %1911 = vmatprep.subr.mxu0 0.0
    %1912 = vmatpush2.msra.mxu0 0.0
    %1913 = vmatprep.subr.mxu0 0.0
    %1914 = vmatpush2.msra.mxu0 0.0
    %1915 = vmatprep.subr.mxu0 0.0
    %1916 = vmatpush2.msra.mxu0 0.0
    %1917 = vmatprep.subr.mxu0 0.0
    %1918 = vmatpush2.msra.mxu0 0.0
    %1919 = vmatprep.subr.mxu0 0.0
    %1920 = vmatpush2.msra.mxu0 0.0
    %1921 = vmatprep.subr.mxu0 0.0
    %1922 = vmatpush2.msra.mxu0 0.0
    %1923 = vmatprep.subr.mxu0 0.0
    %1924 = vmatpush2.msra.mxu0 0.0
    %1925 = vmatprep.subr.mxu0 0.0
    %1926 = vmatpush2.msra.mxu0 0.0
    %1927 = vmatprep.subr.mxu0 0.0
    %1928 = vmatpush2.msra.mxu0 0.0
    %1929 = vmatprep.subr.mxu0 0.0
    %1930 = vmatpush2.msra.mxu0 0.0
    %1931 = vmatprep.subr.mxu0 0.0
    %1932 = vmatpush2.msra.mxu0 0.0
    %1933 = vmatprep.subr.mxu0 0.0
    %1934 = vmatpush2.msra.mxu0 0.0
    %1935 = vmatprep.mubr.f32.mxu0 0.0
    %1936 = vmatmul.mubr.f32.gmra.mxu0 %v1867
    %v1937 = vpop.f32.mrf.mxu0
    %v1938 = vadd.f32 0.0, %v1937
    %v1939 = vpop.f32.mrf.mxu0
    %1940 = vmatprep.mubr.f32.mxu0 0.0
    %1941 = vmatmul.mubr.f32.gmra.mxu0 %v1869
    %v1942 = vpop.f32.mrf.mxu0
    %v1943 = vadd.f32 0.0, %v1942
    %v1944 = vpop.f32.mrf.mxu0
    %1945 = vdwg.mxu0
    %v1946 = vadd.f32 %v1859, %v1938
    %v1947 = vadd.f32 %v1860, %v1943
    %v1948 = vxor.u32 %v1946, 2147483648
    %v1949 = vxor.u32 %v1947, 2147483648
    %v1950 = vmul.f32 %v1948, 1.442695
    %v1951 = vpow.pop %v1950
    %v1952 = vmul.f32 %v1949, 1.442695
    %v1953 = vpow.pop %v1952
    %v1954 = vadd.f32 %v1951, 1.0
    %v1955 = vadd.f32 %v1953, 1.0
    %v1956 = vrcp.pop %v1954
    %v1957 = vmul.f32 1.0, %v1956
    %v1958 = vrcp.pop %v1955
    %v1959 = vmul.f32 1.0, %v1958
    %v1960 = vtanh.pop %v1946
    %v1961 = vtanh.pop %v1947
    %v1962 = vmul.f32 %v1957, %v1835
    %v1963 = vmul.f32 %v1959, %v1836
    %1966 = vrot.lane.b32.xlu0 %v1960, 32
    %v1967 = vpop.permute.xlu0 %1966
    %1968 = vrot.lane.b32.xlu0 %v1961, 32
    %v1969 = vpop.permute.xlu0 %1968
    %v1972 = vmul.f32 %v1957, %v1967
    %v1973 = vmul.f32 %v1959, %v1969
    %1976 = vrot.lane.b32.xlu0 %v1972, 32
    %v1977 = vpop.permute.xlu0 %1976
    %1978 = vrot.lane.b32.xlu0 %v1973, 32
    %v1979 = vpop.permute.xlu0 %1978
    %v1982 = vadd.f32 %v1962, %v1977
    %v1983 = vadd.f32 %v1963, %v1979
    %v1984 = vtanh.pop %v1982
    %v1985 = vtanh.pop %v1983
    %1988 = vrot.lane.b32.xlu0 %v1984, 32
    %v1989 = vpop.permute.xlu0 %1988
    %1990 = vrot.lane.b32.xlu0 %v1985, 32
    %v1991 = vpop.permute.xlu0 %1990
    %v1994 = vmul.f32 %v1957, %v1989
    %v1995 = vmul.f32 %v1959, %v1991
    %v1996 = vlaneseq
    %v1997 = vshrl.u32 %v1996, 7
    %v1998 = vsub.s32 3, %v1997
    %v1999 = vrot.slane %v1555, %v1998
    %v2000 = vlaneseq
    %v2001 = vshrl.u32 %v2000, 7
    %v2002 = vsub.s32 3, %v2001
    %v2003 = vrot.slane %v1560, %v2002
    %v2004 = vmul.f32 %v832, %v1999
    %v2005 = vmul.f32 %v836, %v2003
    %v2006 = vadd.f32 %v2004, %v1480
    %v2007 = vadd.f32 %v2005, %v1480
    %2010 = vrot.lane.b32.xlu0 %v1994, 64
    %v2011 = vpop.permute.xlu0 %2010
    %2012 = vrot.lane.b32.xlu0 %v1995, 64
    %v2013 = vpop.permute.xlu0 %2012
    %v2014 = vsel %vm1481, %v2011, 0
    %v2016 = vsel %vm1481, %v2013, 0
    %2018 = vmatprep.subr.mxu0 0.0
    %2019 = vmatpush1.msra.mxu0 0.0
    %2020 = vmatprep.subr.mxu0 0.0
    %2021 = vmatpush1.msra.mxu0 0.0
    %2022 = vmatprep.subr.mxu0 0.0
    %2023 = vmatpush1.msra.mxu0 0.0
    %2024 = vmatprep.subr.mxu0 0.0
    %2025 = vmatpush1.msra.mxu0 0.0
    %2026 = vmatprep.subr.mxu0 0.0
    %2027 = vmatpush1.msra.mxu0 0.0
    %2028 = vmatprep.subr.mxu0 0.0
    %2029 = vmatpush1.msra.mxu0 0.0
    %2030 = vmatprep.subr.mxu0 0.0
    %2031 = vmatpush1.msra.mxu0 0.0
    %2032 = vmatprep.subr.mxu0 0.0
    %2033 = vmatpush1.msra.mxu0 0.0
    %2034 = vmatprep.subr.mxu0 0.0
    %2035 = vmatpush1.msra.mxu0 0.0
    %2036 = vmatprep.subr.mxu0 0.0
    %2037 = vmatpush1.msra.mxu0 0.0
    %2038 = vmatprep.subr.mxu0 0.0
    %2039 = vmatpush1.msra.mxu0 0.0
    %2040 = vmatprep.subr.mxu0 0.0
    %2041 = vmatpush1.msra.mxu0 0.0
    %2042 = vmatprep.subr.mxu0 0.0
    %2043 = vmatpush1.msra.mxu0 %v1475
    %2044 = vmatprep.subr.mxu0 0.0
    %2045 = vmatpush1.msra.mxu0 %v1474
    %2046 = vmatprep.subr.mxu0 0.0
    %2047 = vmatpush1.msra.mxu0 %v1473
    %2048 = vmatprep.subr.mxu0 0.0
    %2049 = vmatpush1.msra.mxu0 %v1472
    %2050 = vmatprep.subr.mxu0 0.0
    %2051 = vmatpush2.msra.mxu0 0.0
    %2052 = vmatprep.subr.mxu0 0.0
    %2053 = vmatpush2.msra.mxu0 0.0
    %2054 = vmatprep.subr.mxu0 0.0
    %2055 = vmatpush2.msra.mxu0 0.0
    %2056 = vmatprep.subr.mxu0 0.0
    %2057 = vmatpush2.msra.mxu0 0.0
    %2058 = vmatprep.subr.mxu0 0.0
    %2059 = vmatpush2.msra.mxu0 0.0
    %2060 = vmatprep.subr.mxu0 0.0
    %2061 = vmatpush2.msra.mxu0 0.0
    %2062 = vmatprep.subr.mxu0 0.0
    %2063 = vmatpush2.msra.mxu0 0.0
    %2064 = vmatprep.subr.mxu0 0.0
    %2065 = vmatpush2.msra.mxu0 0.0
    %2066 = vmatprep.subr.mxu0 0.0
    %2067 = vmatpush2.msra.mxu0 0.0
    %2068 = vmatprep.subr.mxu0 0.0
    %2069 = vmatpush2.msra.mxu0 0.0
    %2070 = vmatprep.subr.mxu0 0.0
    %2071 = vmatpush2.msra.mxu0 0.0
    %2072 = vmatprep.subr.mxu0 0.0
    %2073 = vmatpush2.msra.mxu0 0.0
    %2074 = vmatprep.subr.mxu0 0.0
    %2075 = vmatpush2.msra.mxu0 0.0
    %2076 = vmatprep.subr.mxu0 0.0
    %2077 = vmatpush2.msra.mxu0 0.0
    %2078 = vmatprep.subr.mxu0 0.0
    %2079 = vmatpush2.msra.mxu0 0.0
    %2080 = vmatprep.subr.mxu0 0.0
    %2081 = vmatpush2.msra.mxu0 0.0
    %2082 = vmatprep.mubr.f32.mxu0 0.0
    %2083 = vmatmul.mubr.f32.gmra.mxu0 %v2014
    %v2084 = vpop.f32.mrf.mxu0
    %v2085 = vadd.f32 0.0, %v2084
    %v2086 = vpop.f32.mrf.mxu0
    %2087 = vmatprep.mubr.f32.mxu0 0.0
    %2088 = vmatmul.mubr.f32.gmra.mxu0 %v2016
    %v2089 = vpop.f32.mrf.mxu0
    %v2090 = vadd.f32 0.0, %v2089
    %v2091 = vpop.f32.mrf.mxu0
    %2092 = vdwg.mxu0
    %v2093 = vadd.f32 %v2006, %v2085
    %v2094 = vadd.f32 %v2007, %v2090
    %v2095 = vxor.u32 %v2093, 2147483648
    %v2096 = vxor.u32 %v2094, 2147483648
    %v2097 = vmul.f32 %v2095, 1.442695
    %v2098 = vpow.pop %v2097
    %v2099 = vmul.f32 %v2096, 1.442695
    %v2100 = vpow.pop %v2099
    %v2101 = vadd.f32 %v2098, 1.0
    %v2102 = vadd.f32 %v2100, 1.0
    %v2103 = vrcp.pop %v2101
    %v2104 = vmul.f32 1.0, %v2103
    %v2105 = vrcp.pop %v2102
    %v2106 = vmul.f32 1.0, %v2105
    %v2107 = vtanh.pop %v2093
    %v2108 = vtanh.pop %v2094
    %v2109 = vmul.f32 %v2104, %v1982
    %v2110 = vmul.f32 %v2106, %v1983
    %2113 = vrot.lane.b32.xlu0 %v2107, 32
    %v2114 = vpop.permute.xlu0 %2113
    %2115 = vrot.lane.b32.xlu0 %v2108, 32
    %v2116 = vpop.permute.xlu0 %2115
    %v2119 = vmul.f32 %v2104, %v2114
    %v2120 = vmul.f32 %v2106, %v2116
    %2123 = vrot.lane.b32.xlu0 %v2119, 32
    %v2124 = vpop.permute.xlu0 %2123
    %2125 = vrot.lane.b32.xlu0 %v2120, 32
    %v2126 = vpop.permute.xlu0 %2125
    %v2129 = vadd.f32 %v2109, %v2124
    %v2130 = vadd.f32 %v2110, %v2126
    %v2131 = vtanh.pop %v2129
    %v2132 = vtanh.pop %v2130
    %2135 = vrot.lane.b32.xlu0 %v2131, 32
    %v2136 = vpop.permute.xlu0 %2135
    %2137 = vrot.lane.b32.xlu0 %v2132, 32
    %v2138 = vpop.permute.xlu0 %2137
    %v2141 = vmul.f32 %v2104, %v2136
    %v2142 = vmul.f32 %v2106, %v2138
    %v2143 = vlaneseq
    %v2144 = vshrl.u32 %v2143, 7
    %v2145 = vsub.s32 4, %v2144
    %v2146 = vrot.slane %v1555, %v2145
    %v2147 = vlaneseq
    %v2148 = vshrl.u32 %v2147, 7
    %v2149 = vsub.s32 4, %v2148
    %v2150 = vrot.slane %v1560, %v2149
    %v2151 = vmul.f32 %v987, %v2146
    %v2152 = vmul.f32 %v991, %v2150
    %v2153 = vadd.f32 %v2151, %v1480
    %v2154 = vadd.f32 %v2152, %v1480
    %2157 = vrot.lane.b32.xlu0 %v2141, 64
    %v2158 = vpop.permute.xlu0 %2157
    %2159 = vrot.lane.b32.xlu0 %v2142, 64
    %v2160 = vpop.permute.xlu0 %2159
    %v2161 = vsel %vm1481, %v2158, 0
    %v2163 = vsel %vm1481, %v2160, 0
    %2165 = vmatprep.subr.mxu0 0.0
    %2166 = vmatpush1.msra.mxu0 0.0
    %2167 = vmatprep.subr.mxu0 0.0
    %2168 = vmatpush1.msra.mxu0 0.0
    %2169 = vmatprep.subr.mxu0 0.0
    %2170 = vmatpush1.msra.mxu0 0.0
    %2171 = vmatprep.subr.mxu0 0.0
    %2172 = vmatpush1.msra.mxu0 0.0
    %2173 = vmatprep.subr.mxu0 0.0
    %2174 = vmatpush1.msra.mxu0 0.0
    %2175 = vmatprep.subr.mxu0 0.0
    %2176 = vmatpush1.msra.mxu0 0.0
    %2177 = vmatprep.subr.mxu0 0.0
    %2178 = vmatpush1.msra.mxu0 0.0
    %2179 = vmatprep.subr.mxu0 0.0
    %2180 = vmatpush1.msra.mxu0 0.0
    %2181 = vmatprep.subr.mxu0 0.0
    %2182 = vmatpush1.msra.mxu0 0.0
    %2183 = vmatprep.subr.mxu0 0.0
    %2184 = vmatpush1.msra.mxu0 0.0
    %2185 = vmatprep.subr.mxu0 0.0
    %2186 = vmatpush1.msra.mxu0 0.0
    %2187 = vmatprep.subr.mxu0 0.0
    %2188 = vmatpush1.msra.mxu0 0.0
    %2189 = vmatprep.subr.mxu0 0.0
    %2190 = vmatpush1.msra.mxu0 %v1475
    %2191 = vmatprep.subr.mxu0 0.0
    %2192 = vmatpush1.msra.mxu0 %v1474
    %2193 = vmatprep.subr.mxu0 0.0
    %2194 = vmatpush1.msra.mxu0 %v1473
    %2195 = vmatprep.subr.mxu0 0.0
    %2196 = vmatpush1.msra.mxu0 %v1472
    %2197 = vmatprep.subr.mxu0 0.0
    %2198 = vmatpush2.msra.mxu0 0.0
    %2199 = vmatprep.subr.mxu0 0.0
    %2200 = vmatpush2.msra.mxu0 0.0
    %2201 = vmatprep.subr.mxu0 0.0
    %2202 = vmatpush2.msra.mxu0 0.0
    %2203 = vmatprep.subr.mxu0 0.0
    %2204 = vmatpush2.msra.mxu0 0.0
    %2205 = vmatprep.subr.mxu0 0.0
    %2206 = vmatpush2.msra.mxu0 0.0
    %2207 = vmatprep.subr.mxu0 0.0
    %2208 = vmatpush2.msra.mxu0 0.0
    %2209 = vmatprep.subr.mxu0 0.0
    %2210 = vmatpush2.msra.mxu0 0.0
    %2211 = vmatprep.subr.mxu0 0.0
    %2212 = vmatpush2.msra.mxu0 0.0
    %2213 = vmatprep.subr.mxu0 0.0
    %2214 = vmatpush2.msra.mxu0 0.0
    %2215 = vmatprep.subr.mxu0 0.0
    %2216 = vmatpush2.msra.mxu0 0.0
    %2217 = vmatprep.subr.mxu0 0.0
    %2218 = vmatpush2.msra.mxu0 0.0
    %2219 = vmatprep.subr.mxu0 0.0
    %2220 = vmatpush2.msra.mxu0 0.0
    %2221 = vmatprep.subr.mxu0 0.0
    %2222 = vmatpush2.msra.mxu0 0.0
    %2223 = vmatprep.subr.mxu0 0.0
    %2224 = vmatpush2.msra.mxu0 0.0
    %2225 = vmatprep.subr.mxu0 0.0
    %2226 = vmatpush2.msra.mxu0 0.0
    %2227 = vmatprep.subr.mxu0 0.0
    %2228 = vmatpush2.msra.mxu0 0.0
    %2229 = vmatprep.mubr.f32.mxu0 0.0
    %2230 = vmatmul.mubr.f32.gmra.mxu0 %v2161
    %v2231 = vpop.f32.mrf.mxu0
    %v2232 = vadd.f32 0.0, %v2231
    %v2233 = vpop.f32.mrf.mxu0
    %2234 = vmatprep.mubr.f32.mxu0 0.0
    %2235 = vmatmul.mubr.f32.gmra.mxu0 %v2163
    %v2236 = vpop.f32.mrf.mxu0
    %v2237 = vadd.f32 0.0, %v2236
    %v2238 = vpop.f32.mrf.mxu0
    %2239 = vdwg.mxu0
    %v2240 = vadd.f32 %v2153, %v2232
    %v2241 = vadd.f32 %v2154, %v2237
    %v2242 = vxor.u32 %v2240, 2147483648
    %v2243 = vxor.u32 %v2241, 2147483648
    %v2244 = vmul.f32 %v2242, 1.442695
    %v2245 = vpow.pop %v2244
    %v2246 = vmul.f32 %v2243, 1.442695
    %v2247 = vpow.pop %v2246
    %v2248 = vadd.f32 %v2245, 1.0
    %v2249 = vadd.f32 %v2247, 1.0
    %v2250 = vrcp.pop %v2248
    %v2251 = vmul.f32 1.0, %v2250
    %v2252 = vrcp.pop %v2249
    %v2253 = vmul.f32 1.0, %v2252
    %v2254 = vtanh.pop %v2240
    %v2255 = vtanh.pop %v2241
    %v2256 = vmul.f32 %v2251, %v2129
    %v2257 = vmul.f32 %v2253, %v2130
    %2260 = vrot.lane.b32.xlu0 %v2254, 32
    %v2261 = vpop.permute.xlu0 %2260
    %2262 = vrot.lane.b32.xlu0 %v2255, 32
    %v2263 = vpop.permute.xlu0 %2262
    %v2266 = vmul.f32 %v2251, %v2261
    %v2267 = vmul.f32 %v2253, %v2263
    %2270 = vrot.lane.b32.xlu0 %v2266, 32
    %v2271 = vpop.permute.xlu0 %2270
    %2272 = vrot.lane.b32.xlu0 %v2267, 32
    %v2273 = vpop.permute.xlu0 %2272
    %v2276 = vadd.f32 %v2256, %v2271
    %v2277 = vadd.f32 %v2257, %v2273
    %v2278 = vtanh.pop %v2276
    %v2279 = vtanh.pop %v2277
    %2282 = vrot.lane.b32.xlu0 %v2278, 32
    %v2283 = vpop.permute.xlu0 %2282
    %2284 = vrot.lane.b32.xlu0 %v2279, 32
    %v2285 = vpop.permute.xlu0 %2284
    %v2288 = vmul.f32 %v2251, %v2283
    %v2289 = vmul.f32 %v2253, %v2285
    %v2290 = vlaneseq
    %v2291 = vshrl.u32 %v2290, 7
    %v2292 = vsub.s32 5, %v2291
    %v2293 = vrot.slane %v1555, %v2292
    %v2294 = vlaneseq
    %v2295 = vshrl.u32 %v2294, 7
    %v2296 = vsub.s32 5, %v2295
    %v2297 = vrot.slane %v1560, %v2296
    %v2298 = vmul.f32 %v1142, %v2293
    %v2299 = vmul.f32 %v1146, %v2297
    %v2300 = vadd.f32 %v2298, %v1480
    %v2301 = vadd.f32 %v2299, %v1480
    %2304 = vrot.lane.b32.xlu0 %v2288, 64
    %v2305 = vpop.permute.xlu0 %2304
    %2306 = vrot.lane.b32.xlu0 %v2289, 64
    %v2307 = vpop.permute.xlu0 %2306
    %v2308 = vsel %vm1481, %v2305, 0
    %v2310 = vsel %vm1481, %v2307, 0
    %2312 = vmatprep.subr.mxu0 0.0
    %2313 = vmatpush1.msra.mxu0 0.0
    %2314 = vmatprep.subr.mxu0 0.0
    %2315 = vmatpush1.msra.mxu0 0.0
    %2316 = vmatprep.subr.mxu0 0.0
    %2317 = vmatpush1.msra.mxu0 0.0
    %2318 = vmatprep.subr.mxu0 0.0
    %2319 = vmatpush1.msra.mxu0 0.0
    %2320 = vmatprep.subr.mxu0 0.0
    %2321 = vmatpush1.msra.mxu0 0.0
    %2322 = vmatprep.subr.mxu0 0.0
    %2323 = vmatpush1.msra.mxu0 0.0
    %2324 = vmatprep.subr.mxu0 0.0
    %2325 = vmatpush1.msra.mxu0 0.0
    %2326 = vmatprep.subr.mxu0 0.0
    %2327 = vmatpush1.msra.mxu0 0.0
    %2328 = vmatprep.subr.mxu0 0.0
    %2329 = vmatpush1.msra.mxu0 0.0
    %2330 = vmatprep.subr.mxu0 0.0
    %2331 = vmatpush1.msra.mxu0 0.0
    %2332 = vmatprep.subr.mxu0 0.0
    %2333 = vmatpush1.msra.mxu0 0.0
    %2334 = vmatprep.subr.mxu0 0.0
    %2335 = vmatpush1.msra.mxu0 0.0
    %2336 = vmatprep.subr.mxu0 0.0
    %2337 = vmatpush1.msra.mxu0 %v1475
    %2338 = vmatprep.subr.mxu0 0.0
    %2339 = vmatpush1.msra.mxu0 %v1474
    %2340 = vmatprep.subr.mxu0 0.0
    %2341 = vmatpush1.msra.mxu0 %v1473
    %2342 = vmatprep.subr.mxu0 0.0
    %2343 = vmatpush1.msra.mxu0 %v1472
    %2344 = vmatprep.subr.mxu0 0.0
    %2345 = vmatpush2.msra.mxu0 0.0
    %2346 = vmatprep.subr.mxu0 0.0
    %2347 = vmatpush2.msra.mxu0 0.0
    %2348 = vmatprep.subr.mxu0 0.0
    %2349 = vmatpush2.msra.mxu0 0.0
    %2350 = vmatprep.subr.mxu0 0.0
    %2351 = vmatpush2.msra.mxu0 0.0
    %2352 = vmatprep.subr.mxu0 0.0
    %2353 = vmatpush2.msra.mxu0 0.0
    %2354 = vmatprep.subr.mxu0 0.0
    %2355 = vmatpush2.msra.mxu0 0.0
    %2356 = vmatprep.subr.mxu0 0.0
    %2357 = vmatpush2.msra.mxu0 0.0
    %2358 = vmatprep.subr.mxu0 0.0
    %2359 = vmatpush2.msra.mxu0 0.0
    %2360 = vmatprep.subr.mxu0 0.0
    %2361 = vmatpush2.msra.mxu0 0.0
    %2362 = vmatprep.subr.mxu0 0.0
    %2363 = vmatpush2.msra.mxu0 0.0
    %2364 = vmatprep.subr.mxu0 0.0
    %2365 = vmatpush2.msra.mxu0 0.0
    %2366 = vmatprep.subr.mxu0 0.0
    %2367 = vmatpush2.msra.mxu0 0.0
    %2368 = vmatprep.subr.mxu0 0.0
    %2369 = vmatpush2.msra.mxu0 0.0
    %2370 = vmatprep.subr.mxu0 0.0
    %2371 = vmatpush2.msra.mxu0 0.0
    %2372 = vmatprep.subr.mxu0 0.0
    %2373 = vmatpush2.msra.mxu0 0.0
    %2374 = vmatprep.subr.mxu0 0.0
    %2375 = vmatpush2.msra.mxu0 0.0
    %2376 = vmatprep.mubr.f32.mxu0 0.0
    %2377 = vmatmul.mubr.f32.gmra.mxu0 %v2308
    %v2378 = vpop.f32.mrf.mxu0
    %v2379 = vadd.f32 0.0, %v2378
    %v2380 = vpop.f32.mrf.mxu0
    %2381 = vmatprep.mubr.f32.mxu0 0.0
    %2382 = vmatmul.mubr.f32.gmra.mxu0 %v2310
    %v2383 = vpop.f32.mrf.mxu0
    %v2384 = vadd.f32 0.0, %v2383
    %v2385 = vpop.f32.mrf.mxu0
    %2386 = vdwg.mxu0
    %v2387 = vadd.f32 %v2300, %v2379
    %v2388 = vadd.f32 %v2301, %v2384
    %v2389 = vxor.u32 %v2387, 2147483648
    %v2390 = vxor.u32 %v2388, 2147483648
    %v2391 = vmul.f32 %v2389, 1.442695
    %v2392 = vpow.pop %v2391
    %v2393 = vmul.f32 %v2390, 1.442695
    %v2394 = vpow.pop %v2393
    %v2395 = vadd.f32 %v2392, 1.0
    %v2396 = vadd.f32 %v2394, 1.0
    %v2397 = vrcp.pop %v2395
    %v2398 = vmul.f32 1.0, %v2397
    %v2399 = vrcp.pop %v2396
    %v2400 = vmul.f32 1.0, %v2399
    %v2401 = vtanh.pop %v2387
    %v2402 = vtanh.pop %v2388
    %v2403 = vmul.f32 %v2398, %v2276
    %v2404 = vmul.f32 %v2400, %v2277
    %2407 = vrot.lane.b32.xlu0 %v2401, 32
    %v2408 = vpop.permute.xlu0 %2407
    %2409 = vrot.lane.b32.xlu0 %v2402, 32
    %v2410 = vpop.permute.xlu0 %2409
    %v2413 = vmul.f32 %v2398, %v2408
    %v2414 = vmul.f32 %v2400, %v2410
    %2417 = vrot.lane.b32.xlu0 %v2413, 32
    %v2418 = vpop.permute.xlu0 %2417
    %2419 = vrot.lane.b32.xlu0 %v2414, 32
    %v2420 = vpop.permute.xlu0 %2419
    %v2423 = vadd.f32 %v2403, %v2418
    %v2424 = vadd.f32 %v2404, %v2420
    %v2425 = vtanh.pop %v2423
    %v2426 = vtanh.pop %v2424
    %2429 = vrot.lane.b32.xlu0 %v2425, 32
    %v2430 = vpop.permute.xlu0 %2429
    %2431 = vrot.lane.b32.xlu0 %v2426, 32
    %v2432 = vpop.permute.xlu0 %2431
    %v2435 = vmul.f32 %v2398, %v2430
    %v2436 = vmul.f32 %v2400, %v2432
    %v2437 = vld [vmem:[#allocation2 + $0x69] sm:$0xff]
    %v2438 = vld [vmem:[#allocation2 + $0x71] sm:$0xff]
    %v2439 = vld [vmem:[#allocation2 + $0x79] sm:$0xff]
    %v2440 = vld [vmem:[#allocation2 + $0x81] sm:$0xff]
    %v2441 = vld [vmem:[#allocation2 + $0x89] sm:$0xff]
    %v2442 = vld [vmem:[#allocation2 + $0x91] sm:$0xff]
    %v2443 = vld [vmem:[#allocation2 + $0x99] sm:$0xff]
    %v2444 = vld [vmem:[#allocation2 + $0xa1] sm:$0xff]
    %2447 = vrot.lane.b32.xlu0 %v2435, 64
    %v2448 = vpop.permute.xlu0 %2447
    %2449 = vrot.lane.b32.xlu0 %v2436, 64
    %v2450 = vpop.permute.xlu0 %2449
    %v2451 = vsel %vm1481, %v2448, 0
    %v2453 = vsel %vm1481, %v2450, 0
    %2455 = vmatprep.subr.mxu0 0.0
    %2456 = vmatpush1.msra.mxu0 0.0
    %2457 = vmatprep.subr.mxu0 0.0
    %2458 = vmatpush1.msra.mxu0 0.0
    %2459 = vmatprep.subr.mxu0 0.0
    %2460 = vmatpush1.msra.mxu0 0.0
    %2461 = vmatprep.subr.mxu0 0.0
    %2462 = vmatpush1.msra.mxu0 0.0
    %2463 = vmatprep.subr.mxu0 0.0
    %2464 = vmatpush1.msra.mxu0 0.0
    %2465 = vmatprep.subr.mxu0 0.0
    %2466 = vmatpush1.msra.mxu0 0.0
    %2467 = vmatprep.subr.mxu0 0.0
    %2468 = vmatpush1.msra.mxu0 0.0
    %2469 = vmatprep.subr.mxu0 0.0
    %2470 = vmatpush1.msra.mxu0 0.0
    %2471 = vmatprep.subr.mxu0 0.0
    %2472 = vmatpush1.msra.mxu0 0.0
    %2473 = vmatprep.subr.mxu0 0.0
    %2474 = vmatpush1.msra.mxu0 0.0
    %2475 = vmatprep.subr.mxu0 0.0
    %2476 = vmatpush1.msra.mxu0 0.0
    %2477 = vmatprep.subr.mxu0 0.0
    %2478 = vmatpush1.msra.mxu0 0.0
    %2479 = vmatprep.subr.mxu0 0.0
    %2480 = vmatpush1.msra.mxu0 %v2444
    %2481 = vmatprep.subr.mxu0 0.0
    %2482 = vmatpush1.msra.mxu0 %v2443
    %2483 = vmatprep.subr.mxu0 0.0
    %2484 = vmatpush1.msra.mxu0 %v2442
    %2485 = vmatprep.subr.mxu0 0.0
    %2486 = vmatpush1.msra.mxu0 %v2441
    %2487 = vmatprep.subr.mxu0 0.0
    %2488 = vmatpush2.msra.mxu0 0.0
    %2489 = vmatprep.subr.mxu0 0.0
    %2490 = vmatpush2.msra.mxu0 0.0
    %2491 = vmatprep.subr.mxu0 0.0
    %2492 = vmatpush2.msra.mxu0 0.0
    %2493 = vmatprep.subr.mxu0 0.0
    %2494 = vmatpush2.msra.mxu0 0.0
    %2495 = vmatprep.subr.mxu0 0.0
    %2496 = vmatpush2.msra.mxu0 0.0
    %2497 = vmatprep.subr.mxu0 0.0
    %2498 = vmatpush2.msra.mxu0 0.0
    %2499 = vmatprep.subr.mxu0 0.0
    %2500 = vmatpush2.msra.mxu0 0.0
    %2501 = vmatprep.subr.mxu0 0.0
    %2502 = vmatpush2.msra.mxu0 0.0
    %2503 = vmatprep.subr.mxu0 0.0
    %2504 = vmatpush2.msra.mxu0 0.0
    %2505 = vmatprep.subr.mxu0 0.0
    %2506 = vmatpush2.msra.mxu0 0.0
    %2507 = vmatprep.subr.mxu0 0.0
    %2508 = vmatpush2.msra.mxu0 0.0
    %2509 = vmatprep.subr.mxu0 0.0
    %2510 = vmatpush2.msra.mxu0 0.0
    %2511 = vmatprep.subr.mxu0 0.0
    %2512 = vmatpush2.msra.mxu0 0.0
    %2513 = vmatprep.subr.mxu0 0.0
    %2514 = vmatpush2.msra.mxu0 0.0
    %2515 = vmatprep.subr.mxu0 0.0
    %2516 = vmatpush2.msra.mxu0 0.0
    %2517 = vmatprep.subr.mxu0 0.0
    %2518 = vmatpush2.msra.mxu0 0.0
    %2519 = vmatprep.mubr.f32.mxu0 0.0
    %2520 = vmatmul.mubr.f32.gmra.mxu0 %v2451
    %v2521 = vpop.f32.mrf.mxu0
    %v2522 = vadd.f32 0.0, %v2521
    %v2523 = vpop.f32.mrf.mxu0
    %2524 = vmatprep.mubr.f32.mxu0 0.0
    %2525 = vmatmul.mubr.f32.gmra.mxu0 %v2453
    %v2526 = vpop.f32.mrf.mxu0
    %v2527 = vadd.f32 0.0, %v2526
    %v2528 = vpop.f32.mrf.mxu0
    %2529 = vdwg.mxu0
    %2530 = vmatprep.subr.mxu0 0.0
    %2531 = vmatpush1.msra.mxu0 0.0
    %2532 = vmatprep.subr.mxu0 0.0
    %2533 = vmatpush1.msra.mxu0 0.0
    %2534 = vmatprep.subr.mxu0 0.0
    %2535 = vmatpush1.msra.mxu0 0.0
    %2536 = vmatprep.subr.mxu0 0.0
    %2537 = vmatpush1.msra.mxu0 0.0
    %2538 = vmatprep.subr.mxu0 0.0
    %2539 = vmatpush1.msra.mxu0 0.0
    %2540 = vmatprep.subr.mxu0 0.0
    %2541 = vmatpush1.msra.mxu0 0.0
    %2542 = vmatprep.subr.mxu0 0.0
    %2543 = vmatpush1.msra.mxu0 0.0
    %2544 = vmatprep.subr.mxu0 0.0
    %2545 = vmatpush1.msra.mxu0 0.0
    %2546 = vmatprep.subr.mxu0 0.0
    %2547 = vmatpush1.msra.mxu0 0.0
    %2548 = vmatprep.subr.mxu0 0.0
    %2549 = vmatpush1.msra.mxu0 0.0
    %2550 = vmatprep.subr.mxu0 0.0
    %2551 = vmatpush1.msra.mxu0 0.0
    %2552 = vmatprep.subr.mxu0 0.0
    %2553 = vmatpush1.msra.mxu0 0.0
    %2554 = vmatprep.subr.mxu0 0.0
    %2555 = vmatpush1.msra.mxu0 %v2440
    %2556 = vmatprep.subr.mxu0 0.0
    %2557 = vmatpush1.msra.mxu0 %v2439
    %2558 = vmatprep.subr.mxu0 0.0
    %2559 = vmatpush1.msra.mxu0 %v2438
    %2560 = vmatprep.subr.mxu0 0.0
    %2561 = vmatpush1.msra.mxu0 %v2437
    %2562 = vmatprep.subr.mxu0 0.0
    %2563 = vmatpush2.msra.mxu0 0.0
    %2564 = vmatprep.subr.mxu0 0.0
    %2565 = vmatpush2.msra.mxu0 0.0
    %2566 = vmatprep.subr.mxu0 0.0
    %2567 = vmatpush2.msra.mxu0 0.0
    %2568 = vmatprep.subr.mxu0 0.0
    %2569 = vmatpush2.msra.mxu0 0.0
    %2570 = vmatprep.subr.mxu0 0.0
    %2571 = vmatpush2.msra.mxu0 0.0
    %2572 = vmatprep.subr.mxu0 0.0
    %2573 = vmatpush2.msra.mxu0 0.0
    %2574 = vmatprep.subr.mxu0 0.0
    %2575 = vmatpush2.msra.mxu0 0.0
    %2576 = vmatprep.subr.mxu0 0.0
    %2577 = vmatpush2.msra.mxu0 0.0
    %2578 = vmatprep.subr.mxu0 0.0
    %2579 = vmatpush2.msra.mxu0 0.0
    %2580 = vmatprep.subr.mxu0 0.0
    %2581 = vmatpush2.msra.mxu0 0.0
    %2582 = vmatprep.subr.mxu0 0.0
    %2583 = vmatpush2.msra.mxu0 0.0
    %2584 = vmatprep.subr.mxu0 0.0
    %2585 = vmatpush2.msra.mxu0 0.0
    %2586 = vmatprep.subr.mxu0 0.0
    %2587 = vmatpush2.msra.mxu0 0.0
    %2588 = vmatprep.subr.mxu0 0.0
    %2589 = vmatpush2.msra.mxu0 0.0
    %2590 = vmatprep.subr.mxu0 0.0
    %2591 = vmatpush2.msra.mxu0 0.0
    %2592 = vmatprep.subr.mxu0 0.0
    %2593 = vmatpush2.msra.mxu0 0.0
    %2594 = vmatprep.mubr.f32.mxu0 0.0
    %2595 = vmatmul.mubr.f32.gmra.mxu0 %v1483
    %v2596 = vpop.f32.mrf.mxu0
    %v2597 = vadd.f32 %v2522, %v2596
    %v2598 = vpop.f32.mrf.mxu0
    %2599 = vmatprep.mubr.f32.mxu0 0.0
    %2600 = vmatmul.mubr.f32.gmra.mxu0 %v1486
    %v2601 = vpop.f32.mrf.mxu0
    %v2602 = vadd.f32 %v2527, %v2601
    %v2603 = vpop.f32.mrf.mxu0
    %2604 = vdwg.mxu0
    %v2605 = vld [vmem:[#allocation2 + $0xa9] sm:$0x1]
    %v2606 = vlaneseq
    %v2607 = vshrl.u32 %v2606, 7
    %v2608 = vsub.s32 0, %v2607
    %v2609 = vrot.slane %v2605, %v2608
    %v2610 = vadd.f32 %v2597, %v2609
    %v2611 = vadd.f32 %v2602, %v2609
    %v2612 = vld [vmem:[#allocation2 + $0xaa] sm:$0x1]
    %v2613 = vlaneseq
    %v2614 = vshrl.u32 %v2613, 7
    %v2615 = vsub.s32 0, %v2614
    %v2616 = vrot.slane %v2612, %v2615
    %v2617 = vmul.f32 %v2610, %v2616
    %v2618 = vmul.f32 %v2611, %v2616
    %v2619 = vld [vmem:[#allocation2 + $0xab] sm:$0x1]
    %v2620 = vlaneseq
    %v2621 = vshrl.u32 %v2620, 7
    %v2622 = vsub.s32 0, %v2621
    %v2623 = vrot.slane %v2619, %v2622
    %v2624 = vadd.f32 %v2617, %v2623
    %v2625 = vadd.f32 %v2618, %v2623
    %vm2626 = vcmp.gt.f32.partialorder %v2624, 0.0
    %vm2627 = vcmp.gt.f32.partialorder %v2625, 0.0
    %v2628 = vmul.f32 %v2624, 0.01
    %v2629 = vmul.f32 %v2625, 0.01
    %v2630 = vsel %vm2626, %v2624, %v2628
    %v2631 = vsel %vm2627, %v2625, %v2629
    %v2632 = vld [vmem:[#allocation2 + $0xac] sm:$0x1]
    %v2633 = vlaneseq
    %v2634 = vshrl.u32 %v2633, 7
    %v2635 = vsub.s32 0, %v2634
    %v2636 = vrot.slane %v2632, %v2635
    %v2637 = vmul.f32 %v2630, %v2636
    %v2638 = vmul.f32 %v2631, %v2636
    %vm2639 = vcmask 162816
    %v2640 = vsel %vm2639, %v2637, 0.0
    %2641 = vadd.xlane.f32.xlu0 %v2640
    %v2642 = vpop.xlane.xlu0 %2641
    %v2643 = vsel %vm2639, %v2638, 0.0
    %2644 = vadd.xlane.f32.xlu0 %v2643
    %v2645 = vpop.xlane.xlu0 %2644
    %v2646 = vlaneseq
    %v2647 = vshrl.u32 %v2646, 7
    %vm2648 = vcmp.lt.s32.totalorder %v2647, 6
    %v2649 = vsel %vm2648, %v2642, -inf
    %v2650 = vsel %vm2648, %v2645, -inf
    %v2651 = vrot.slane %v2649, 4
    %v2652 = vmax.f32 %v2649, %v2651
    %v2653 = vrot.slane %v2652, 2
    %v2654 = vmax.f32 %v2652, %v2653
    %v2655 = vrot.slane %v2654, 1
    %v2656 = vmax.f32 %v2654, %v2655
    %v2657 = vrot.slane %v2650, 4
    %v2658 = vmax.f32 %v2650, %v2657
    %v2659 = vrot.slane %v2658, 2
    %v2660 = vmax.f32 %v2658, %v2659
    %v2661 = vrot.slane %v2660, 1
    %v2662 = vmax.f32 %v2660, %v2661
    %v2663 = vsub.f32 %v2649, %v2656
    %v2664 = vsub.f32 %v2650, %v2662
    %v2665 = vmul.f32 %v2663, 1.442695
    %v2666 = vpow.pop %v2665
    %v2667 = vmul.f32 %v2664, 1.442695
    %v2668 = vpow.pop %v2667
    %v2669 = vrot.slane %v2666, 4
    %v2670 = vadd.f32 %v2666, %v2669
    %v2671 = vrot.slane %v2670, 2
    %v2672 = vadd.f32 %v2670, %v2671
    %v2673 = vrot.slane %v2672, 1
    %v2674 = vadd.f32 %v2672, %v2673
    %v2675 = vrot.slane %v2668, 4
    %v2676 = vadd.f32 %v2668, %v2675
    %v2677 = vrot.slane %v2676, 2
    %v2678 = vadd.f32 %v2676, %v2677
    %v2679 = vrot.slane %v2678, 1
    %v2680 = vadd.f32 %v2678, %v2679
    %v2681 = vrcp.pop %v2674
    %v2682 = vrcp.pop %v2680
    %v2683 = vmul.f32 %v2666, %v2681
    %v2684 = vmul.f32 %v2668, %v2682
    %v2685 = vmul.f32 %v2630, %v2683
    %v2686 = vmul.f32 %v2631, %v2684
    %v2687 = vsel %vm2639, %v2685, 0.0
    %v2688 = vrot.slane %v2687, 4
    %v2689 = vadd.f32 %v2687, %v2688
    %v2690 = vrot.slane %v2689, 2
    %v2691 = vadd.f32 %v2689, %v2690
    %v2692 = vrot.slane %v2691, 1
    %v2693 = vadd.f32 %v2691, %v2692
    %v2694 = vsel %vm2639, %v2686, 0.0
    %v2695 = vrot.slane %v2694, 4
    %v2696 = vadd.f32 %v2694, %v2695
    %v2697 = vrot.slane %v2696, 2
    %v2698 = vadd.f32 %v2696, %v2697
    %v2699 = vrot.slane %v2698, 1
    %v2700 = vadd.f32 %v2698, %v2699
    %v2701 = vld [vmem:[#allocation2 + $0xad] sm:$0xff]
    %v2702 = vld [vmem:[#allocation2 + $0xb5] sm:$0xff]
    %v2703 = vld [vmem:[#allocation2 + $0xbd] sm:$0xf]
    %v2704 = vld [vmem:[#allocation2 + $0xc1] sm:$0x1]
    %v2705 = vlaneseq
    %v2706 = vshrl.u32 %v2705, 7
    %v2707 = vsub.s32 0, %v2706
    %v2708 = vrot.slane %v2704, %v2707
    %vm2711 = vcmask 1041409
    %v2712 = vsel %vm2711, %v2700, %v2693
    %v2713 = vsel %vm2639, %v2712, 0
    %vm2715 = vcmask 1043456
    %v2717 = vsel %vm2715, %v2703, 0
    %2719 = vmatprep.subr.mxu0 0.0
    %2720 = vmatpush1.msra.mxu0 0.0
    %2721 = vmatprep.subr.mxu0 0.0
    %2722 = vmatpush1.msra.mxu0 0.0
    %2723 = vmatprep.subr.mxu0 0.0
    %2724 = vmatpush1.msra.mxu0 0.0
    %2725 = vmatprep.subr.mxu0 0.0
    %2726 = vmatpush1.msra.mxu0 0.0
    %2727 = vmatprep.subr.mxu0 0.0
    %2728 = vmatpush1.msra.mxu0 0.0
    %2729 = vmatprep.subr.mxu0 0.0
    %2730 = vmatpush1.msra.mxu0 0.0
    %2731 = vmatprep.subr.mxu0 0.0
    %2732 = vmatpush1.msra.mxu0 0.0
    %2733 = vmatprep.subr.mxu0 0.0
    %2734 = vmatpush1.msra.mxu0 0.0
    %2735 = vmatprep.subr.mxu0 0.0
    %2736 = vmatpush1.msra.mxu0 0.0
    %2737 = vmatprep.subr.mxu0 0.0
    %2738 = vmatpush1.msra.mxu0 0.0
    %2739 = vmatprep.subr.mxu0 0.0
    %2740 = vmatpush1.msra.mxu0 0.0
    %2741 = vmatprep.subr.mxu0 0.0
    %2742 = vmatpush1.msra.mxu0 0.0
    %2743 = vmatprep.subr.mxu0 0.0
    %2744 = vmatpush1.msra.mxu0 0.0
    %2745 = vmatprep.subr.mxu0 0.0
    %2746 = vmatpush1.msra.mxu0 %v2717
    %2747 = vmatprep.subr.mxu0 0.0
    %2748 = vmatpush1.msra.mxu0 %v2702
    %2749 = vmatprep.subr.mxu0 0.0
    %2750 = vmatpush1.msra.mxu0 %v2701
    %2751 = vmatprep.subr.mxu0 0.0
    %2752 = vmatpush2.msra.mxu0 0.0
    %2753 = vmatprep.subr.mxu0 0.0
    %2754 = vmatpush2.msra.mxu0 0.0
    %2755 = vmatprep.subr.mxu0 0.0
    %2756 = vmatpush2.msra.mxu0 0.0
    %2757 = vmatprep.subr.mxu0 0.0
    %2758 = vmatpush2.msra.mxu0 0.0
    %2759 = vmatprep.subr.mxu0 0.0
    %2760 = vmatpush2.msra.mxu0 0.0
    %2761 = vmatprep.subr.mxu0 0.0
    %2762 = vmatpush2.msra.mxu0 0.0
    %2763 = vmatprep.subr.mxu0 0.0
    %2764 = vmatpush2.msra.mxu0 0.0
    %2765 = vmatprep.subr.mxu0 0.0
    %2766 = vmatpush2.msra.mxu0 0.0
    %2767 = vmatprep.subr.mxu0 0.0
    %2768 = vmatpush2.msra.mxu0 0.0
    %2769 = vmatprep.subr.mxu0 0.0
    %2770 = vmatpush2.msra.mxu0 0.0
    %2771 = vmatprep.subr.mxu0 0.0
    %2772 = vmatpush2.msra.mxu0 0.0
    %2773 = vmatprep.subr.mxu0 0.0
    %2774 = vmatpush2.msra.mxu0 0.0
    %2775 = vmatprep.subr.mxu0 0.0
    %2776 = vmatpush2.msra.mxu0 0.0
    %2777 = vmatprep.subr.mxu0 0.0
    %2778 = vmatpush2.msra.mxu0 0.0
    %2779 = vmatprep.subr.mxu0 0.0
    %2780 = vmatpush2.msra.mxu0 0.0
    %2781 = vmatprep.subr.mxu0 0.0
    %2782 = vmatpush2.msra.mxu0 0.0
    %2783 = vmatprep.mubr.f32.mxu0 0.0
    %2784 = vmatmul.mubr.f32.gmra.mxu0 %v2713
    %v2785 = vpop.f32.mrf.mxu0
    %v2786 = vadd.f32 %v2708, %v2785
    %v2787 = vpop.f32.mrf.mxu0
    %2788 = vdwg.mxu0
    %vm2789 = vcmp.gt.f32.partialorder %v2786, 0.0
    %v2790 = vmul.f32 %v2786, 0.01
    %v2791 = vsel %vm2789, %v2786, %v2790
    %v2792 = vld [vmem:[#allocation2 + $0xc2] sm:$0xff]
    %v2793 = vld [vmem:[#allocation2 + $0xca] sm:$0x3]
    %v2794 = vld [vmem:[#allocation2 + $0xcc] sm:$0x1]
    %v2795 = vlaneseq
    %v2796 = vshrl.u32 %v2795, 7
    %v2797 = vsub.s32 0, %v2796
    %v2798 = vrot.slane %v2794, %v2797
    %vm2799 = vcmask 80896
    %v2801 = vsel %vm2799, %v2791, 0
    %vm2803 = vcmask 1041408
    %v2805 = vsel %vm2803, %v2793, 0
    %2807 = vmatprep.subr.mxu0 0.0
    %2808 = vmatpush1.msra.mxu0 0.0
    %2809 = vmatprep.subr.mxu0 0.0
    %2810 = vmatpush1.msra.mxu0 0.0
    %2811 = vmatprep.subr.mxu0 0.0
    %2812 = vmatpush1.msra.mxu0 0.0
    %2813 = vmatprep.subr.mxu0 0.0
    %2814 = vmatpush1.msra.mxu0 0.0
    %2815 = vmatprep.subr.mxu0 0.0
    %2816 = vmatpush1.msra.mxu0 0.0
    %2817 = vmatprep.subr.mxu0 0.0
    %2818 = vmatpush1.msra.mxu0 0.0
    %2819 = vmatprep.subr.mxu0 0.0
    %2820 = vmatpush1.msra.mxu0 0.0
    %2821 = vmatprep.subr.mxu0 0.0
    %2822 = vmatpush1.msra.mxu0 0.0
    %2823 = vmatprep.subr.mxu0 0.0
    %2824 = vmatpush1.msra.mxu0 0.0
    %2825 = vmatprep.subr.mxu0 0.0
    %2826 = vmatpush1.msra.mxu0 0.0
    %2827 = vmatprep.subr.mxu0 0.0
    %2828 = vmatpush1.msra.mxu0 0.0
    %2829 = vmatprep.subr.mxu0 0.0
    %2830 = vmatpush1.msra.mxu0 0.0
    %2831 = vmatprep.subr.mxu0 0.0
    %2832 = vmatpush1.msra.mxu0 0.0
    %2833 = vmatprep.subr.mxu0 0.0
    %2834 = vmatpush1.msra.mxu0 0.0
    %2835 = vmatprep.subr.mxu0 0.0
    %2836 = vmatpush1.msra.mxu0 %v2805
    %2837 = vmatprep.subr.mxu0 0.0
    %2838 = vmatpush1.msra.mxu0 %v2792
    %2839 = vmatprep.subr.mxu0 0.0
    %2840 = vmatpush2.msra.mxu0 0.0
    %2841 = vmatprep.subr.mxu0 0.0
    %2842 = vmatpush2.msra.mxu0 0.0
    %2843 = vmatprep.subr.mxu0 0.0
    %2844 = vmatpush2.msra.mxu0 0.0
    %2845 = vmatprep.subr.mxu0 0.0
    %2846 = vmatpush2.msra.mxu0 0.0
    %2847 = vmatprep.subr.mxu0 0.0
    %2848 = vmatpush2.msra.mxu0 0.0
    %2849 = vmatprep.subr.mxu0 0.0
    %2850 = vmatpush2.msra.mxu0 0.0
    %2851 = vmatprep.subr.mxu0 0.0
    %2852 = vmatpush2.msra.mxu0 0.0
    %2853 = vmatprep.subr.mxu0 0.0
    %2854 = vmatpush2.msra.mxu0 0.0
    %2855 = vmatprep.subr.mxu0 0.0
    %2856 = vmatpush2.msra.mxu0 0.0
    %2857 = vmatprep.subr.mxu0 0.0
    %2858 = vmatpush2.msra.mxu0 0.0
    %2859 = vmatprep.subr.mxu0 0.0
    %2860 = vmatpush2.msra.mxu0 0.0
    %2861 = vmatprep.subr.mxu0 0.0
    %2862 = vmatpush2.msra.mxu0 0.0
    %2863 = vmatprep.subr.mxu0 0.0
    %2864 = vmatpush2.msra.mxu0 0.0
    %2865 = vmatprep.subr.mxu0 0.0
    %2866 = vmatpush2.msra.mxu0 0.0
    %2867 = vmatprep.subr.mxu0 0.0
    %2868 = vmatpush2.msra.mxu0 0.0
    %2869 = vmatprep.subr.mxu0 0.0
    %2870 = vmatpush2.msra.mxu0 0.0
    %2871 = vmatprep.mubr.f32.mxu0 0.0
    %2872 = vmatmul.mubr.f32.gmra.mxu0 %v2801
    %v2873 = vpop.f32.mrf.mxu0
    %v2874 = vadd.f32 %v2798, %v2873
    %v2875 = vpop.f32.mrf.mxu0
    %2876 = vdwg.mxu0
    %vm2877 = vcmask 9216
    %2878 = vst.msk [vmem:[#allocation5] sm:$0x3] %vm2877, %v2874
    // Predicated region
    $region22: #{mcanet_forward.1} parent=1 // pred_check
      _
    $region23: #{mcanet_forward.1} parent=1 // pred_check_branch
      %2880 = sbr.rel (0) target = $region25
    $region24: #{mcanet_forward.1} parent=1 // pred_region
      %s2882 = ssub.s32 32, 32
      %2883 = vsyncadd [#allocation4], %s2882
      %s2885 = sshll.u32 [#allocation5], 4
      %s2886 = int_to_ptr.vmem [resolvable:$true] %s2885
      %2888 = dma.vmem_to_hbm [thread:$0]  %s2886, 32, %s4, [#allocation4]
    $region25: #{mcanet_forward.1} parent=1 // pred_fallthru
      _
    // Predicated region
    $region26: #{mcanet_forward.1} parent=1 // pred_check
      _
    $region27: #{mcanet_forward.1} parent=1 // pred_check_branch
      %2890 = sbr.rel (0) target = $region29
    $region28: #{mcanet_forward.1} parent=1 // pred_region
      %2891 = dma.done [#allocation4], 32
    $region29: #{mcanet_forward.1} parent=1 // pred_fallthru
      _
    %2892 = vsyncpa [#allocation3], 1
    %2893 = vsyncpa [#allocation4], 1

</llo_original>
